<compile_context>
chip_gen: v7x
topology: tpu7x:2x2x1
jax: 0.10.0
libtpu: 0.0.40
codegen_flags: <defaults>
</compile_context>

<pallas_src>
import jax
import jax.numpy as jnp
from jax import lax
from jax.experimental import pallas as pl
from jax.experimental.pallas import tpu as pltpu

K = 3  # kernel size (module default)


# ----------------------------------------------------------------------------
# Fused depthwise(3x3x3, s=1, p=1) + pointwise(1x1x1) Pallas kernel
# ----------------------------------------------------------------------------
def _ds_conv3d_kernel(x0_ref, x1_ref, x2_ref, wd_ref, bd_ref, wp_ref, bp_ref, o_ref):
    """One (batch, output-depth) tile.

    x{0,1,2}_ref : (H+2, W+2, Cin)  padded input slabs at depths d, d+1, d+2
    wd_ref       : (27, Cin)        depthwise taps, order (kd, kh, kw)
    bd_ref       : (1, Cin)         depthwise bias
    wp_ref       : (Cin, Cout)      pointwise weight
    bp_ref       : (1, Cout)        pointwise bias
    o_ref        : (H, W, Cout)
    """
    H, W, Cout = o_ref.shape
    Cin = wp_ref.shape[0]

    wd = wd_ref[...]                                     # (27, Cin), loaded once
    slabs = (x0_ref[...], x1_ref[...], x2_ref[...])      # each (H+2, W+2, Cin)

    # Depthwise: 27 shifted multiply-accumulates on the VPU (per-channel weights
    # broadcast along the lane axis).  Bias added once after the loop.
    acc = jnp.zeros((H, W, Cin), jnp.float32)
    for kd in range(K):
        xs = slabs[kd]
        for kh in range(K):
            for kw in range(K):
                tap = wd[kd * K * K + kh * K + kw]       # (Cin,)
                acc = acc + xs[kh:kh + H, kw:kw + W, :] * tap
    dw = acc + bd_ref[...]                               # (H, W, Cin)

    # Pointwise: single MXU matmul over channels + bias epilogue.
    pw = (
        jnp.dot(dw.reshape(H * W, Cin), wp_ref[...],
                preferred_element_type=jnp.float32)
        + bp_ref[...]
    )                                                    # (H*W, Cout)
    o_ref[...] = pw.reshape(H, W, Cout)


# ----------------------------------------------------------------------------
# Wrapper: layout plumbing + pallas_call
# ----------------------------------------------------------------------------
@jax.jit
def ds_conv3d_forward(x_ncdhw, params):
    """params: w_dw (Cin,1,3,3,3)  b_dw (Cin,)  w_pw (Cout,Cin,1,1,1)  b_pw (Cout,)."""
    x = jnp.transpose(x_ncdhw, (0, 2, 3, 4, 1)).astype(jnp.float32)   # NCDHW -> NDHWC
    N, D, H, W, Cin = x.shape
    Cout = params["w_pw"].shape[0]

    # Spatial zero-padding (p=1) done once in HBM; the kernel reads halo'd tiles.
    xp = jnp.pad(x, ((0, 0), (1, 1), (1, 1), (1, 1), (0, 0)))

    # Depthwise weight (Cin, 1, k, k, k) -> (k^3, Cin) with tap order (kd, kh, kw).
    wd = jnp.transpose(params["w_dw"][:, 0], (1, 2, 3, 0)).reshape(K * K * K, Cin)
    bd = params["b_dw"].reshape(1, Cin).astype(jnp.float32)
    # Pointwise weight (Cout, Cin, 1, 1, 1) -> (Cin, Cout).
    wp = jnp.transpose(params["w_pw"][:, :, 0, 0, 0], (1, 0)).astype(jnp.float32)
    bp = params["b_pw"].reshape(1, Cout).astype(jnp.float32)

    def halo_spec(kd):
        # Same padded array passed 3x; each spec picks the depth slice d + kd.
        return pl.BlockSpec(
            (None, None, H + 2, W + 2, Cin),
            lambda n, d, _kd=kd: (n, d + _kd, 0, 0, 0),
        )

    def full_spec(shape):
        return pl.BlockSpec(shape, lambda n, d, _r=len(shape): (0,) * _r)

    out_ndhwc = pl.pallas_call(
        _ds_conv3d_kernel,
        out_shape=jax.ShapeDtypeStruct((N, D, H, W, Cout), jnp.float32),
        grid=(N, D),                               # tiled + auto double-buffered
        in_specs=[
            halo_spec(0), halo_spec(1), halo_spec(2),
            full_spec((K * K * K, Cin)),
            full_spec((1, Cin)),
            full_spec((Cin, Cout)),
            full_spec((1, Cout)),
        ],
        out_specs=pl.BlockSpec((None, None, H, W, Cout),
                               lambda n, d: (n, d, 0, 0, 0)),
        compiler_params=pltpu.CompilerParams(
            dimension_semantics=("parallel", "parallel"),   # megacore / v7x 2-TC split
            vmem_limit_bytes=32 * 1024 * 1024,              # safe on v5e/v6e/v7x
        ),
    )(xp, xp, xp, wd, bd, wp, bp)

    return jnp.transpose(out_ndhwc, (0, 4, 1, 2, 3))        # back to NCDHW


# ----------------------------------------------------------------------------
# Pure-JAX reference (lax.conv) for validation
# ----------------------------------------------------------------------------
def ds_conv3d_ref(x_ncdhw, params):
    x = x_ncdhw.astype(jnp.float32)
    cin = x.shape[1]
    dw = lax.conv_general_dilated(
        x, params["w_dw"], window_strides=(1, 1, 1), padding=[(1, 1)] * 3,
        dimension_numbers=("NCDHW", "OIDHW", "NCDHW"), feature_group_count=cin,
    ) + params["b_dw"].reshape(1, -1, 1, 1, 1)
    pw = lax.conv_general_dilated(
        dw, params["w_pw"], window_strides=(1, 1, 1), padding=[(0, 0)] * 3,
        dimension_numbers=("NCDHW", "OIDHW", "NCDHW"),
    ) + params["b_pw"].reshape(1, -1, 1, 1, 1)
    return pw


# ----------------------------------------------------------------------------
# main
# ----------------------------------------------------------------------------
if __name__ == "__main__":
    key = jax.random.PRNGKey(0)
    B, C_IN, C_OUT, S = 2, 4, 8, 16

    ks = jax.random.split(key, 5)
    params = {
        "w_dw": jax.random.normal(ks[0], (C_IN, 1, K, K, K), jnp.float32)
        * (1.0 / (K * K * K) ** 0.5),
        "b_dw": 0.1 * jax.random.normal(ks[1], (C_IN,), jnp.float32),
        "w_pw": jax.random.normal(ks[2], (C_OUT, C_IN, 1, 1, 1), jnp.float32)
        * (1.0 / C_IN ** 0.5),
        "b_pw": 0.1 * jax.random.normal(ks[3], (C_OUT,), jnp.float32),
    }
    x = jax.random.normal(ks[4], (B, C_IN, S, S, S), jnp.float32)   # NCDHW like PyTorch

    out = jax.block_until_ready(ds_conv3d_forward(x, params))
    ref = jax.block_until_ready(ds_conv3d_ref(x, params))

    assert out.shape == (B, C_OUT, S, S, S), out.shape
    err = float(jnp.max(jnp.abs(out - ref)))
    assert jnp.allclose(out, ref, atol=1e-3, rtol=1e-3), err

    print("KERNEL_OK")
</pallas_src>

<mosaic_0001>
module attributes {stable_mosaic.version = 11 : i64} {
  func.func @_ds_conv3d_kernel(%arg0: i32, %arg1: i32, %arg2: memref<1x1x18x18x4xf32, #tpu.memory_space<vmem>>, %arg3: memref<1x1x18x18x4xf32, #tpu.memory_space<vmem>>, %arg4: memref<1x1x18x18x4xf32, #tpu.memory_space<vmem>>, %arg5: memref<27x4xf32, #tpu.memory_space<vmem>>, %arg6: memref<1x4xf32, #tpu.memory_space<vmem>>, %arg7: memref<4x8xf32, #tpu.memory_space<vmem>>, %arg8: memref<1x8xf32, #tpu.memory_space<vmem>>, %arg9: memref<1x1x16x16x8xf32, #tpu.memory_space<vmem>>) attributes {dimension_semantics = [#tpu.dimension_semantics<parallel>, #tpu.dimension_semantics<parallel>], iteration_bounds = array<i64: 2, 16>, scalar_prefetch = 0 : i64, scratch_operands = 0 : i64, tpu.core_type = #tpu.core_type<tc>, window_params = [{transform_indices = @transform_0, window_bounds = array<i64: 1, 1, 18, 18, 4>}, {transform_indices = @transform_1, window_bounds = array<i64: 1, 1, 18, 18, 4>}, {transform_indices = @transform_2, window_bounds = array<i64: 1, 1, 18, 18, 4>}, {pipeline_mode = #tpu.pipeline_mode<synchronous>, transform_indices = @transform_3, window_bounds = array<i64: 27, 4>}, {pipeline_mode = #tpu.pipeline_mode<synchronous>, transform_indices = @transform_4, window_bounds = array<i64: 1, 4>}, {pipeline_mode = #tpu.pipeline_mode<synchronous>, transform_indices = @transform_5, window_bounds = array<i64: 4, 8>}, {pipeline_mode = #tpu.pipeline_mode<synchronous>, transform_indices = @transform_6, window_bounds = array<i64: 1, 8>}, {transform_indices = @transform_7, window_bounds = array<i64: 1, 1, 16, 16, 8>}]} {
    %c0 = arith.constant 0 : index
    %c0_0 = arith.constant 0 : index
    %0 = vector.load %arg5[%c0, %c0_0] : memref<27x4xf32, #tpu.memory_space<vmem>>, vector<27x4xf32>
    %c0_1 = arith.constant 0 : index
    %c0_2 = arith.constant 0 : index
    %c0_3 = arith.constant 0 : index
    %c0_4 = arith.constant 0 : index
    %c0_5 = arith.constant 0 : index
    %1 = vector.load %arg2[%c0_1, %c0_2, %c0_3, %c0_4, %c0_5] : memref<1x1x18x18x4xf32, #tpu.memory_space<vmem>>, vector<1x1x18x18x4xf32>
    %2 = vector.shape_cast %1 : vector<1x1x18x18x4xf32> to vector<18x18x4xf32>
    %c0_6 = arith.constant 0 : index
    %c0_7 = arith.constant 0 : index
    %c0_8 = arith.constant 0 : index
    %c0_9 = arith.constant 0 : index
    %c0_10 = arith.constant 0 : index
    %3 = vector.load %arg3[%c0_6, %c0_7, %c0_8, %c0_9, %c0_10] : memref<1x1x18x18x4xf32, #tpu.memory_space<vmem>>, vector<1x1x18x18x4xf32>
    %4 = vector.shape_cast %3 : vector<1x1x18x18x4xf32> to vector<18x18x4xf32>
    %c0_11 = arith.constant 0 : index
    %c0_12 = arith.constant 0 : index
    %c0_13 = arith.constant 0 : index
    %c0_14 = arith.constant 0 : index
    %c0_15 = arith.constant 0 : index
    %5 = vector.load %arg4[%c0_11, %c0_12, %c0_13, %c0_14, %c0_15] : memref<1x1x18x18x4xf32, #tpu.memory_space<vmem>>, vector<1x1x18x18x4xf32>
    %6 = vector.shape_cast %5 : vector<1x1x18x18x4xf32> to vector<18x18x4xf32>
    %cst = arith.constant 0.000000e+00 : f32
    %7 = vector.broadcast %cst : f32 to vector<16x16x4xf32>
    %8 = vector.extract_strided_slice %0 {offsets = [0, 0], sizes = [1, 4], strides = [1, 1]} : vector<27x4xf32> to vector<1x4xf32>
    %9 = vector.shape_cast %8 : vector<1x4xf32> to vector<4xf32>
    %10 = vector.extract_strided_slice %2 {offsets = [0, 0, 0], sizes = [16, 16, 4], strides = [1, 1, 1]} : vector<18x18x4xf32> to vector<16x16x4xf32>
    %11 = vector.shape_cast %9 : vector<4xf32> to vector<1x1x4xf32>
    %12 = vector.broadcast %11 : vector<1x1x4xf32> to vector<16x16x4xf32>
    %13 = arith.mulf %10, %12 : vector<16x16x4xf32>
    %14 = arith.addf %7, %13 : vector<16x16x4xf32>
    %15 = vector.extract_strided_slice %0 {offsets = [1, 0], sizes = [1, 4], strides = [1, 1]} : vector<27x4xf32> to vector<1x4xf32>
    %16 = vector.shape_cast %15 : vector<1x4xf32> to vector<4xf32>
    %17 = vector.extract_strided_slice %2 {offsets = [0, 1, 0], sizes = [16, 16, 4], strides = [1, 1, 1]} : vector<18x18x4xf32> to vector<16x16x4xf32>
    %18 = vector.shape_cast %16 : vector<4xf32> to vector<1x1x4xf32>
    %19 = vector.broadcast %18 : vector<1x1x4xf32> to vector<16x16x4xf32>
    %20 = arith.mulf %17, %19 : vector<16x16x4xf32>
    %21 = arith.addf %14, %20 : vector<16x16x4xf32>
    %22 = vector.extract_strided_slice %0 {offsets = [2, 0], sizes = [1, 4], strides = [1, 1]} : vector<27x4xf32> to vector<1x4xf32>
    %23 = vector.shape_cast %22 : vector<1x4xf32> to vector<4xf32>
    %24 = vector.extract_strided_slice %2 {offsets = [0, 2, 0], sizes = [16, 16, 4], strides = [1, 1, 1]} : vector<18x18x4xf32> to vector<16x16x4xf32>
    %25 = vector.shape_cast %23 : vector<4xf32> to vector<1x1x4xf32>
    %26 = vector.broadcast %25 : vector<1x1x4xf32> to vector<16x16x4xf32>
    %27 = arith.mulf %24, %26 : vector<16x16x4xf32>
    %28 = arith.addf %21, %27 : vector<16x16x4xf32>
    %29 = vector.extract_strided_slice %0 {offsets = [3, 0], sizes = [1, 4], strides = [1, 1]} : vector<27x4xf32> to vector<1x4xf32>
    %30 = vector.shape_cast %29 : vector<1x4xf32> to vector<4xf32>
    %31 = vector.extract_strided_slice %2 {offsets = [1, 0, 0], sizes = [16, 16, 4], strides = [1, 1, 1]} : vector<18x18x4xf32> to vector<16x16x4xf32>
    %32 = vector.shape_cast %30 : vector<4xf32> to vector<1x1x4xf32>
    %33 = vector.broadcast %32 : vector<1x1x4xf32> to vector<16x16x4xf32>
    %34 = arith.mulf %31, %33 : vector<16x16x4xf32>
    %35 = arith.addf %28, %34 : vector<16x16x4xf32>
    %36 = vector.extract_strided_slice %0 {offsets = [4, 0], sizes = [1, 4], strides = [1, 1]} : vector<27x4xf32> to vector<1x4xf32>
    %37 = vector.shape_cast %36 : vector<1x4xf32> to vector<4xf32>
    %38 = vector.extract_strided_slice %2 {offsets = [1, 1, 0], sizes = [16, 16, 4], strides = [1, 1, 1]} : vector<18x18x4xf32> to vector<16x16x4xf32>
    %39 = vector.shape_cast %37 : vector<4xf32> to vector<1x1x4xf32>
    %40 = vector.broadcast %39 : vector<1x1x4xf32> to vector<16x16x4xf32>
    %41 = arith.mulf %38, %40 : vector<16x16x4xf32>
    %42 = arith.addf %35, %41 : vector<16x16x4xf32>
    %43 = vector.extract_strided_slice %0 {offsets = [5, 0], sizes = [1, 4], strides = [1, 1]} : vector<27x4xf32> to vector<1x4xf32>
    %44 = vector.shape_cast %43 : vector<1x4xf32> to vector<4xf32>
    %45 = vector.extract_strided_slice %2 {offsets = [1, 2, 0], sizes = [16, 16, 4], strides = [1, 1, 1]} : vector<18x18x4xf32> to vector<16x16x4xf32>
    %46 = vector.shape_cast %44 : vector<4xf32> to vector<1x1x4xf32>
    %47 = vector.broadcast %46 : vector<1x1x4xf32> to vector<16x16x4xf32>
    %48 = arith.mulf %45, %47 : vector<16x16x4xf32>
    %49 = arith.addf %42, %48 : vector<16x16x4xf32>
    %50 = vector.extract_strided_slice %0 {offsets = [6, 0], sizes = [1, 4], strides = [1, 1]} : vector<27x4xf32> to vector<1x4xf32>
    %51 = vector.shape_cast %50 : vector<1x4xf32> to vector<4xf32>
    %52 = vector.extract_strided_slice %2 {offsets = [2, 0, 0], sizes = [16, 16, 4], strides = [1, 1, 1]} : vector<18x18x4xf32> to vector<16x16x4xf32>
    %53 = vector.shape_cast %51 : vector<4xf32> to vector<1x1x4xf32>
    %54 = vector.broadcast %53 : vector<1x1x4xf32> to vector<16x16x4xf32>
    %55 = arith.mulf %52, %54 : vector<16x16x4xf32>
    %56 = arith.addf %49, %55 : vector<16x16x4xf32>
    %57 = vector.extract_strided_slice %0 {offsets = [7, 0], sizes = [1, 4], strides = [1, 1]} : vector<27x4xf32> to vector<1x4xf32>
    %58 = vector.shape_cast %57 : vector<1x4xf32> to vector<4xf32>
    %59 = vector.extract_strided_slice %2 {offsets = [2, 1, 0], sizes = [16, 16, 4], strides = [1, 1, 1]} : vector<18x18x4xf32> to vector<16x16x4xf32>
    %60 = vector.shape_cast %58 : vector<4xf32> to vector<1x1x4xf32>
    %61 = vector.broadcast %60 : vector<1x1x4xf32> to vector<16x16x4xf32>
    %62 = arith.mulf %59, %61 : vector<16x16x4xf32>
    %63 = arith.addf %56, %62 : vector<16x16x4xf32>
    %64 = vector.extract_strided_slice %0 {offsets = [8, 0], sizes = [1, 4], strides = [1, 1]} : vector<27x4xf32> to vector<1x4xf32>
    %65 = vector.shape_cast %64 : vector<1x4xf32> to vector<4xf32>
    %66 = vector.extract_strided_slice %2 {offsets = [2, 2, 0], sizes = [16, 16, 4], strides = [1, 1, 1]} : vector<18x18x4xf32> to vector<16x16x4xf32>
    %67 = vector.shape_cast %65 : vector<4xf32> to vector<1x1x4xf32>
    %68 = vector.broadcast %67 : vector<1x1x4xf32> to vector<16x16x4xf32>
    %69 = arith.mulf %66, %68 : vector<16x16x4xf32>
    %70 = arith.addf %63, %69 : vector<16x16x4xf32>
    %71 = vector.extract_strided_slice %0 {offsets = [9, 0], sizes = [1, 4], strides = [1, 1]} : vector<27x4xf32> to vector<1x4xf32>
    %72 = vector.shape_cast %71 : vector<1x4xf32> to vector<4xf32>
    %73 = vector.extract_strided_slice %4 {offsets = [0, 0, 0], sizes = [16, 16, 4], strides = [1, 1, 1]} : vector<18x18x4xf32> to vector<16x16x4xf32>
    %74 = vector.shape_cast %72 : vector<4xf32> to vector<1x1x4xf32>
    %75 = vector.broadcast %74 : vector<1x1x4xf32> to vector<16x16x4xf32>
    %76 = arith.mulf %73, %75 : vector<16x16x4xf32>
    %77 = arith.addf %70, %76 : vector<16x16x4xf32>
    %78 = vector.extract_strided_slice %0 {offsets = [10, 0], sizes = [1, 4], strides = [1, 1]} : vector<27x4xf32> to vector<1x4xf32>
    %79 = vector.shape_cast %78 : vector<1x4xf32> to vector<4xf32>
    %80 = vector.extract_strided_slice %4 {offsets = [0, 1, 0], sizes = [16, 16, 4], strides = [1, 1, 1]} : vector<18x18x4xf32> to vector<16x16x4xf32>
    %81 = vector.shape_cast %79 : vector<4xf32> to vector<1x1x4xf32>
    %82 = vector.broadcast %81 : vector<1x1x4xf32> to vector<16x16x4xf32>
    %83 = arith.mulf %80, %82 : vector<16x16x4xf32>
    %84 = arith.addf %77, %83 : vector<16x16x4xf32>
    %85 = vector.extract_strided_slice %0 {offsets = [11, 0], sizes = [1, 4], strides = [1, 1]} : vector<27x4xf32> to vector<1x4xf32>
    %86 = vector.shape_cast %85 : vector<1x4xf32> to vector<4xf32>
    %87 = vector.extract_strided_slice %4 {offsets = [0, 2, 0], sizes = [16, 16, 4], strides = [1, 1, 1]} : vector<18x18x4xf32> to vector<16x16x4xf32>
    %88 = vector.shape_cast %86 : vector<4xf32> to vector<1x1x4xf32>
    %89 = vector.broadcast %88 : vector<1x1x4xf32> to vector<16x16x4xf32>
    %90 = arith.mulf %87, %89 : vector<16x16x4xf32>
    %91 = arith.addf %84, %90 : vector<16x16x4xf32>
    %92 = vector.extract_strided_slice %0 {offsets = [12, 0], sizes = [1, 4], strides = [1, 1]} : vector<27x4xf32> to vector<1x4xf32>
    %93 = vector.shape_cast %92 : vector<1x4xf32> to vector<4xf32>
    %94 = vector.extract_strided_slice %4 {offsets = [1, 0, 0], sizes = [16, 16, 4], strides = [1, 1, 1]} : vector<18x18x4xf32> to vector<16x16x4xf32>
    %95 = vector.shape_cast %93 : vector<4xf32> to vector<1x1x4xf32>
    %96 = vector.broadcast %95 : vector<1x1x4xf32> to vector<16x16x4xf32>
    %97 = arith.mulf %94, %96 : vector<16x16x4xf32>
    %98 = arith.addf %91, %97 : vector<16x16x4xf32>
    %99 = vector.extract_strided_slice %0 {offsets = [13, 0], sizes = [1, 4], strides = [1, 1]} : vector<27x4xf32> to vector<1x4xf32>
    %100 = vector.shape_cast %99 : vector<1x4xf32> to vector<4xf32>
    %101 = vector.extract_strided_slice %4 {offsets = [1, 1, 0], sizes = [16, 16, 4], strides = [1, 1, 1]} : vector<18x18x4xf32> to vector<16x16x4xf32>
    %102 = vector.shape_cast %100 : vector<4xf32> to vector<1x1x4xf32>
    %103 = vector.broadcast %102 : vector<1x1x4xf32> to vector<16x16x4xf32>
    %104 = arith.mulf %101, %103 : vector<16x16x4xf32>
    %105 = arith.addf %98, %104 : vector<16x16x4xf32>
    %106 = vector.extract_strided_slice %0 {offsets = [14, 0], sizes = [1, 4], strides = [1, 1]} : vector<27x4xf32> to vector<1x4xf32>
    %107 = vector.shape_cast %106 : vector<1x4xf32> to vector<4xf32>
    %108 = vector.extract_strided_slice %4 {offsets = [1, 2, 0], sizes = [16, 16, 4], strides = [1, 1, 1]} : vector<18x18x4xf32> to vector<16x16x4xf32>
    %109 = vector.shape_cast %107 : vector<4xf32> to vector<1x1x4xf32>
    %110 = vector.broadcast %109 : vector<1x1x4xf32> to vector<16x16x4xf32>
    %111 = arith.mulf %108, %110 : vector<16x16x4xf32>
    %112 = arith.addf %105, %111 : vector<16x16x4xf32>
    %113 = vector.extract_strided_slice %0 {offsets = [15, 0], sizes = [1, 4], strides = [1, 1]} : vector<27x4xf32> to vector<1x4xf32>
    %114 = vector.shape_cast %113 : vector<1x4xf32> to vector<4xf32>
    %115 = vector.extract_strided_slice %4 {offsets = [2, 0, 0], sizes = [16, 16, 4], strides = [1, 1, 1]} : vector<18x18x4xf32> to vector<16x16x4xf32>
    %116 = vector.shape_cast %114 : vector<4xf32> to vector<1x1x4xf32>
    %117 = vector.broadcast %116 : vector<1x1x4xf32> to vector<16x16x4xf32>
    %118 = arith.mulf %115, %117 : vector<16x16x4xf32>
    %119 = arith.addf %112, %118 : vector<16x16x4xf32>
    %120 = vector.extract_strided_slice %0 {offsets = [16, 0], sizes = [1, 4], strides = [1, 1]} : vector<27x4xf32> to vector<1x4xf32>
    %121 = vector.shape_cast %120 : vector<1x4xf32> to vector<4xf32>
    %122 = vector.extract_strided_slice %4 {offsets = [2, 1, 0], sizes = [16, 16, 4], strides = [1, 1, 1]} : vector<18x18x4xf32> to vector<16x16x4xf32>
    %123 = vector.shape_cast %121 : vector<4xf32> to vector<1x1x4xf32>
    %124 = vector.broadcast %123 : vector<1x1x4xf32> to vector<16x16x4xf32>
    %125 = arith.mulf %122, %124 : vector<16x16x4xf32>
    %126 = arith.addf %119, %125 : vector<16x16x4xf32>
    %127 = vector.extract_strided_slice %0 {offsets = [17, 0], sizes = [1, 4], strides = [1, 1]} : vector<27x4xf32> to vector<1x4xf32>
    %128 = vector.shape_cast %127 : vector<1x4xf32> to vector<4xf32>
    %129 = vector.extract_strided_slice %4 {offsets = [2, 2, 0], sizes = [16, 16, 4], strides = [1, 1, 1]} : vector<18x18x4xf32> to vector<16x16x4xf32>
    %130 = vector.shape_cast %128 : vector<4xf32> to vector<1x1x4xf32>
    %131 = vector.broadcast %130 : vector<1x1x4xf32> to vector<16x16x4xf32>
    %132 = arith.mulf %129, %131 : vector<16x16x4xf32>
    %133 = arith.addf %126, %132 : vector<16x16x4xf32>
    %134 = vector.extract_strided_slice %0 {offsets = [18, 0], sizes = [1, 4], strides = [1, 1]} : vector<27x4xf32> to vector<1x4xf32>
    %135 = vector.shape_cast %134 : vector<1x4xf32> to vector<4xf32>
    %136 = vector.extract_strided_slice %6 {offsets = [0, 0, 0], sizes = [16, 16, 4], strides = [1, 1, 1]} : vector<18x18x4xf32> to vector<16x16x4xf32>
    %137 = vector.shape_cast %135 : vector<4xf32> to vector<1x1x4xf32>
    %138 = vector.broadcast %137 : vector<1x1x4xf32> to vector<16x16x4xf32>
    %139 = arith.mulf %136, %138 : vector<16x16x4xf32>
    %140 = arith.addf %133, %139 : vector<16x16x4xf32>
    %141 = vector.extract_strided_slice %0 {offsets = [19, 0], sizes = [1, 4], strides = [1, 1]} : vector<27x4xf32> to vector<1x4xf32>
    %142 = vector.shape_cast %141 : vector<1x4xf32> to vector<4xf32>
    %143 = vector.extract_strided_slice %6 {offsets = [0, 1, 0], sizes = [16, 16, 4], strides = [1, 1, 1]} : vector<18x18x4xf32> to vector<16x16x4xf32>
    %144 = vector.shape_cast %142 : vector<4xf32> to vector<1x1x4xf32>
    %145 = vector.broadcast %144 : vector<1x1x4xf32> to vector<16x16x4xf32>
    %146 = arith.mulf %143, %145 : vector<16x16x4xf32>
    %147 = arith.addf %140, %146 : vector<16x16x4xf32>
    %148 = vector.extract_strided_slice %0 {offsets = [20, 0], sizes = [1, 4], strides = [1, 1]} : vector<27x4xf32> to vector<1x4xf32>
    %149 = vector.shape_cast %148 : vector<1x4xf32> to vector<4xf32>
    %150 = vector.extract_strided_slice %6 {offsets = [0, 2, 0], sizes = [16, 16, 4], strides = [1, 1, 1]} : vector<18x18x4xf32> to vector<16x16x4xf32>
    %151 = vector.shape_cast %149 : vector<4xf32> to vector<1x1x4xf32>
    %152 = vector.broadcast %151 : vector<1x1x4xf32> to vector<16x16x4xf32>
    %153 = arith.mulf %150, %152 : vector<16x16x4xf32>
    %154 = arith.addf %147, %153 : vector<16x16x4xf32>
    %155 = vector.extract_strided_slice %0 {offsets = [21, 0], sizes = [1, 4], strides = [1, 1]} : vector<27x4xf32> to vector<1x4xf32>
    %156 = vector.shape_cast %155 : vector<1x4xf32> to vector<4xf32>
    %157 = vector.extract_strided_slice %6 {offsets = [1, 0, 0], sizes = [16, 16, 4], strides = [1, 1, 1]} : vector<18x18x4xf32> to vector<16x16x4xf32>
    %158 = vector.shape_cast %156 : vector<4xf32> to vector<1x1x4xf32>
    %159 = vector.broadcast %158 : vector<1x1x4xf32> to vector<16x16x4xf32>
    %160 = arith.mulf %157, %159 : vector<16x16x4xf32>
    %161 = arith.addf %154, %160 : vector<16x16x4xf32>
    %162 = vector.extract_strided_slice %0 {offsets = [22, 0], sizes = [1, 4], strides = [1, 1]} : vector<27x4xf32> to vector<1x4xf32>
    %163 = vector.shape_cast %162 : vector<1x4xf32> to vector<4xf32>
    %164 = vector.extract_strided_slice %6 {offsets = [1, 1, 0], sizes = [16, 16, 4], strides = [1, 1, 1]} : vector<18x18x4xf32> to vector<16x16x4xf32>
    %165 = vector.shape_cast %163 : vector<4xf32> to vector<1x1x4xf32>
    %166 = vector.broadcast %165 : vector<1x1x4xf32> to vector<16x16x4xf32>
    %167 = arith.mulf %164, %166 : vector<16x16x4xf32>
    %168 = arith.addf %161, %167 : vector<16x16x4xf32>
    %169 = vector.extract_strided_slice %0 {offsets = [23, 0], sizes = [1, 4], strides = [1, 1]} : vector<27x4xf32> to vector<1x4xf32>
    %170 = vector.shape_cast %169 : vector<1x4xf32> to vector<4xf32>
    %171 = vector.extract_strided_slice %6 {offsets = [1, 2, 0], sizes = [16, 16, 4], strides = [1, 1, 1]} : vector<18x18x4xf32> to vector<16x16x4xf32>
    %172 = vector.shape_cast %170 : vector<4xf32> to vector<1x1x4xf32>
    %173 = vector.broadcast %172 : vector<1x1x4xf32> to vector<16x16x4xf32>
    %174 = arith.mulf %171, %173 : vector<16x16x4xf32>
    %175 = arith.addf %168, %174 : vector<16x16x4xf32>
    %176 = vector.extract_strided_slice %0 {offsets = [24, 0], sizes = [1, 4], strides = [1, 1]} : vector<27x4xf32> to vector<1x4xf32>
    %177 = vector.shape_cast %176 : vector<1x4xf32> to vector<4xf32>
    %178 = vector.extract_strided_slice %6 {offsets = [2, 0, 0], sizes = [16, 16, 4], strides = [1, 1, 1]} : vector<18x18x4xf32> to vector<16x16x4xf32>
    %179 = vector.shape_cast %177 : vector<4xf32> to vector<1x1x4xf32>
    %180 = vector.broadcast %179 : vector<1x1x4xf32> to vector<16x16x4xf32>
    %181 = arith.mulf %178, %180 : vector<16x16x4xf32>
    %182 = arith.addf %175, %181 : vector<16x16x4xf32>
    %183 = vector.extract_strided_slice %0 {offsets = [25, 0], sizes = [1, 4], strides = [1, 1]} : vector<27x4xf32> to vector<1x4xf32>
    %184 = vector.shape_cast %183 : vector<1x4xf32> to vector<4xf32>
    %185 = vector.extract_strided_slice %6 {offsets = [2, 1, 0], sizes = [16, 16, 4], strides = [1, 1, 1]} : vector<18x18x4xf32> to vector<16x16x4xf32>
    %186 = vector.shape_cast %184 : vector<4xf32> to vector<1x1x4xf32>
    %187 = vector.broadcast %186 : vector<1x1x4xf32> to vector<16x16x4xf32>
    %188 = arith.mulf %185, %187 : vector<16x16x4xf32>
    %189 = arith.addf %182, %188 : vector<16x16x4xf32>
    %190 = vector.extract_strided_slice %0 {offsets = [26, 0], sizes = [1, 4], strides = [1, 1]} : vector<27x4xf32> to vector<1x4xf32>
    %191 = vector.shape_cast %190 : vector<1x4xf32> to vector<4xf32>
    %192 = vector.extract_strided_slice %6 {offsets = [2, 2, 0], sizes = [16, 16, 4], strides = [1, 1, 1]} : vector<18x18x4xf32> to vector<16x16x4xf32>
    %193 = vector.shape_cast %191 : vector<4xf32> to vector<1x1x4xf32>
    %194 = vector.broadcast %193 : vector<1x1x4xf32> to vector<16x16x4xf32>
    %195 = arith.mulf %192, %194 : vector<16x16x4xf32>
    %196 = arith.addf %189, %195 : vector<16x16x4xf32>
    %c0_16 = arith.constant 0 : index
    %c0_17 = arith.constant 0 : index
    %197 = vector.load %arg6[%c0_16, %c0_17] : memref<1x4xf32, #tpu.memory_space<vmem>>, vector<1x4xf32>
    %198 = vector.shape_cast %197 : vector<1x4xf32> to vector<1x1x4xf32>
    %199 = vector.broadcast %198 : vector<1x1x4xf32> to vector<16x16x4xf32>
    %200 = arith.addf %196, %199 : vector<16x16x4xf32>
    %201 = vector.shape_cast %200 : vector<16x16x4xf32> to vector<256x4xf32>
    %c0_18 = arith.constant 0 : index
    %c0_19 = arith.constant 0 : index
    %202 = vector.load %arg7[%c0_18, %c0_19] : memref<4x8xf32, #tpu.memory_space<vmem>>, vector<4x8xf32>
    %cst_20 = arith.constant dense<0.000000e+00> : vector<256x8xf32>
    %203 = tpu.matmul %201, %202, %cst_20 {dimension_numbers = #tpu.dot_dimension_numbers<[1], [0], [0], [1], [0, 0, 1, 1], [], []>} : vector<256x4xf32>, vector<4x8xf32>, vector<256x8xf32> -> vector<256x8xf32>
    %c0_21 = arith.constant 0 : index
    %c0_22 = arith.constant 0 : index
    %204 = vector.load %arg8[%c0_21, %c0_22] : memref<1x8xf32, #tpu.memory_space<vmem>>, vector<1x8xf32>
    %205 = vector.broadcast %204 : vector<1x8xf32> to vector<256x8xf32>
    %206 = arith.addf %203, %205 : vector<256x8xf32>
    %207 = vector.shape_cast %206 : vector<256x8xf32> to vector<16x16x8xf32>
    %c0_23 = arith.constant 0 : index
    %c0_24 = arith.constant 0 : index
    %c0_25 = arith.constant 0 : index
    %c0_26 = arith.constant 0 : index
    %c0_27 = arith.constant 0 : index
    %208 = vector.load %arg9[%c0_23, %c0_24, %c0_25, %c0_26, %c0_27] : memref<1x1x16x16x8xf32, #tpu.memory_space<vmem>>, vector<1x1x16x16x8xf32>
    %209 = vector.shape_cast %208 : vector<1x1x16x16x8xf32> to vector<16x16x8xf32>
    %210 = vector.shape_cast %207 : vector<16x16x8xf32> to vector<1x1x16x16x8xf32>
    tpu.vector_store %arg9[%c0_23, %c0_24, %c0_25, %c0_26, %c0_27], %210 {strides = array<i32>} : memref<1x1x16x16x8xf32, #tpu.memory_space<vmem>>, vector<1x1x16x16x8xf32>,
    return
  }
  func.func @transform_0(%arg0: i32, %arg1: i32) -> (i32, i32, i32, i32, i32) {
    %c0_i32 = arith.constant 0 : i32
    %0 = arith.addi %arg1, %c0_i32 : i32
    %c0_i32_0 = arith.constant 0 : i32
    %c0_i32_1 = arith.constant 0 : i32
    %c0_i32_2 = arith.constant 0 : i32
    %c0_i32_3 = arith.constant 0 : i32
    return %arg0, %0, %c0_i32_0, %c0_i32_1, %c0_i32_2 : i32, i32, i32, i32, i32
  }
  func.func @transform_1(%arg0: i32, %arg1: i32) -> (i32, i32, i32, i32, i32) {
    %c1_i32 = arith.constant 1 : i32
    %0 = arith.addi %arg1, %c1_i32 : i32
    %c0_i32 = arith.constant 0 : i32
    %c0_i32_0 = arith.constant 0 : i32
    %c0_i32_1 = arith.constant 0 : i32
    %c0_i32_2 = arith.constant 0 : i32
    return %arg0, %0, %c0_i32, %c0_i32_0, %c0_i32_1 : i32, i32, i32, i32, i32
  }
  func.func @transform_2(%arg0: i32, %arg1: i32) -> (i32, i32, i32, i32, i32) {
    %c2_i32 = arith.constant 2 : i32
    %0 = arith.addi %arg1, %c2_i32 : i32
    %c0_i32 = arith.constant 0 : i32
    %c0_i32_0 = arith.constant 0 : i32
    %c0_i32_1 = arith.constant 0 : i32
    %c0_i32_2 = arith.constant 0 : i32
    return %arg0, %0, %c0_i32, %c0_i32_0, %c0_i32_1 : i32, i32, i32, i32, i32
  }
  func.func @transform_3(%arg0: i32, %arg1: i32) -> (i32, i32) {
    %c0_i32 = arith.constant 0 : i32
    %c0_i32_0 = arith.constant 0 : i32
    %c0_i32_1 = arith.constant 0 : i32
    return %c0_i32, %c0_i32_0 : i32, i32
  }
  func.func @transform_4(%arg0: i32, %arg1: i32) -> (i32, i32) {
    %c0_i32 = arith.constant 0 : i32
    %c0_i32_0 = arith.constant 0 : i32
    %c0_i32_1 = arith.constant 0 : i32
    return %c0_i32, %c0_i32_0 : i32, i32
  }
  func.func @transform_5(%arg0: i32, %arg1: i32) -> (i32, i32) {
    %c0_i32 = arith.constant 0 : i32
    %c0_i32_0 = arith.constant 0 : i32
    %c0_i32_1 = arith.constant 0 : i32
    return %c0_i32, %c0_i32_0 : i32, i32
  }
  func.func @transform_6(%arg0: i32, %arg1: i32) -> (i32, i32) {
    %c0_i32 = arith.constant 0 : i32
    %c0_i32_0 = arith.constant 0 : i32
    %c0_i32_1 = arith.constant 0 : i32
    return %c0_i32, %c0_i32_0 : i32, i32
  }
  func.func @transform_7(%arg0: i32, %arg1: i32) -> (i32, i32, i32, i32, i32) {
    %c0_i32 = arith.constant 0 : i32
    %c0_i32_0 = arith.constant 0 : i32
    %c0_i32_1 = arith.constant 0 : i32
    %c0_i32_2 = arith.constant 0 : i32
    return %arg0, %arg1, %c0_i32, %c0_i32_0, %c0_i32_1 : i32, i32, i32, i32, i32
  }
}

</mosaic_0001>

<llo_original>
// kernel: ds_conv3d_forward.1
$region0: #{ds_conv3d_forward.1}
  #allocation0 [shape = 'u32[]', space=smem, size = 0x4, offset = 0x4, fixed_abs, tag = 'smem constant byte address 0x4 - core index']
  #allocation1 [shape = 'u32[144,128]{1,0:T(1,128)}', space=vmem, size = 0x12000, scoped, tag = 'internal scratch']
  %s0 = inlined_call_operand.vmem [shape: f32[2,18,18,18,4], index: 0, kind: input, shape index: {}, may-alias: {0,1,2}]
  %s1 = inlined_call_operand.vmem [shape: f32[2,18,18,18,4], index: 1, kind: input, shape index: {}, may-alias: {0,1,2}]
  %s2 = inlined_call_operand.vmem [shape: f32[2,18,18,18,4], index: 2, kind: input, shape index: {}, may-alias: {0,1,2}]
  %s3 = inlined_call_operand.vmem [shape: f32[27,4], index: 3, kind: input, shape index: {}]
  %s4 = inlined_call_operand.vmem [shape: f32[1,4], index: 4, kind: input, shape index: {}]
  %s5 = inlined_call_operand.vmem [shape: f32[4,8], index: 5, kind: input, shape index: {}]
  %s6 = inlined_call_operand.vmem [shape: f32[1,8], index: 6, kind: input, shape index: {}]
  %s7 = inlined_call_operand.vmem [shape: f32[2,16,16,16,8], index: 7, kind: output, shape index: {}]
  %s8 = sld [smem:[#allocation0]]
  $region61: #{ds_conv3d_forward.1} parent=0
    _
  %s10 = ssub.s32 1, %s8
  %s11 = scalar_select 0, %s10, %s8
  loop: start=0, step=1, limit=34
  $region2: #{ds_conv3d_forward.1} parent=0 // loop_pre_header
    _
  $region3: #{ds_conv3d_forward.1} parent=0 // loop_header
    %s13 = sphi 0, %s17
    %p14 = scmp.ge.s32.totalorder %s13, 34
    %s20 = sphi 0, %s32
    %s21 = sphi 0, %s28
    %s22 = sphi 0, %s20
    %s23 = sphi 0, %s21
    %s24 = sphi 0, %s22
    %s25 = sphi 0, %s23
    %s37 = sphi 0, %s39
    %s40 = sphi 0, %s37
    %s41 = sphi 0, %s40
    %s57 = sphi 0, %s41
    %s67 = sphi 0, %s69
    %s70 = sphi 0, %s67
    %s71 = sphi 0, %s70
    %s87 = sphi 0, %s71
    %s97 = sphi 0, %s99
    %s100 = sphi 0, %s97
    %s101 = sphi 0, %s100
    %s117 = sphi 0, %s101
    %s121 = sphi 0, %s121
    %s123 = sphi 0, %s121
    %s124 = sphi 0, %s123
    %s138 = sphi 0, %s124
    %s142 = sphi 0, %s142
    %s144 = sphi 0, %s142
    %s145 = sphi 0, %s144
    %s159 = sphi 0, %s145
    %s163 = sphi 0, %s163
    %s165 = sphi 0, %s163
    %s166 = sphi 0, %s165
    %s180 = sphi 0, %s166
    %s184 = sphi 0, %s184
    %s186 = sphi 0, %s184
    %s187 = sphi 0, %s186
    %s201 = sphi 0, %s187
    %s209 = sphi 0, %s211
    %s212 = sphi 0, %s209
    %s213 = sphi 0, %s212
    %s229 = sphi 0, %s213
  $region4: #{ds_conv3d_forward.1} parent=0 // loop_header_branch
    %16 = sbr.rel (%p14) target = $region8
  $region5: #{ds_conv3d_forward.1} parent=0 // loop_body
    %s18 = ssub.s32 %s13, 1
    %s19 = ssub.s32 %s13, 2
    %s26 = sadd.s32 1, %s21
    %p27 = scmp.ge.s32.totalorder %s26, 16
    %s28 = scalar_select %p27, 0, %s26
    %s29 = sadd.s32 1, %s20
    %s30 = scalar_select %p27, %s29, %s20
    %p31 = scmp.ge.s32.totalorder %s30, 2
    %s32 = scalar_select %p31, 0, %s30
    %s33 = ssub.s32 %s20, %s32
    %s34 = ssub.s32 %s21, %s28
    %s35 = sor.u32 %s33, %s34
    %p36 = scmp.eq.s32.totalorder %s35, 0
    %s38 = sadd.s32 %s37, 1
    %s39 = scalar_select %p36, %s37, %s38
    %p42 = pneg %p36
    %p43 = scmp.eq.s32.totalorder %s13, 31
    %p44 = por %p42, %p43
    %p45 = scmp.ne.s32.totalorder %s37, %s40
    %p46 = scmp.eq.s32.totalorder %s13, 0
    %p47 = por %p45, %p46
    %p48 = scmp.ne.s32.totalorder %s37, %s40
    %p49 = scmp.eq.s32.totalorder %s18, 31
    %p50 = por %p48, %p49
    %p51 = scmp.ne.s32.totalorder %s40, %s41
    %p52 = scmp.eq.s32.totalorder %s18, 0
    %p53 = por %p51, %p52
    %p54 = scmp.ne.s32.totalorder %s40, %s41
    %p55 = scmp.eq.s32.totalorder %s19, 31
    %p56 = por %p54, %p55
    %p58 = scmp.ne.s32.totalorder %s41, %s57
    %p59 = scmp.eq.s32.totalorder %s19, 0
    %p60 = por %p58, %p59
    %s61 = sadd.s32 %s21, 1
    %s62 = sadd.s32 %s28, 1
    %s63 = ssub.s32 %s20, %s32
    %s64 = ssub.s32 %s61, %s62
    %s65 = sor.u32 %s63, %s64
    %p66 = scmp.eq.s32.totalorder %s65, 0
    %s68 = sadd.s32 %s67, 1
    %s69 = scalar_select %p66, %s67, %s68
    %p72 = pneg %p66
    %p73 = scmp.eq.s32.totalorder %s13, 31
    %p74 = por %p72, %p73
    %p75 = scmp.ne.s32.totalorder %s67, %s70
    %p76 = scmp.eq.s32.totalorder %s13, 0
    %p77 = por %p75, %p76
    %p78 = scmp.ne.s32.totalorder %s67, %s70
    %p79 = scmp.eq.s32.totalorder %s18, 31
    %p80 = por %p78, %p79
    %p81 = scmp.ne.s32.totalorder %s70, %s71
    %p82 = scmp.eq.s32.totalorder %s18, 0
    %p83 = por %p81, %p82
    %p84 = scmp.ne.s32.totalorder %s70, %s71
    %p85 = scmp.eq.s32.totalorder %s19, 31
    %p86 = por %p84, %p85
    %p88 = scmp.ne.s32.totalorder %s71, %s87
    %p89 = scmp.eq.s32.totalorder %s19, 0
    %p90 = por %p88, %p89
    %s91 = sadd.s32 %s21, 2
    %s92 = sadd.s32 %s28, 2
    %s93 = ssub.s32 %s20, %s32
    %s94 = ssub.s32 %s91, %s92
    %s95 = sor.u32 %s93, %s94
    %p96 = scmp.eq.s32.totalorder %s95, 0
    %s98 = sadd.s32 %s97, 1
    %s99 = scalar_select %p96, %s97, %s98
    %p102 = pneg %p96
    %p103 = scmp.eq.s32.totalorder %s13, 31
    %p104 = por %p102, %p103
    %p105 = scmp.ne.s32.totalorder %s97, %s100
    %p106 = scmp.eq.s32.totalorder %s13, 0
    %p107 = por %p105, %p106
    %p108 = scmp.ne.s32.totalorder %s97, %s100
    %p109 = scmp.eq.s32.totalorder %s18, 31
    %p110 = por %p108, %p109
    %p111 = scmp.ne.s32.totalorder %s100, %s101
    %p112 = scmp.eq.s32.totalorder %s18, 0
    %p113 = por %p111, %p112
    %p114 = scmp.ne.s32.totalorder %s100, %s101
    %p115 = scmp.eq.s32.totalorder %s19, 31
    %p116 = por %p114, %p115
    %p118 = scmp.ne.s32.totalorder %s101, %s117
    %p119 = scmp.eq.s32.totalorder %s19, 0
    %p120 = por %p118, %p119
    %s122 = sadd.s32 %s121, 1
    %p125 = scmp.eq.s32.totalorder %s13, 31
    %p126 = scmp.ne.s32.totalorder %s121, %s123
    %p127 = scmp.eq.s32.totalorder %s13, 0
    %p128 = por %p126, %p127
    %p129 = scmp.ne.s32.totalorder %s121, %s123
    %p130 = scmp.eq.s32.totalorder %s18, 31
    %p131 = por %p129, %p130
    %p132 = scmp.ne.s32.totalorder %s123, %s124
    %p133 = scmp.eq.s32.totalorder %s18, 0
    %p134 = por %p132, %p133
    %p135 = scmp.ne.s32.totalorder %s123, %s124
    %p136 = scmp.eq.s32.totalorder %s19, 31
    %p137 = por %p135, %p136
    %p139 = scmp.ne.s32.totalorder %s124, %s138
    %p140 = scmp.eq.s32.totalorder %s19, 0
    %p141 = por %p139, %p140
    %s143 = sadd.s32 %s142, 1
    %p146 = scmp.eq.s32.totalorder %s13, 31
    %p147 = scmp.ne.s32.totalorder %s142, %s144
    %p148 = scmp.eq.s32.totalorder %s13, 0
    %p149 = por %p147, %p148
    %p150 = scmp.ne.s32.totalorder %s142, %s144
    %p151 = scmp.eq.s32.totalorder %s18, 31
    %p152 = por %p150, %p151
    %p153 = scmp.ne.s32.totalorder %s144, %s145
    %p154 = scmp.eq.s32.totalorder %s18, 0
    %p155 = por %p153, %p154
    %p156 = scmp.ne.s32.totalorder %s144, %s145
    %p157 = scmp.eq.s32.totalorder %s19, 31
    %p158 = por %p156, %p157
    %p160 = scmp.ne.s32.totalorder %s145, %s159
    %p161 = scmp.eq.s32.totalorder %s19, 0
    %p162 = por %p160, %p161
    %s164 = sadd.s32 %s163, 1
    %p167 = scmp.eq.s32.totalorder %s13, 31
    %p168 = scmp.ne.s32.totalorder %s163, %s165
    %p169 = scmp.eq.s32.totalorder %s13, 0
    %p170 = por %p168, %p169
    %p171 = scmp.ne.s32.totalorder %s163, %s165
    %p172 = scmp.eq.s32.totalorder %s18, 31
    %p173 = por %p171, %p172
    %p174 = scmp.ne.s32.totalorder %s165, %s166
    %p175 = scmp.eq.s32.totalorder %s18, 0
    %p176 = por %p174, %p175
    %p177 = scmp.ne.s32.totalorder %s165, %s166
    %p178 = scmp.eq.s32.totalorder %s19, 31
    %p179 = por %p177, %p178
    %p181 = scmp.ne.s32.totalorder %s166, %s180
    %p182 = scmp.eq.s32.totalorder %s19, 0
    %p183 = por %p181, %p182
    %s185 = sadd.s32 %s184, 1
    %p188 = scmp.eq.s32.totalorder %s13, 31
    %p189 = scmp.ne.s32.totalorder %s184, %s186
    %p190 = scmp.eq.s32.totalorder %s13, 0
    %p191 = por %p189, %p190
    %p192 = scmp.ne.s32.totalorder %s184, %s186
    %p193 = scmp.eq.s32.totalorder %s18, 31
    %p194 = por %p192, %p193
    %p195 = scmp.ne.s32.totalorder %s186, %s187
    %p196 = scmp.eq.s32.totalorder %s18, 0
    %p197 = por %p195, %p196
    %p198 = scmp.ne.s32.totalorder %s186, %s187
    %p199 = scmp.eq.s32.totalorder %s19, 31
    %p200 = por %p198, %p199
    %p202 = scmp.ne.s32.totalorder %s187, %s201
    %p203 = scmp.eq.s32.totalorder %s19, 0
    %p204 = por %p202, %p203
    %s205 = ssub.s32 %s20, %s32
    %s206 = ssub.s32 %s21, %s28
    %s207 = sor.u32 %s205, %s206
    %p208 = scmp.eq.s32.totalorder %s207, 0
    %s210 = sadd.s32 %s209, 1
    %s211 = scalar_select %p208, %s209, %s210
    %p214 = pneg %p208
    %p215 = scmp.eq.s32.totalorder %s13, 31
    %p216 = por %p214, %p215
    %p217 = scmp.ne.s32.totalorder %s209, %s212
    %p218 = scmp.eq.s32.totalorder %s13, 0
    %p219 = por %p217, %p218
    %p220 = scmp.ne.s32.totalorder %s209, %s212
    %p221 = scmp.eq.s32.totalorder %s18, 31
    %p222 = por %p220, %p221
    %p223 = scmp.ne.s32.totalorder %s212, %s213
    %p224 = scmp.eq.s32.totalorder %s18, 0
    %p225 = por %p223, %p224
    %p226 = scmp.ne.s32.totalorder %s212, %s213
    %p227 = scmp.eq.s32.totalorder %s19, 31
    %p228 = por %p226, %p227
    %p230 = scmp.ne.s32.totalorder %s213, %s229
    %p231 = scmp.eq.s32.totalorder %s19, 0
    %p232 = por %p230, %p231
    %p233 = scmp.le.s32.totalorder 1, %s13
    %p234 = scmp.lt.s32.totalorder %s13, 33
    %p235 = pnand %p233, %p234
    %p236 = pneg %p235
    // Predicated region
    $region9: #{ds_conv3d_forward.1} parent=5 // pred_check
      _
    $region10: #{ds_conv3d_forward.1} parent=5 // pred_check_branch
      %238 = sbr.rel (%p235) target = $region12
    $region11: #{ds_conv3d_forward.1} parent=5 // pred_region
      %s239 = ssub.s32 %s13, 1
      // Predicated region
      $region13: #{ds_conv3d_forward.1} parent=11 // pred_check
        %p240 = pneg %p134
      $region14: #{ds_conv3d_forward.1} parent=11 // pred_check_branch
        %242 = sbr.rel (%p240) target = $region16
      $region15: #{ds_conv3d_forward.1} parent=11 // pred_region
        _
      $region16: #{ds_conv3d_forward.1} parent=11 // pred_fallthru
        _
      // Predicated region
      $region17: #{ds_conv3d_forward.1} parent=11 // pred_check
        %p243 = pneg %p155
      $region18: #{ds_conv3d_forward.1} parent=11 // pred_check_branch
        %245 = sbr.rel (%p243) target = $region20
      $region19: #{ds_conv3d_forward.1} parent=11 // pred_region
        _
      $region20: #{ds_conv3d_forward.1} parent=11 // pred_fallthru
        _
      // Predicated region
      $region21: #{ds_conv3d_forward.1} parent=11 // pred_check
        %p246 = pneg %p176
      $region22: #{ds_conv3d_forward.1} parent=11 // pred_check_branch
        %248 = sbr.rel (%p246) target = $region24
      $region23: #{ds_conv3d_forward.1} parent=11 // pred_region
        _
      $region24: #{ds_conv3d_forward.1} parent=11 // pred_fallthru
        _
      // Predicated region
      $region25: #{ds_conv3d_forward.1} parent=11 // pred_check
        %p249 = pneg %p197
      $region26: #{ds_conv3d_forward.1} parent=11 // pred_check_branch
        %251 = sbr.rel (%p249) target = $region28
      $region27: #{ds_conv3d_forward.1} parent=11 // pred_region
        _
      $region28: #{ds_conv3d_forward.1} parent=11 // pred_fallthru
        _
    $region12: #{ds_conv3d_forward.1} parent=5 // pred_fallthru
      _
    %p252 = scmp.lt.s32.totalorder %s13, 32
    // Predicated region
    $region29: #{ds_conv3d_forward.1} parent=5 // pred_check
      %p253 = pneg %p252
    $region30: #{ds_conv3d_forward.1} parent=5 // pred_check_branch
      %255 = sbr.rel (%p253) target = $region32
    $region31: #{ds_conv3d_forward.1} parent=5 // pred_region
      // Predicated region
      $region33: #{ds_conv3d_forward.1} parent=31 // pred_check
        %p256 = pneg %p47
      $region34: #{ds_conv3d_forward.1} parent=31 // pred_check_branch
        %258 = sbr.rel (%p256) target = $region36
      $region35: #{ds_conv3d_forward.1} parent=31 // pred_region
        %p259 = scmp.lt.s32.totalorder %s20, 1
        %s260 = scalar_select %p259, %s20, 1
        %p261 = scmp.lt.s32.totalorder %s21, 17
        %s262 = scalar_select %p261, %s21, 17
        %s263 = smul.addr %s262, 54
        %s264 = smul.addr %s260, 972
        %s265 = sadd.s32 %s263, %s264
        %s266 = smul.addr %s265, 8
        %s267 = scalar_lea.vmem %s0, %s266
      $region36: #{ds_conv3d_forward.1} parent=31 // pred_fallthru
        _
      // Predicated region
      $region37: #{ds_conv3d_forward.1} parent=31 // pred_check
        %p268 = pneg %p77
      $region38: #{ds_conv3d_forward.1} parent=31 // pred_check_branch
        %270 = sbr.rel (%p268) target = $region40
      $region39: #{ds_conv3d_forward.1} parent=31 // pred_region
        %s271 = sadd.s32 %s21, 1
        %p272 = scmp.lt.s32.totalorder %s20, 1
        %s273 = scalar_select %p272, %s20, 1
        %p274 = scmp.lt.s32.totalorder %s271, 17
        %s275 = scalar_select %p274, %s271, 17
        %s276 = smul.addr %s275, 54
        %s277 = smul.addr %s273, 972
        %s278 = sadd.s32 %s276, %s277
        %s279 = smul.addr %s278, 8
        %s280 = scalar_lea.vmem %s1, %s279
        %s281 = sadd.s32 %s21, 1
      $region40: #{ds_conv3d_forward.1} parent=31 // pred_fallthru
        _
      // Predicated region
      $region41: #{ds_conv3d_forward.1} parent=31 // pred_check
        %p282 = pneg %p107
      $region42: #{ds_conv3d_forward.1} parent=31 // pred_check_branch
        %284 = sbr.rel (%p282) target = $region44
      $region43: #{ds_conv3d_forward.1} parent=31 // pred_region
        %s285 = sadd.s32 %s21, 2
        %p286 = scmp.lt.s32.totalorder %s20, 1
        %s287 = scalar_select %p286, %s20, 1
        %p288 = scmp.lt.s32.totalorder %s285, 17
        %s289 = scalar_select %p288, %s285, 17
        %s290 = smul.addr %s289, 54
        %s291 = smul.addr %s287, 972
        %s292 = sadd.s32 %s290, %s291
        %s293 = smul.addr %s292, 8
        %s294 = scalar_lea.vmem %s2, %s293
        %s295 = sadd.s32 %s21, 2
      $region44: #{ds_conv3d_forward.1} parent=31 // pred_fallthru
        _
    $region32: #{ds_conv3d_forward.1} parent=5 // pred_fallthru
      _
    %p296 = scmp.le.s32.totalorder 1, %s13
    %p297 = scmp.lt.s32.totalorder %s13, 33
    %p298 = pnand %p296, %p297
    %p299 = pneg %p298
    // Predicated region
    $region45: #{ds_conv3d_forward.1} parent=5 // pred_check
      _
    $region46: #{ds_conv3d_forward.1} parent=5 // pred_check_branch
      %301 = sbr.rel (%p298) target = $region48
    $region47: #{ds_conv3d_forward.1} parent=5 // pred_region
      %s302 = ssub.s32 %s13, 1
      %p303 = scmp.lt.s32.totalorder %s22, 1
      %s304 = scalar_select %p303, %s22, 1
      %p305 = scmp.lt.s32.totalorder %s23, 17
      %s306 = scalar_select %p305, %s23, 17
      %s307 = smul.addr %s306, 54
      %s308 = smul.addr %s304, 972
      %s309 = sadd.s32 %s307, %s308
      %s310 = smul.addr %s309, 8
      %s311 = scalar_lea.vmem %s0, %s310
      %p312 = pneg %p53
      %p313 = pneg %p50
      %s314 = sadd.s32 %s23, 1
      %p315 = scmp.lt.s32.totalorder %s22, 1
      %s316 = scalar_select %p315, %s22, 1
      %p317 = scmp.lt.s32.totalorder %s314, 17
      %s318 = scalar_select %p317, %s314, 17
      %s319 = smul.addr %s318, 54
      %s320 = smul.addr %s316, 972
      %s321 = sadd.s32 %s319, %s320
      %s322 = smul.addr %s321, 8
      %s323 = scalar_lea.vmem %s1, %s322
      %p324 = pneg %p83
      %p325 = pneg %p80
      %s326 = sadd.s32 %s23, 2
      %p327 = scmp.lt.s32.totalorder %s22, 1
      %s328 = scalar_select %p327, %s22, 1
      %p329 = scmp.lt.s32.totalorder %s326, 17
      %s330 = scalar_select %p329, %s326, 17
      %s331 = smul.addr %s330, 54
      %s332 = smul.addr %s328, 972
      %s333 = sadd.s32 %s331, %s332
      %s334 = smul.addr %s333, 8
      %s335 = scalar_lea.vmem %s2, %s334
      %p336 = pneg %p113
      %p337 = pneg %p110
      %p338 = pneg %p134
      %p339 = pneg %p131
      %p340 = pneg %p155
      %p341 = pneg %p152
      %p342 = pneg %p176
      %p343 = pneg %p173
      %p344 = pneg %p197
      %p345 = pneg %p194
      %p346 = pneg %p225
      %p347 = pneg %p222
      %p348 = scmp.lt.s32.totalorder %s22, 1
      %s349 = scalar_select %p348, %s22, 1
      %p350 = scmp.lt.s32.totalorder %s23, 15
      %s351 = scalar_select %p350, %s23, 15
      %s352 = smul.addr %s351, 32
      %s353 = smul.addr %s349, 512
      %s354 = sadd.s32 %s352, %s353
      %s355 = smul.addr %s354, 8
      %s356 = scalar_lea.vmem %s7, %s355
      %p357 = scmp.lt.s32.totalorder %s22, 1
      %s358 = scalar_select %p357, %s22, 1
      %p359 = scmp.lt.s32.totalorder %s23, 17
      %s360 = scalar_select %p359, %s23, 17
      %s361 = smul.addr %s360, 54
      %s362 = smul.addr %s358, 972
      %s363 = sadd.s32 %s361, %s362
      %s364 = smul.addr %s363, 8
      %s365 = scalar_lea.vmem %s0, %s364
      %s366 = sadd.s32 %s23, 1
      %p367 = scmp.lt.s32.totalorder %s22, 1
      %s368 = scalar_select %p367, %s22, 1
      %p369 = scmp.lt.s32.totalorder %s366, 17
      %s370 = scalar_select %p369, %s366, 17
      %s371 = smul.addr %s370, 54
      %s372 = smul.addr %s368, 972
      %s373 = sadd.s32 %s371, %s372
      %s374 = smul.addr %s373, 8
      %s375 = scalar_lea.vmem %s1, %s374
      %s376 = sadd.s32 %s23, 1
      %s377 = sadd.s32 %s23, 2
      %p378 = scmp.lt.s32.totalorder %s22, 1
      %s379 = scalar_select %p378, %s22, 1
      %p380 = scmp.lt.s32.totalorder %s377, 17
      %s381 = scalar_select %p380, %s377, 17
      %s382 = smul.addr %s381, 54
      %s383 = smul.addr %s379, 972
      %s384 = sadd.s32 %s382, %s383
      %s385 = smul.addr %s384, 8
      %s386 = scalar_lea.vmem %s2, %s385
      %s387 = sadd.s32 %s23, 2
      %p388 = scmp.lt.s32.totalorder %s22, 1
      %s389 = scalar_select %p388, %s22, 1
      %p390 = scmp.lt.s32.totalorder %s23, 15
      %s391 = scalar_select %p390, %s23, 15
      %s392 = smul.addr %s391, 32
      %s393 = smul.addr %s389, 512
      %s394 = sadd.s32 %s392, %s393
      %s395 = smul.addr %s394, 8
      %s396 = scalar_lea.vmem %s7, %s395
      %v397 = vld [vmem:[%s3] sm:$0xff]
      %v398 = vld [vmem:[%s3 + $0x8] sm:$0xff]
      %v399 = vld [vmem:[%s3 + $0x10] sm:$0xff]
      %v400 = vld [vmem:[%s3 + $0x18] sm:$0x7]
      %v401 = vld [vmem:[%s365] sm:$0xff]
      %v402 = vld [vmem:[%s365 + $0x8] sm:$0xff]
      %v403 = vld [vmem:[%s365 + $0x10] sm:$0x3]
      %v404 = vld [vmem:[%s365 + $0x18] sm:$0xff]
      %v405 = vld [vmem:[%s365 + $0x20] sm:$0xff]
      %v406 = vld [vmem:[%s365 + $0x28] sm:$0x3]
      %v407 = vld [vmem:[%s365 + $0x30] sm:$0xff]
      %v408 = vld [vmem:[%s365 + $0x38] sm:$0xff]
      %v409 = vld [vmem:[%s365 + $0x40] sm:$0x3]
      %v410 = vld [vmem:[%s365 + $0x48] sm:$0xff]
      %v411 = vld [vmem:[%s365 + $0x50] sm:$0xff]
      %v412 = vld [vmem:[%s365 + $0x58] sm:$0x3]
      %v413 = vld [vmem:[%s365 + $0x60] sm:$0xff]
      %v414 = vld [vmem:[%s365 + $0x68] sm:$0xff]
      %v415 = vld [vmem:[%s365 + $0x70] sm:$0x3]
      %v416 = vld [vmem:[%s365 + $0x78] sm:$0xff]
      %v417 = vld [vmem:[%s365 + $0x80] sm:$0xff]
      %v418 = vld [vmem:[%s365 + $0x88] sm:$0x3]
      %v419 = vld [vmem:[%s365 + $0x90] sm:$0xff]
      %v420 = vld [vmem:[%s365 + $0x98] sm:$0xff]
      %v421 = vld [vmem:[%s365 + $0xa0] sm:$0x3]
      %v422 = vld [vmem:[%s365 + $0xa8] sm:$0xff]
      %v423 = vld [vmem:[%s365 + $0xb0] sm:$0xff]
      %v424 = vld [vmem:[%s365 + $0xb8] sm:$0x3]
      %v425 = vld [vmem:[%s365 + $0xc0] sm:$0xff]
      %v426 = vld [vmem:[%s365 + $0xc8] sm:$0xff]
      %v427 = vld [vmem:[%s365 + $0xd0] sm:$0x3]
      %v428 = vld [vmem:[%s365 + $0xd8] sm:$0xff]
      %v429 = vld [vmem:[%s365 + $0xe0] sm:$0xff]
      %v430 = vld [vmem:[%s365 + $0xe8] sm:$0x3]
      %v431 = vld [vmem:[%s365 + $0xf0] sm:$0xff]
      %v432 = vld [vmem:[%s365 + $0xf8] sm:$0xff]
      %v433 = vld [vmem:[%s365 + $0x100] sm:$0x3]
      %v434 = vld [vmem:[%s365 + $0x108] sm:$0xff]
      %v435 = vld [vmem:[%s365 + $0x110] sm:$0xff]
      %v436 = vld [vmem:[%s365 + $0x118] sm:$0x3]
      %v437 = vld [vmem:[%s365 + $0x120] sm:$0xff]
      %v438 = vld [vmem:[%s365 + $0x128] sm:$0xff]
      %v439 = vld [vmem:[%s365 + $0x130] sm:$0x3]
      %v440 = vld [vmem:[%s365 + $0x138] sm:$0xff]
      %v441 = vld [vmem:[%s365 + $0x140] sm:$0xff]
      %v442 = vld [vmem:[%s365 + $0x148] sm:$0x3]
      %v443 = vld [vmem:[%s365 + $0x150] sm:$0xff]
      %v444 = vld [vmem:[%s365 + $0x158] sm:$0xff]
      %v445 = vld [vmem:[%s365 + $0x160] sm:$0x3]
      %v446 = vld [vmem:[%s365 + $0x168] sm:$0xff]
      %v447 = vld [vmem:[%s365 + $0x170] sm:$0xff]
      %v448 = vld [vmem:[%s365 + $0x178] sm:$0x3]
      %v449 = vld [vmem:[%s365 + $0x180] sm:$0xff]
      %v450 = vld [vmem:[%s365 + $0x188] sm:$0xff]
      %v451 = vld [vmem:[%s365 + $0x190] sm:$0x3]
      %v452 = vld [vmem:[%s365 + $0x198] sm:$0xff]
      %v453 = vld [vmem:[%s365 + $0x1a0] sm:$0xff]
      %v454 = vld [vmem:[%s365 + $0x1a8] sm:$0x3]
      %v455 = vld [vmem:[%s375] sm:$0xff]
      %v456 = vld [vmem:[%s375 + $0x8] sm:$0xff]
      %v457 = vld [vmem:[%s375 + $0x10] sm:$0x3]
      %v458 = vld [vmem:[%s375 + $0x18] sm:$0xff]
      %v459 = vld [vmem:[%s375 + $0x20] sm:$0xff]
      %v460 = vld [vmem:[%s375 + $0x28] sm:$0x3]
      %v461 = vld [vmem:[%s375 + $0x30] sm:$0xff]
      %v462 = vld [vmem:[%s375 + $0x38] sm:$0xff]
      %v463 = vld [vmem:[%s375 + $0x40] sm:$0x3]
      %v464 = vld [vmem:[%s375 + $0x48] sm:$0xff]
      %v465 = vld [vmem:[%s375 + $0x50] sm:$0xff]
      %v466 = vld [vmem:[%s375 + $0x58] sm:$0x3]
      %v467 = vld [vmem:[%s375 + $0x60] sm:$0xff]
      %v468 = vld [vmem:[%s375 + $0x68] sm:$0xff]
      %v469 = vld [vmem:[%s375 + $0x70] sm:$0x3]
      %v470 = vld [vmem:[%s375 + $0x78] sm:$0xff]
      %v471 = vld [vmem:[%s375 + $0x80] sm:$0xff]
      %v472 = vld [vmem:[%s375 + $0x88] sm:$0x3]
      %v473 = vld [vmem:[%s375 + $0x90] sm:$0xff]
      %v474 = vld [vmem:[%s375 + $0x98] sm:$0xff]
      %v475 = vld [vmem:[%s375 + $0xa0] sm:$0x3]
      %v476 = vld [vmem:[%s375 + $0xa8] sm:$0xff]
      %v477 = vld [vmem:[%s375 + $0xb0] sm:$0xff]
      %v478 = vld [vmem:[%s375 + $0xb8] sm:$0x3]
      %v479 = vld [vmem:[%s375 + $0xc0] sm:$0xff]
      %v480 = vld [vmem:[%s375 + $0xc8] sm:$0xff]
      %v481 = vld [vmem:[%s375 + $0xd0] sm:$0x3]
      %v482 = vld [vmem:[%s375 + $0xd8] sm:$0xff]
      %v483 = vld [vmem:[%s375 + $0xe0] sm:$0xff]
      %v484 = vld [vmem:[%s375 + $0xe8] sm:$0x3]
      %v485 = vld [vmem:[%s375 + $0xf0] sm:$0xff]
      %v486 = vld [vmem:[%s375 + $0xf8] sm:$0xff]
      %v487 = vld [vmem:[%s375 + $0x100] sm:$0x3]
      %v488 = vld [vmem:[%s375 + $0x108] sm:$0xff]
      %v489 = vld [vmem:[%s375 + $0x110] sm:$0xff]
      %v490 = vld [vmem:[%s375 + $0x118] sm:$0x3]
      %v491 = vld [vmem:[%s375 + $0x120] sm:$0xff]
      %v492 = vld [vmem:[%s375 + $0x128] sm:$0xff]
      %v493 = vld [vmem:[%s375 + $0x130] sm:$0x3]
      %v494 = vld [vmem:[%s375 + $0x138] sm:$0xff]
      %v495 = vld [vmem:[%s375 + $0x140] sm:$0xff]
      %v496 = vld [vmem:[%s375 + $0x148] sm:$0x3]
      %v497 = vld [vmem:[%s375 + $0x150] sm:$0xff]
      %v498 = vld [vmem:[%s375 + $0x158] sm:$0xff]
      %v499 = vld [vmem:[%s375 + $0x160] sm:$0x3]
      %v500 = vld [vmem:[%s375 + $0x168] sm:$0xff]
      %v501 = vld [vmem:[%s375 + $0x170] sm:$0xff]
      %v502 = vld [vmem:[%s375 + $0x178] sm:$0x3]
      %v503 = vld [vmem:[%s375 + $0x180] sm:$0xff]
      %v504 = vld [vmem:[%s375 + $0x188] sm:$0xff]
      %v505 = vld [vmem:[%s375 + $0x190] sm:$0x3]
      %v506 = vld [vmem:[%s375 + $0x198] sm:$0xff]
      %v507 = vld [vmem:[%s375 + $0x1a0] sm:$0xff]
      %v508 = vld [vmem:[%s375 + $0x1a8] sm:$0x3]
      %v509 = vld [vmem:[%s386] sm:$0xff]
      %v510 = vld [vmem:[%s386 + $0x8] sm:$0xff]
      %v511 = vld [vmem:[%s386 + $0x10] sm:$0x3]
      %v512 = vld [vmem:[%s386 + $0x18] sm:$0xff]
      %v513 = vld [vmem:[%s386 + $0x20] sm:$0xff]
      %v514 = vld [vmem:[%s386 + $0x28] sm:$0x3]
      %v515 = vld [vmem:[%s386 + $0x30] sm:$0xff]
      %v516 = vld [vmem:[%s386 + $0x38] sm:$0xff]
      %v517 = vld [vmem:[%s386 + $0x40] sm:$0x3]
      %v518 = vld [vmem:[%s386 + $0x48] sm:$0xff]
      %v519 = vld [vmem:[%s386 + $0x50] sm:$0xff]
      %v520 = vld [vmem:[%s386 + $0x58] sm:$0x3]
      %v521 = vld [vmem:[%s386 + $0x60] sm:$0xff]
      %v522 = vld [vmem:[%s386 + $0x68] sm:$0xff]
      %v523 = vld [vmem:[%s386 + $0x70] sm:$0x3]
      %v524 = vld [vmem:[%s386 + $0x78] sm:$0xff]
      %v525 = vld [vmem:[%s386 + $0x80] sm:$0xff]
      %v526 = vld [vmem:[%s386 + $0x88] sm:$0x3]
      %v527 = vld [vmem:[%s386 + $0x90] sm:$0xff]
      %v528 = vld [vmem:[%s386 + $0x98] sm:$0xff]
      %v529 = vld [vmem:[%s386 + $0xa0] sm:$0x3]
      %v530 = vld [vmem:[%s386 + $0xa8] sm:$0xff]
      %v531 = vld [vmem:[%s386 + $0xb0] sm:$0xff]
      %v532 = vld [vmem:[%s386 + $0xb8] sm:$0x3]
      %v533 = vld [vmem:[%s386 + $0xc0] sm:$0xff]
      %v534 = vld [vmem:[%s386 + $0xc8] sm:$0xff]
      %v535 = vld [vmem:[%s386 + $0xd0] sm:$0x3]
      %v536 = vld [vmem:[%s386 + $0xd8] sm:$0xff]
      %v537 = vld [vmem:[%s386 + $0xe0] sm:$0xff]
      %v538 = vld [vmem:[%s386 + $0xe8] sm:$0x3]
      %v539 = vld [vmem:[%s386 + $0xf0] sm:$0xff]
      %v540 = vld [vmem:[%s386 + $0xf8] sm:$0xff]
      %v541 = vld [vmem:[%s386 + $0x100] sm:$0x3]
      %v542 = vld [vmem:[%s386 + $0x108] sm:$0xff]
      %v543 = vld [vmem:[%s386 + $0x110] sm:$0xff]
      %v544 = vld [vmem:[%s386 + $0x118] sm:$0x3]
      %v545 = vld [vmem:[%s386 + $0x120] sm:$0xff]
      %v546 = vld [vmem:[%s386 + $0x128] sm:$0xff]
      %v547 = vld [vmem:[%s386 + $0x130] sm:$0x3]
      %v548 = vld [vmem:[%s386 + $0x138] sm:$0xff]
      %v549 = vld [vmem:[%s386 + $0x140] sm:$0xff]
      %v550 = vld [vmem:[%s386 + $0x148] sm:$0x3]
      %v551 = vld [vmem:[%s386 + $0x150] sm:$0xff]
      %v552 = vld [vmem:[%s386 + $0x158] sm:$0xff]
      %v553 = vld [vmem:[%s386 + $0x160] sm:$0x3]
      %v554 = vld [vmem:[%s386 + $0x168] sm:$0xff]
      %v555 = vld [vmem:[%s386 + $0x170] sm:$0xff]
      %v556 = vld [vmem:[%s386 + $0x178] sm:$0x3]
      %v557 = vld [vmem:[%s386 + $0x180] sm:$0xff]
      %v558 = vld [vmem:[%s386 + $0x188] sm:$0xff]
      %v559 = vld [vmem:[%s386 + $0x190] sm:$0x3]
      %v560 = vld [vmem:[%s386 + $0x198] sm:$0xff]
      %v561 = vld [vmem:[%s386 + $0x1a0] sm:$0xff]
      %v562 = vld [vmem:[%s386 + $0x1a8] sm:$0x3]
      %v563 = vlaneseq
      %v564 = vshrl.u32 %v563, 7
      %v565 = vsub.s32 0, %v564
      %v566 = vrot.slane %v397, %v565
      %v567 = vmul.f32 %v401, %v566
      %v568 = vmul.f32 %v402, %v566
      %v569 = vmul.f32 %v404, %v566
      %v570 = vmul.f32 %v405, %v566
      %v571 = vmul.f32 %v407, %v566
      %v572 = vmul.f32 %v408, %v566
      %v573 = vmul.f32 %v410, %v566
      %v574 = vmul.f32 %v411, %v566
      %v575 = vmul.f32 %v413, %v566
      %v576 = vmul.f32 %v414, %v566
      %v577 = vmul.f32 %v416, %v566
      %v578 = vmul.f32 %v417, %v566
      %v579 = vmul.f32 %v419, %v566
      %v580 = vmul.f32 %v420, %v566
      %v581 = vmul.f32 %v422, %v566
      %v582 = vmul.f32 %v423, %v566
      %v583 = vmul.f32 %v425, %v566
      %v584 = vmul.f32 %v426, %v566
      %v585 = vmul.f32 %v428, %v566
      %v586 = vmul.f32 %v429, %v566
      %v587 = vmul.f32 %v431, %v566
      %v588 = vmul.f32 %v432, %v566
      %v589 = vmul.f32 %v434, %v566
      %v590 = vmul.f32 %v435, %v566
      %v591 = vmul.f32 %v437, %v566
      %v592 = vmul.f32 %v438, %v566
      %v593 = vmul.f32 %v440, %v566
      %v594 = vmul.f32 %v441, %v566
      %v595 = vmul.f32 %v443, %v566
      %v596 = vmul.f32 %v444, %v566
      %v597 = vmul.f32 %v446, %v566
      %v598 = vmul.f32 %v447, %v566
      %v599 = vadd.f32 %v567, 0.0
      %v600 = vadd.f32 %v568, 0.0
      %v601 = vadd.f32 %v569, 0.0
      %v602 = vadd.f32 %v570, 0.0
      %v603 = vadd.f32 %v571, 0.0
      %v604 = vadd.f32 %v572, 0.0
      %v605 = vadd.f32 %v573, 0.0
      %v606 = vadd.f32 %v574, 0.0
      %v607 = vadd.f32 %v575, 0.0
      %v608 = vadd.f32 %v576, 0.0
      %v609 = vadd.f32 %v577, 0.0
      %v610 = vadd.f32 %v578, 0.0
      %v611 = vadd.f32 %v579, 0.0
      %v612 = vadd.f32 %v580, 0.0
      %v613 = vadd.f32 %v581, 0.0
      %v614 = vadd.f32 %v582, 0.0
      %v615 = vadd.f32 %v583, 0.0
      %v616 = vadd.f32 %v584, 0.0
      %v617 = vadd.f32 %v585, 0.0
      %v618 = vadd.f32 %v586, 0.0
      %v619 = vadd.f32 %v587, 0.0
      %v620 = vadd.f32 %v588, 0.0
      %v621 = vadd.f32 %v589, 0.0
      %v622 = vadd.f32 %v590, 0.0
      %v623 = vadd.f32 %v591, 0.0
      %v624 = vadd.f32 %v592, 0.0
      %v625 = vadd.f32 %v593, 0.0
      %v626 = vadd.f32 %v594, 0.0
      %v627 = vadd.f32 %v595, 0.0
      %v628 = vadd.f32 %v596, 0.0
      %v629 = vadd.f32 %v597, 0.0
      %v630 = vadd.f32 %v598, 0.0
      %v631 = vlaneseq
      %v632 = vshrl.u32 %v631, 7
      %v633 = vsub.s32 1, %v632
      %v634 = vrot.slane %v397, %v633
      %v635 = vmul.f32 %v401, %v634
      %v636 = vmul.f32 %v402, %v634
      %v637 = vmul.f32 %v403, %v634
      %v638 = vmul.f32 %v404, %v634
      %v639 = vmul.f32 %v405, %v634
      %v640 = vmul.f32 %v406, %v634
      %v641 = vmul.f32 %v407, %v634
      %v642 = vmul.f32 %v408, %v634
      %v643 = vmul.f32 %v409, %v634
      %v644 = vmul.f32 %v410, %v634
      %v645 = vmul.f32 %v411, %v634
      %v646 = vmul.f32 %v412, %v634
      %v647 = vmul.f32 %v413, %v634
      %v648 = vmul.f32 %v414, %v634
      %v649 = vmul.f32 %v415, %v634
      %v650 = vmul.f32 %v416, %v634
      %v651 = vmul.f32 %v417, %v634
      %v652 = vmul.f32 %v418, %v634
      %v653 = vmul.f32 %v419, %v634
      %v654 = vmul.f32 %v420, %v634
      %v655 = vmul.f32 %v421, %v634
      %v656 = vmul.f32 %v422, %v634
      %v657 = vmul.f32 %v423, %v634
      %v658 = vmul.f32 %v424, %v634
      %v659 = vmul.f32 %v425, %v634
      %v660 = vmul.f32 %v426, %v634
      %v661 = vmul.f32 %v427, %v634
      %v662 = vmul.f32 %v428, %v634
      %v663 = vmul.f32 %v429, %v634
      %v664 = vmul.f32 %v430, %v634
      %v665 = vmul.f32 %v431, %v634
      %v666 = vmul.f32 %v432, %v634
      %v667 = vmul.f32 %v433, %v634
      %v668 = vmul.f32 %v434, %v634
      %v669 = vmul.f32 %v435, %v634
      %v670 = vmul.f32 %v436, %v634
      %v671 = vmul.f32 %v437, %v634
      %v672 = vmul.f32 %v438, %v634
      %v673 = vmul.f32 %v439, %v634
      %v674 = vmul.f32 %v440, %v634
      %v675 = vmul.f32 %v441, %v634
      %v676 = vmul.f32 %v442, %v634
      %v677 = vmul.f32 %v443, %v634
      %v678 = vmul.f32 %v444, %v634
      %v679 = vmul.f32 %v445, %v634
      %v680 = vmul.f32 %v446, %v634
      %v681 = vmul.f32 %v447, %v634
      %v682 = vmul.f32 %v448, %v634
      %vm731 = vcmask 1046528
      %v732 = vrot.slane %v635, 1
      %v733 = vrot.slane %v636, 1
      %v734 = vsel %vm731, %v732, %v733
      %v735 = vrot.slane %v637, 1
      %v736 = vsel %vm731, %v733, %v735
      %v737 = vrot.slane %v638, 1
      %v738 = vrot.slane %v639, 1
      %v739 = vsel %vm731, %v737, %v738
      %v740 = vrot.slane %v640, 1
      %v741 = vsel %vm731, %v738, %v740
      %v742 = vrot.slane %v641, 1
      %v743 = vrot.slane %v642, 1
      %v744 = vsel %vm731, %v742, %v743
      %v745 = vrot.slane %v643, 1
      %v746 = vsel %vm731, %v743, %v745
      %v747 = vrot.slane %v644, 1
      %v748 = vrot.slane %v645, 1
      %v749 = vsel %vm731, %v747, %v748
      %v750 = vrot.slane %v646, 1
      %v751 = vsel %vm731, %v748, %v750
      %v752 = vrot.slane %v647, 1
      %v753 = vrot.slane %v648, 1
      %v754 = vsel %vm731, %v752, %v753
      %v755 = vrot.slane %v649, 1
      %v756 = vsel %vm731, %v753, %v755
      %v757 = vrot.slane %v650, 1
      %v758 = vrot.slane %v651, 1
      %v759 = vsel %vm731, %v757, %v758
      %v760 = vrot.slane %v652, 1
      %v761 = vsel %vm731, %v758, %v760
      %v762 = vrot.slane %v653, 1
      %v763 = vrot.slane %v654, 1
      %v764 = vsel %vm731, %v762, %v763
      %v765 = vrot.slane %v655, 1
      %v766 = vsel %vm731, %v763, %v765
      %v767 = vrot.slane %v656, 1
      %v768 = vrot.slane %v657, 1
      %v769 = vsel %vm731, %v767, %v768
      %v770 = vrot.slane %v658, 1
      %v771 = vsel %vm731, %v768, %v770
      %v772 = vrot.slane %v659, 1
      %v773 = vrot.slane %v660, 1
      %v774 = vsel %vm731, %v772, %v773
      %v775 = vrot.slane %v661, 1
      %v776 = vsel %vm731, %v773, %v775
      %v777 = vrot.slane %v662, 1
      %v778 = vrot.slane %v663, 1
      %v779 = vsel %vm731, %v777, %v778
      %v780 = vrot.slane %v664, 1
      %v781 = vsel %vm731, %v778, %v780
      %v782 = vrot.slane %v665, 1
      %v783 = vrot.slane %v666, 1
      %v784 = vsel %vm731, %v782, %v783
      %v785 = vrot.slane %v667, 1
      %v786 = vsel %vm731, %v783, %v785
      %v787 = vrot.slane %v668, 1
      %v788 = vrot.slane %v669, 1
      %v789 = vsel %vm731, %v787, %v788
      %v790 = vrot.slane %v670, 1
      %v791 = vsel %vm731, %v788, %v790
      %v792 = vrot.slane %v671, 1
      %v793 = vrot.slane %v672, 1
      %v794 = vsel %vm731, %v792, %v793
      %v795 = vrot.slane %v673, 1
      %v796 = vsel %vm731, %v793, %v795
      %v797 = vrot.slane %v674, 1
      %v798 = vrot.slane %v675, 1
      %v799 = vsel %vm731, %v797, %v798
      %v800 = vrot.slane %v676, 1
      %v801 = vsel %vm731, %v798, %v800
      %v802 = vrot.slane %v677, 1
      %v803 = vrot.slane %v678, 1
      %v804 = vsel %vm731, %v802, %v803
      %v805 = vrot.slane %v679, 1
      %v806 = vsel %vm731, %v803, %v805
      %v807 = vrot.slane %v680, 1
      %v808 = vrot.slane %v681, 1
      %v809 = vsel %vm731, %v807, %v808
      %v810 = vrot.slane %v682, 1
      %v811 = vsel %vm731, %v808, %v810
      %v844 = vadd.f32 %v599, %v734
      %v845 = vadd.f32 %v600, %v736
      %v846 = vadd.f32 %v601, %v739
      %v847 = vadd.f32 %v602, %v741
      %v848 = vadd.f32 %v603, %v744
      %v849 = vadd.f32 %v604, %v746
      %v850 = vadd.f32 %v605, %v749
      %v851 = vadd.f32 %v606, %v751
      %v852 = vadd.f32 %v607, %v754
      %v853 = vadd.f32 %v608, %v756
      %v854 = vadd.f32 %v609, %v759
      %v855 = vadd.f32 %v610, %v761
      %v856 = vadd.f32 %v611, %v764
      %v857 = vadd.f32 %v612, %v766
      %v858 = vadd.f32 %v613, %v769
      %v859 = vadd.f32 %v614, %v771
      %v860 = vadd.f32 %v615, %v774
      %v861 = vadd.f32 %v616, %v776
      %v862 = vadd.f32 %v617, %v779
      %v863 = vadd.f32 %v618, %v781
      %v864 = vadd.f32 %v619, %v784
      %v865 = vadd.f32 %v620, %v786
      %v866 = vadd.f32 %v621, %v789
      %v867 = vadd.f32 %v622, %v791
      %v868 = vadd.f32 %v623, %v794
      %v869 = vadd.f32 %v624, %v796
      %v870 = vadd.f32 %v625, %v799
      %v871 = vadd.f32 %v626, %v801
      %v872 = vadd.f32 %v627, %v804
      %v873 = vadd.f32 %v628, %v806
      %v874 = vadd.f32 %v629, %v809
      %v875 = vadd.f32 %v630, %v811
      %v876 = vlaneseq
      %v877 = vshrl.u32 %v876, 7
      %v878 = vsub.s32 2, %v877
      %v879 = vrot.slane %v397, %v878
      %v880 = vmul.f32 %v401, %v879
      %v881 = vmul.f32 %v402, %v879
      %v882 = vmul.f32 %v403, %v879
      %v883 = vmul.f32 %v404, %v879
      %v884 = vmul.f32 %v405, %v879
      %v885 = vmul.f32 %v406, %v879
      %v886 = vmul.f32 %v407, %v879
      %v887 = vmul.f32 %v408, %v879
      %v888 = vmul.f32 %v409, %v879
      %v889 = vmul.f32 %v410, %v879
      %v890 = vmul.f32 %v411, %v879
      %v891 = vmul.f32 %v412, %v879
      %v892 = vmul.f32 %v413, %v879
      %v893 = vmul.f32 %v414, %v879
      %v894 = vmul.f32 %v415, %v879
      %v895 = vmul.f32 %v416, %v879
      %v896 = vmul.f32 %v417, %v879
      %v897 = vmul.f32 %v418, %v879
      %v898 = vmul.f32 %v419, %v879
      %v899 = vmul.f32 %v420, %v879
      %v900 = vmul.f32 %v421, %v879
      %v901 = vmul.f32 %v422, %v879
      %v902 = vmul.f32 %v423, %v879
      %v903 = vmul.f32 %v424, %v879
      %v904 = vmul.f32 %v425, %v879
      %v905 = vmul.f32 %v426, %v879
      %v906 = vmul.f32 %v427, %v879
      %v907 = vmul.f32 %v428, %v879
      %v908 = vmul.f32 %v429, %v879
      %v909 = vmul.f32 %v430, %v879
      %v910 = vmul.f32 %v431, %v879
      %v911 = vmul.f32 %v432, %v879
      %v912 = vmul.f32 %v433, %v879
      %v913 = vmul.f32 %v434, %v879
      %v914 = vmul.f32 %v435, %v879
      %v915 = vmul.f32 %v436, %v879
      %v916 = vmul.f32 %v437, %v879
      %v917 = vmul.f32 %v438, %v879
      %v918 = vmul.f32 %v439, %v879
      %v919 = vmul.f32 %v440, %v879
      %v920 = vmul.f32 %v441, %v879
      %v921 = vmul.f32 %v442, %v879
      %v922 = vmul.f32 %v443, %v879
      %v923 = vmul.f32 %v444, %v879
      %v924 = vmul.f32 %v445, %v879
      %v925 = vmul.f32 %v446, %v879
      %v926 = vmul.f32 %v447, %v879
      %v927 = vmul.f32 %v448, %v879
      %vm976 = vcmask 1045504
      %v977 = vrot.slane %v880, 2
      %v978 = vrot.slane %v881, 2
      %v979 = vsel %vm976, %v977, %v978
      %v980 = vrot.slane %v882, 2
      %v981 = vsel %vm976, %v978, %v980
      %v982 = vrot.slane %v883, 2
      %v983 = vrot.slane %v884, 2
      %v984 = vsel %vm976, %v982, %v983
      %v985 = vrot.slane %v885, 2
      %v986 = vsel %vm976, %v983, %v985
      %v987 = vrot.slane %v886, 2
      %v988 = vrot.slane %v887, 2
      %v989 = vsel %vm976, %v987, %v988
      %v990 = vrot.slane %v888, 2
      %v991 = vsel %vm976, %v988, %v990
      %v992 = vrot.slane %v889, 2
      %v993 = vrot.slane %v890, 2
      %v994 = vsel %vm976, %v992, %v993
      %v995 = vrot.slane %v891, 2
      %v996 = vsel %vm976, %v993, %v995
      %v997 = vrot.slane %v892, 2
      %v998 = vrot.slane %v893, 2
      %v999 = vsel %vm976, %v997, %v998
      %v1000 = vrot.slane %v894, 2
      %v1001 = vsel %vm976, %v998, %v1000
      %v1002 = vrot.slane %v895, 2
      %v1003 = vrot.slane %v896, 2
      %v1004 = vsel %vm976, %v1002, %v1003
      %v1005 = vrot.slane %v897, 2
      %v1006 = vsel %vm976, %v1003, %v1005
      %v1007 = vrot.slane %v898, 2
      %v1008 = vrot.slane %v899, 2
      %v1009 = vsel %vm976, %v1007, %v1008
      %v1010 = vrot.slane %v900, 2
      %v1011 = vsel %vm976, %v1008, %v1010
      %v1012 = vrot.slane %v901, 2
      %v1013 = vrot.slane %v902, 2
      %v1014 = vsel %vm976, %v1012, %v1013
      %v1015 = vrot.slane %v903, 2
      %v1016 = vsel %vm976, %v1013, %v1015
      %v1017 = vrot.slane %v904, 2
      %v1018 = vrot.slane %v905, 2
      %v1019 = vsel %vm976, %v1017, %v1018
      %v1020 = vrot.slane %v906, 2
      %v1021 = vsel %vm976, %v1018, %v1020
      %v1022 = vrot.slane %v907, 2
      %v1023 = vrot.slane %v908, 2
      %v1024 = vsel %vm976, %v1022, %v1023
      %v1025 = vrot.slane %v909, 2
      %v1026 = vsel %vm976, %v1023, %v1025
      %v1027 = vrot.slane %v910, 2
      %v1028 = vrot.slane %v911, 2
      %v1029 = vsel %vm976, %v1027, %v1028
      %v1030 = vrot.slane %v912, 2
      %v1031 = vsel %vm976, %v1028, %v1030
      %v1032 = vrot.slane %v913, 2
      %v1033 = vrot.slane %v914, 2
      %v1034 = vsel %vm976, %v1032, %v1033
      %v1035 = vrot.slane %v915, 2
      %v1036 = vsel %vm976, %v1033, %v1035
      %v1037 = vrot.slane %v916, 2
      %v1038 = vrot.slane %v917, 2
      %v1039 = vsel %vm976, %v1037, %v1038
      %v1040 = vrot.slane %v918, 2
      %v1041 = vsel %vm976, %v1038, %v1040
      %v1042 = vrot.slane %v919, 2
      %v1043 = vrot.slane %v920, 2
      %v1044 = vsel %vm976, %v1042, %v1043
      %v1045 = vrot.slane %v921, 2
      %v1046 = vsel %vm976, %v1043, %v1045
      %v1047 = vrot.slane %v922, 2
      %v1048 = vrot.slane %v923, 2
      %v1049 = vsel %vm976, %v1047, %v1048
      %v1050 = vrot.slane %v924, 2
      %v1051 = vsel %vm976, %v1048, %v1050
      %v1052 = vrot.slane %v925, 2
      %v1053 = vrot.slane %v926, 2
      %v1054 = vsel %vm976, %v1052, %v1053
      %v1055 = vrot.slane %v927, 2
      %v1056 = vsel %vm976, %v1053, %v1055
      %v1089 = vadd.f32 %v844, %v979
      %v1090 = vadd.f32 %v845, %v981
      %v1091 = vadd.f32 %v846, %v984
      %v1092 = vadd.f32 %v847, %v986
      %v1093 = vadd.f32 %v848, %v989
      %v1094 = vadd.f32 %v849, %v991
      %v1095 = vadd.f32 %v850, %v994
      %v1096 = vadd.f32 %v851, %v996
      %v1097 = vadd.f32 %v852, %v999
      %v1098 = vadd.f32 %v853, %v1001
      %v1099 = vadd.f32 %v854, %v1004
      %v1100 = vadd.f32 %v855, %v1006
      %v1101 = vadd.f32 %v856, %v1009
      %v1102 = vadd.f32 %v857, %v1011
      %v1103 = vadd.f32 %v858, %v1014
      %v1104 = vadd.f32 %v859, %v1016
      %v1105 = vadd.f32 %v860, %v1019
      %v1106 = vadd.f32 %v861, %v1021
      %v1107 = vadd.f32 %v862, %v1024
      %v1108 = vadd.f32 %v863, %v1026
      %v1109 = vadd.f32 %v864, %v1029
      %v1110 = vadd.f32 %v865, %v1031
      %v1111 = vadd.f32 %v866, %v1034
      %v1112 = vadd.f32 %v867, %v1036
      %v1113 = vadd.f32 %v868, %v1039
      %v1114 = vadd.f32 %v869, %v1041
      %v1115 = vadd.f32 %v870, %v1044
      %v1116 = vadd.f32 %v871, %v1046
      %v1117 = vadd.f32 %v872, %v1049
      %v1118 = vadd.f32 %v873, %v1051
      %v1119 = vadd.f32 %v874, %v1054
      %v1120 = vadd.f32 %v875, %v1056
      %v1121 = vlaneseq
      %v1122 = vshrl.u32 %v1121, 7
      %v1123 = vsub.s32 3, %v1122
      %v1124 = vrot.slane %v397, %v1123
      %v1125 = vmul.f32 %v404, %v1124
      %v1126 = vmul.f32 %v405, %v1124
      %v1127 = vmul.f32 %v407, %v1124
      %v1128 = vmul.f32 %v408, %v1124
      %v1129 = vmul.f32 %v410, %v1124
      %v1130 = vmul.f32 %v411, %v1124
      %v1131 = vmul.f32 %v413, %v1124
      %v1132 = vmul.f32 %v414, %v1124
      %v1133 = vmul.f32 %v416, %v1124
      %v1134 = vmul.f32 %v417, %v1124
      %v1135 = vmul.f32 %v419, %v1124
      %v1136 = vmul.f32 %v420, %v1124
      %v1137 = vmul.f32 %v422, %v1124
      %v1138 = vmul.f32 %v423, %v1124
      %v1139 = vmul.f32 %v425, %v1124
      %v1140 = vmul.f32 %v426, %v1124
      %v1141 = vmul.f32 %v428, %v1124
      %v1142 = vmul.f32 %v429, %v1124
      %v1143 = vmul.f32 %v431, %v1124
      %v1144 = vmul.f32 %v432, %v1124
      %v1145 = vmul.f32 %v434, %v1124
      %v1146 = vmul.f32 %v435, %v1124
      %v1147 = vmul.f32 %v437, %v1124
      %v1148 = vmul.f32 %v438, %v1124
      %v1149 = vmul.f32 %v440, %v1124
      %v1150 = vmul.f32 %v441, %v1124
      %v1151 = vmul.f32 %v443, %v1124
      %v1152 = vmul.f32 %v444, %v1124
      %v1153 = vmul.f32 %v446, %v1124
      %v1154 = vmul.f32 %v447, %v1124
      %v1155 = vmul.f32 %v449, %v1124
      %v1156 = vmul.f32 %v450, %v1124
      %v1157 = vadd.f32 %v1089, %v1125
      %v1158 = vadd.f32 %v1090, %v1126
      %v1159 = vadd.f32 %v1091, %v1127
      %v1160 = vadd.f32 %v1092, %v1128
      %v1161 = vadd.f32 %v1093, %v1129
      %v1162 = vadd.f32 %v1094, %v1130
      %v1163 = vadd.f32 %v1095, %v1131
      %v1164 = vadd.f32 %v1096, %v1132
      %v1165 = vadd.f32 %v1097, %v1133
      %v1166 = vadd.f32 %v1098, %v1134
      %v1167 = vadd.f32 %v1099, %v1135
      %v1168 = vadd.f32 %v1100, %v1136
      %v1169 = vadd.f32 %v1101, %v1137
      %v1170 = vadd.f32 %v1102, %v1138
      %v1171 = vadd.f32 %v1103, %v1139
      %v1172 = vadd.f32 %v1104, %v1140
      %v1173 = vadd.f32 %v1105, %v1141
      %v1174 = vadd.f32 %v1106, %v1142
      %v1175 = vadd.f32 %v1107, %v1143
      %v1176 = vadd.f32 %v1108, %v1144
      %v1177 = vadd.f32 %v1109, %v1145
      %v1178 = vadd.f32 %v1110, %v1146
      %v1179 = vadd.f32 %v1111, %v1147
      %v1180 = vadd.f32 %v1112, %v1148
      %v1181 = vadd.f32 %v1113, %v1149
      %v1182 = vadd.f32 %v1114, %v1150
      %v1183 = vadd.f32 %v1115, %v1151
      %v1184 = vadd.f32 %v1116, %v1152
      %v1185 = vadd.f32 %v1117, %v1153
      %v1186 = vadd.f32 %v1118, %v1154
      %v1187 = vadd.f32 %v1119, %v1155
      %v1188 = vadd.f32 %v1120, %v1156
      %v1189 = vlaneseq
      %v1190 = vshrl.u32 %v1189, 7
      %v1191 = vsub.s32 4, %v1190
      %v1192 = vrot.slane %v397, %v1191
      %v1193 = vmul.f32 %v404, %v1192
      %v1194 = vmul.f32 %v405, %v1192
      %v1195 = vmul.f32 %v406, %v1192
      %v1196 = vmul.f32 %v407, %v1192
      %v1197 = vmul.f32 %v408, %v1192
      %v1198 = vmul.f32 %v409, %v1192
      %v1199 = vmul.f32 %v410, %v1192
      %v1200 = vmul.f32 %v411, %v1192
      %v1201 = vmul.f32 %v412, %v1192
      %v1202 = vmul.f32 %v413, %v1192
      %v1203 = vmul.f32 %v414, %v1192
      %v1204 = vmul.f32 %v415, %v1192
      %v1205 = vmul.f32 %v416, %v1192
      %v1206 = vmul.f32 %v417, %v1192
      %v1207 = vmul.f32 %v418, %v1192
      %v1208 = vmul.f32 %v419, %v1192
      %v1209 = vmul.f32 %v420, %v1192
      %v1210 = vmul.f32 %v421, %v1192
      %v1211 = vmul.f32 %v422, %v1192
      %v1212 = vmul.f32 %v423, %v1192
      %v1213 = vmul.f32 %v424, %v1192
      %v1214 = vmul.f32 %v425, %v1192
      %v1215 = vmul.f32 %v426, %v1192
      %v1216 = vmul.f32 %v427, %v1192
      %v1217 = vmul.f32 %v428, %v1192
      %v1218 = vmul.f32 %v429, %v1192
      %v1219 = vmul.f32 %v430, %v1192
      %v1220 = vmul.f32 %v431, %v1192
      %v1221 = vmul.f32 %v432, %v1192
      %v1222 = vmul.f32 %v433, %v1192
      %v1223 = vmul.f32 %v434, %v1192
      %v1224 = vmul.f32 %v435, %v1192
      %v1225 = vmul.f32 %v436, %v1192
      %v1226 = vmul.f32 %v437, %v1192
      %v1227 = vmul.f32 %v438, %v1192
      %v1228 = vmul.f32 %v439, %v1192
      %v1229 = vmul.f32 %v440, %v1192
      %v1230 = vmul.f32 %v441, %v1192
      %v1231 = vmul.f32 %v442, %v1192
      %v1232 = vmul.f32 %v443, %v1192
      %v1233 = vmul.f32 %v444, %v1192
      %v1234 = vmul.f32 %v445, %v1192
      %v1235 = vmul.f32 %v446, %v1192
      %v1236 = vmul.f32 %v447, %v1192
      %v1237 = vmul.f32 %v448, %v1192
      %v1238 = vmul.f32 %v449, %v1192
      %v1239 = vmul.f32 %v450, %v1192
      %v1240 = vmul.f32 %v451, %v1192
      %v1289 = vrot.slane %v1193, 1
      %v1290 = vrot.slane %v1194, 1
      %v1291 = vsel %vm731, %v1289, %v1290
      %v1292 = vrot.slane %v1195, 1
      %v1293 = vsel %vm731, %v1290, %v1292
      %v1294 = vrot.slane %v1196, 1
      %v1295 = vrot.slane %v1197, 1
      %v1296 = vsel %vm731, %v1294, %v1295
      %v1297 = vrot.slane %v1198, 1
      %v1298 = vsel %vm731, %v1295, %v1297
      %v1299 = vrot.slane %v1199, 1
      %v1300 = vrot.slane %v1200, 1
      %v1301 = vsel %vm731, %v1299, %v1300
      %v1302 = vrot.slane %v1201, 1
      %v1303 = vsel %vm731, %v1300, %v1302
      %v1304 = vrot.slane %v1202, 1
      %v1305 = vrot.slane %v1203, 1
      %v1306 = vsel %vm731, %v1304, %v1305
      %v1307 = vrot.slane %v1204, 1
      %v1308 = vsel %vm731, %v1305, %v1307
      %v1309 = vrot.slane %v1205, 1
      %v1310 = vrot.slane %v1206, 1
      %v1311 = vsel %vm731, %v1309, %v1310
      %v1312 = vrot.slane %v1207, 1
      %v1313 = vsel %vm731, %v1310, %v1312
      %v1314 = vrot.slane %v1208, 1
      %v1315 = vrot.slane %v1209, 1
      %v1316 = vsel %vm731, %v1314, %v1315
      %v1317 = vrot.slane %v1210, 1
      %v1318 = vsel %vm731, %v1315, %v1317
      %v1319 = vrot.slane %v1211, 1
      %v1320 = vrot.slane %v1212, 1
      %v1321 = vsel %vm731, %v1319, %v1320
      %v1322 = vrot.slane %v1213, 1
      %v1323 = vsel %vm731, %v1320, %v1322
      %v1324 = vrot.slane %v1214, 1
      %v1325 = vrot.slane %v1215, 1
      %v1326 = vsel %vm731, %v1324, %v1325
      %v1327 = vrot.slane %v1216, 1
      %v1328 = vsel %vm731, %v1325, %v1327
      %v1329 = vrot.slane %v1217, 1
      %v1330 = vrot.slane %v1218, 1
      %v1331 = vsel %vm731, %v1329, %v1330
      %v1332 = vrot.slane %v1219, 1
      %v1333 = vsel %vm731, %v1330, %v1332
      %v1334 = vrot.slane %v1220, 1
      %v1335 = vrot.slane %v1221, 1
      %v1336 = vsel %vm731, %v1334, %v1335
      %v1337 = vrot.slane %v1222, 1
      %v1338 = vsel %vm731, %v1335, %v1337
      %v1339 = vrot.slane %v1223, 1
      %v1340 = vrot.slane %v1224, 1
      %v1341 = vsel %vm731, %v1339, %v1340
      %v1342 = vrot.slane %v1225, 1
      %v1343 = vsel %vm731, %v1340, %v1342
      %v1344 = vrot.slane %v1226, 1
      %v1345 = vrot.slane %v1227, 1
      %v1346 = vsel %vm731, %v1344, %v1345
      %v1347 = vrot.slane %v1228, 1
      %v1348 = vsel %vm731, %v1345, %v1347
      %v1349 = vrot.slane %v1229, 1
      %v1350 = vrot.slane %v1230, 1
      %v1351 = vsel %vm731, %v1349, %v1350
      %v1352 = vrot.slane %v1231, 1
      %v1353 = vsel %vm731, %v1350, %v1352
      %v1354 = vrot.slane %v1232, 1
      %v1355 = vrot.slane %v1233, 1
      %v1356 = vsel %vm731, %v1354, %v1355
      %v1357 = vrot.slane %v1234, 1
      %v1358 = vsel %vm731, %v1355, %v1357
      %v1359 = vrot.slane %v1235, 1
      %v1360 = vrot.slane %v1236, 1
      %v1361 = vsel %vm731, %v1359, %v1360
      %v1362 = vrot.slane %v1237, 1
      %v1363 = vsel %vm731, %v1360, %v1362
      %v1364 = vrot.slane %v1238, 1
      %v1365 = vrot.slane %v1239, 1
      %v1366 = vsel %vm731, %v1364, %v1365
      %v1367 = vrot.slane %v1240, 1
      %v1368 = vsel %vm731, %v1365, %v1367
      %v1401 = vadd.f32 %v1157, %v1291
      %v1402 = vadd.f32 %v1158, %v1293
      %v1403 = vadd.f32 %v1159, %v1296
      %v1404 = vadd.f32 %v1160, %v1298
      %v1405 = vadd.f32 %v1161, %v1301
      %v1406 = vadd.f32 %v1162, %v1303
      %v1407 = vadd.f32 %v1163, %v1306
      %v1408 = vadd.f32 %v1164, %v1308
      %v1409 = vadd.f32 %v1165, %v1311
      %v1410 = vadd.f32 %v1166, %v1313
      %v1411 = vadd.f32 %v1167, %v1316
      %v1412 = vadd.f32 %v1168, %v1318
      %v1413 = vadd.f32 %v1169, %v1321
      %v1414 = vadd.f32 %v1170, %v1323
      %v1415 = vadd.f32 %v1171, %v1326
      %v1416 = vadd.f32 %v1172, %v1328
      %v1417 = vadd.f32 %v1173, %v1331
      %v1418 = vadd.f32 %v1174, %v1333
      %v1419 = vadd.f32 %v1175, %v1336
      %v1420 = vadd.f32 %v1176, %v1338
      %v1421 = vadd.f32 %v1177, %v1341
      %v1422 = vadd.f32 %v1178, %v1343
      %v1423 = vadd.f32 %v1179, %v1346
      %v1424 = vadd.f32 %v1180, %v1348
      %v1425 = vadd.f32 %v1181, %v1351
      %v1426 = vadd.f32 %v1182, %v1353
      %v1427 = vadd.f32 %v1183, %v1356
      %v1428 = vadd.f32 %v1184, %v1358
      %v1429 = vadd.f32 %v1185, %v1361
      %v1430 = vadd.f32 %v1186, %v1363
      %v1431 = vadd.f32 %v1187, %v1366
      %v1432 = vadd.f32 %v1188, %v1368
      %v1433 = vlaneseq
      %v1434 = vshrl.u32 %v1433, 7
      %v1435 = vsub.s32 5, %v1434
      %v1436 = vrot.slane %v397, %v1435
      %v1437 = vmul.f32 %v404, %v1436
      %v1438 = vmul.f32 %v405, %v1436
      %v1439 = vmul.f32 %v406, %v1436
      %v1440 = vmul.f32 %v407, %v1436
      %v1441 = vmul.f32 %v408, %v1436
      %v1442 = vmul.f32 %v409, %v1436
      %v1443 = vmul.f32 %v410, %v1436
      %v1444 = vmul.f32 %v411, %v1436
      %v1445 = vmul.f32 %v412, %v1436
      %v1446 = vmul.f32 %v413, %v1436
      %v1447 = vmul.f32 %v414, %v1436
      %v1448 = vmul.f32 %v415, %v1436
      %v1449 = vmul.f32 %v416, %v1436
      %v1450 = vmul.f32 %v417, %v1436
      %v1451 = vmul.f32 %v418, %v1436
      %v1452 = vmul.f32 %v419, %v1436
      %v1453 = vmul.f32 %v420, %v1436
      %v1454 = vmul.f32 %v421, %v1436
      %v1455 = vmul.f32 %v422, %v1436
      %v1456 = vmul.f32 %v423, %v1436
      %v1457 = vmul.f32 %v424, %v1436
      %v1458 = vmul.f32 %v425, %v1436
      %v1459 = vmul.f32 %v426, %v1436
      %v1460 = vmul.f32 %v427, %v1436
      %v1461 = vmul.f32 %v428, %v1436
      %v1462 = vmul.f32 %v429, %v1436
      %v1463 = vmul.f32 %v430, %v1436
      %v1464 = vmul.f32 %v431, %v1436
      %v1465 = vmul.f32 %v432, %v1436
      %v1466 = vmul.f32 %v433, %v1436
      %v1467 = vmul.f32 %v434, %v1436
      %v1468 = vmul.f32 %v435, %v1436
      %v1469 = vmul.f32 %v436, %v1436
      %v1470 = vmul.f32 %v437, %v1436
      %v1471 = vmul.f32 %v438, %v1436
      %v1472 = vmul.f32 %v439, %v1436
      %v1473 = vmul.f32 %v440, %v1436
      %v1474 = vmul.f32 %v441, %v1436
      %v1475 = vmul.f32 %v442, %v1436
      %v1476 = vmul.f32 %v443, %v1436
      %v1477 = vmul.f32 %v444, %v1436
      %v1478 = vmul.f32 %v445, %v1436
      %v1479 = vmul.f32 %v446, %v1436
      %v1480 = vmul.f32 %v447, %v1436
      %v1481 = vmul.f32 %v448, %v1436
      %v1482 = vmul.f32 %v449, %v1436
      %v1483 = vmul.f32 %v450, %v1436
      %v1484 = vmul.f32 %v451, %v1436
      %v1533 = vrot.slane %v1437, 2
      %v1534 = vrot.slane %v1438, 2
      %v1535 = vsel %vm976, %v1533, %v1534
      %v1536 = vrot.slane %v1439, 2
      %v1537 = vsel %vm976, %v1534, %v1536
      %v1538 = vrot.slane %v1440, 2
      %v1539 = vrot.slane %v1441, 2
      %v1540 = vsel %vm976, %v1538, %v1539
      %v1541 = vrot.slane %v1442, 2
      %v1542 = vsel %vm976, %v1539, %v1541
      %v1543 = vrot.slane %v1443, 2
      %v1544 = vrot.slane %v1444, 2
      %v1545 = vsel %vm976, %v1543, %v1544
      %v1546 = vrot.slane %v1445, 2
      %v1547 = vsel %vm976, %v1544, %v1546
      %v1548 = vrot.slane %v1446, 2
      %v1549 = vrot.slane %v1447, 2
      %v1550 = vsel %vm976, %v1548, %v1549
      %v1551 = vrot.slane %v1448, 2
      %v1552 = vsel %vm976, %v1549, %v1551
      %v1553 = vrot.slane %v1449, 2
      %v1554 = vrot.slane %v1450, 2
      %v1555 = vsel %vm976, %v1553, %v1554
      %v1556 = vrot.slane %v1451, 2
      %v1557 = vsel %vm976, %v1554, %v1556
      %v1558 = vrot.slane %v1452, 2
      %v1559 = vrot.slane %v1453, 2
      %v1560 = vsel %vm976, %v1558, %v1559
      %v1561 = vrot.slane %v1454, 2
      %v1562 = vsel %vm976, %v1559, %v1561
      %v1563 = vrot.slane %v1455, 2
      %v1564 = vrot.slane %v1456, 2
      %v1565 = vsel %vm976, %v1563, %v1564
      %v1566 = vrot.slane %v1457, 2
      %v1567 = vsel %vm976, %v1564, %v1566
      %v1568 = vrot.slane %v1458, 2
      %v1569 = vrot.slane %v1459, 2
      %v1570 = vsel %vm976, %v1568, %v1569
      %v1571 = vrot.slane %v1460, 2
      %v1572 = vsel %vm976, %v1569, %v1571
      %v1573 = vrot.slane %v1461, 2
      %v1574 = vrot.slane %v1462, 2
      %v1575 = vsel %vm976, %v1573, %v1574
      %v1576 = vrot.slane %v1463, 2
      %v1577 = vsel %vm976, %v1574, %v1576
      %v1578 = vrot.slane %v1464, 2
      %v1579 = vrot.slane %v1465, 2
      %v1580 = vsel %vm976, %v1578, %v1579
      %v1581 = vrot.slane %v1466, 2
      %v1582 = vsel %vm976, %v1579, %v1581
      %v1583 = vrot.slane %v1467, 2
      %v1584 = vrot.slane %v1468, 2
      %v1585 = vsel %vm976, %v1583, %v1584
      %v1586 = vrot.slane %v1469, 2
      %v1587 = vsel %vm976, %v1584, %v1586
      %v1588 = vrot.slane %v1470, 2
      %v1589 = vrot.slane %v1471, 2
      %v1590 = vsel %vm976, %v1588, %v1589
      %v1591 = vrot.slane %v1472, 2
      %v1592 = vsel %vm976, %v1589, %v1591
      %v1593 = vrot.slane %v1473, 2
      %v1594 = vrot.slane %v1474, 2
      %v1595 = vsel %vm976, %v1593, %v1594
      %v1596 = vrot.slane %v1475, 2
      %v1597 = vsel %vm976, %v1594, %v1596
      %v1598 = vrot.slane %v1476, 2
      %v1599 = vrot.slane %v1477, 2
      %v1600 = vsel %vm976, %v1598, %v1599
      %v1601 = vrot.slane %v1478, 2
      %v1602 = vsel %vm976, %v1599, %v1601
      %v1603 = vrot.slane %v1479, 2
      %v1604 = vrot.slane %v1480, 2
      %v1605 = vsel %vm976, %v1603, %v1604
      %v1606 = vrot.slane %v1481, 2
      %v1607 = vsel %vm976, %v1604, %v1606
      %v1608 = vrot.slane %v1482, 2
      %v1609 = vrot.slane %v1483, 2
      %v1610 = vsel %vm976, %v1608, %v1609
      %v1611 = vrot.slane %v1484, 2
      %v1612 = vsel %vm976, %v1609, %v1611
      %v1645 = vadd.f32 %v1401, %v1535
      %v1646 = vadd.f32 %v1402, %v1537
      %v1647 = vadd.f32 %v1403, %v1540
      %v1648 = vadd.f32 %v1404, %v1542
      %v1649 = vadd.f32 %v1405, %v1545
      %v1650 = vadd.f32 %v1406, %v1547
      %v1651 = vadd.f32 %v1407, %v1550
      %v1652 = vadd.f32 %v1408, %v1552
      %v1653 = vadd.f32 %v1409, %v1555
      %v1654 = vadd.f32 %v1410, %v1557
      %v1655 = vadd.f32 %v1411, %v1560
      %v1656 = vadd.f32 %v1412, %v1562
      %v1657 = vadd.f32 %v1413, %v1565
      %v1658 = vadd.f32 %v1414, %v1567
      %v1659 = vadd.f32 %v1415, %v1570
      %v1660 = vadd.f32 %v1416, %v1572
      %v1661 = vadd.f32 %v1417, %v1575
      %v1662 = vadd.f32 %v1418, %v1577
      %v1663 = vadd.f32 %v1419, %v1580
      %v1664 = vadd.f32 %v1420, %v1582
      %v1665 = vadd.f32 %v1421, %v1585
      %v1666 = vadd.f32 %v1422, %v1587
      %v1667 = vadd.f32 %v1423, %v1590
      %v1668 = vadd.f32 %v1424, %v1592
      %v1669 = vadd.f32 %v1425, %v1595
      %v1670 = vadd.f32 %v1426, %v1597
      %v1671 = vadd.f32 %v1427, %v1600
      %v1672 = vadd.f32 %v1428, %v1602
      %v1673 = vadd.f32 %v1429, %v1605
      %v1674 = vadd.f32 %v1430, %v1607
      %v1675 = vadd.f32 %v1431, %v1610
      %v1676 = vadd.f32 %v1432, %v1612
      %v1677 = vlaneseq
      %v1678 = vshrl.u32 %v1677, 7
      %v1679 = vsub.s32 6, %v1678
      %v1680 = vrot.slane %v397, %v1679
      %v1681 = vmul.f32 %v407, %v1680
      %v1682 = vmul.f32 %v408, %v1680
      %v1683 = vmul.f32 %v410, %v1680
      %v1684 = vmul.f32 %v411, %v1680
      %v1685 = vmul.f32 %v413, %v1680
      %v1686 = vmul.f32 %v414, %v1680
      %v1687 = vmul.f32 %v416, %v1680
      %v1688 = vmul.f32 %v417, %v1680
      %v1689 = vmul.f32 %v419, %v1680
      %v1690 = vmul.f32 %v420, %v1680
      %v1691 = vmul.f32 %v422, %v1680
      %v1692 = vmul.f32 %v423, %v1680
      %v1693 = vmul.f32 %v425, %v1680
      %v1694 = vmul.f32 %v426, %v1680
      %v1695 = vmul.f32 %v428, %v1680
      %v1696 = vmul.f32 %v429, %v1680
      %v1697 = vmul.f32 %v431, %v1680
      %v1698 = vmul.f32 %v432, %v1680
      %v1699 = vmul.f32 %v434, %v1680
      %v1700 = vmul.f32 %v435, %v1680
      %v1701 = vmul.f32 %v437, %v1680
      %v1702 = vmul.f32 %v438, %v1680
      %v1703 = vmul.f32 %v440, %v1680
      %v1704 = vmul.f32 %v441, %v1680
      %v1705 = vmul.f32 %v443, %v1680
      %v1706 = vmul.f32 %v444, %v1680
      %v1707 = vmul.f32 %v446, %v1680
      %v1708 = vmul.f32 %v447, %v1680
      %v1709 = vmul.f32 %v449, %v1680
      %v1710 = vmul.f32 %v450, %v1680
      %v1711 = vmul.f32 %v452, %v1680
      %v1712 = vmul.f32 %v453, %v1680
      %v1713 = vadd.f32 %v1645, %v1681
      %v1714 = vadd.f32 %v1646, %v1682
      %v1715 = vadd.f32 %v1647, %v1683
      %v1716 = vadd.f32 %v1648, %v1684
      %v1717 = vadd.f32 %v1649, %v1685
      %v1718 = vadd.f32 %v1650, %v1686
      %v1719 = vadd.f32 %v1651, %v1687
      %v1720 = vadd.f32 %v1652, %v1688
      %v1721 = vadd.f32 %v1653, %v1689
      %v1722 = vadd.f32 %v1654, %v1690
      %v1723 = vadd.f32 %v1655, %v1691
      %v1724 = vadd.f32 %v1656, %v1692
      %v1725 = vadd.f32 %v1657, %v1693
      %v1726 = vadd.f32 %v1658, %v1694
      %v1727 = vadd.f32 %v1659, %v1695
      %v1728 = vadd.f32 %v1660, %v1696
      %v1729 = vadd.f32 %v1661, %v1697
      %v1730 = vadd.f32 %v1662, %v1698
      %v1731 = vadd.f32 %v1663, %v1699
      %v1732 = vadd.f32 %v1664, %v1700
      %v1733 = vadd.f32 %v1665, %v1701
      %v1734 = vadd.f32 %v1666, %v1702
      %v1735 = vadd.f32 %v1667, %v1703
      %v1736 = vadd.f32 %v1668, %v1704
      %v1737 = vadd.f32 %v1669, %v1705
      %v1738 = vadd.f32 %v1670, %v1706
      %v1739 = vadd.f32 %v1671, %v1707
      %v1740 = vadd.f32 %v1672, %v1708
      %v1741 = vadd.f32 %v1673, %v1709
      %v1742 = vadd.f32 %v1674, %v1710
      %v1743 = vadd.f32 %v1675, %v1711
      %v1744 = vadd.f32 %v1676, %v1712
      %v1745 = vlaneseq
      %v1746 = vshrl.u32 %v1745, 7
      %v1747 = vsub.s32 7, %v1746
      %v1748 = vrot.slane %v397, %v1747
      %v1749 = vmul.f32 %v407, %v1748
      %v1750 = vmul.f32 %v408, %v1748
      %v1751 = vmul.f32 %v409, %v1748
      %v1752 = vmul.f32 %v410, %v1748
      %v1753 = vmul.f32 %v411, %v1748
      %v1754 = vmul.f32 %v412, %v1748
      %v1755 = vmul.f32 %v413, %v1748
      %v1756 = vmul.f32 %v414, %v1748
      %v1757 = vmul.f32 %v415, %v1748
      %v1758 = vmul.f32 %v416, %v1748
      %v1759 = vmul.f32 %v417, %v1748
      %v1760 = vmul.f32 %v418, %v1748
      %v1761 = vmul.f32 %v419, %v1748
      %v1762 = vmul.f32 %v420, %v1748
      %v1763 = vmul.f32 %v421, %v1748
      %v1764 = vmul.f32 %v422, %v1748
      %v1765 = vmul.f32 %v423, %v1748
      %v1766 = vmul.f32 %v424, %v1748
      %v1767 = vmul.f32 %v425, %v1748
      %v1768 = vmul.f32 %v426, %v1748
      %v1769 = vmul.f32 %v427, %v1748
      %v1770 = vmul.f32 %v428, %v1748
      %v1771 = vmul.f32 %v429, %v1748
      %v1772 = vmul.f32 %v430, %v1748
      %v1773 = vmul.f32 %v431, %v1748
      %v1774 = vmul.f32 %v432, %v1748
      %v1775 = vmul.f32 %v433, %v1748
      %v1776 = vmul.f32 %v434, %v1748
      %v1777 = vmul.f32 %v435, %v1748
      %v1778 = vmul.f32 %v436, %v1748
      %v1779 = vmul.f32 %v437, %v1748
      %v1780 = vmul.f32 %v438, %v1748
      %v1781 = vmul.f32 %v439, %v1748
      %v1782 = vmul.f32 %v440, %v1748
      %v1783 = vmul.f32 %v441, %v1748
      %v1784 = vmul.f32 %v442, %v1748
      %v1785 = vmul.f32 %v443, %v1748
      %v1786 = vmul.f32 %v444, %v1748
      %v1787 = vmul.f32 %v445, %v1748
      %v1788 = vmul.f32 %v446, %v1748
      %v1789 = vmul.f32 %v447, %v1748
      %v1790 = vmul.f32 %v448, %v1748
      %v1791 = vmul.f32 %v449, %v1748
      %v1792 = vmul.f32 %v450, %v1748
      %v1793 = vmul.f32 %v451, %v1748
      %v1794 = vmul.f32 %v452, %v1748
      %v1795 = vmul.f32 %v453, %v1748
      %v1796 = vmul.f32 %v454, %v1748
      %v1845 = vrot.slane %v1749, 1
      %v1846 = vrot.slane %v1750, 1
      %v1847 = vsel %vm731, %v1845, %v1846
      %v1848 = vrot.slane %v1751, 1
      %v1849 = vsel %vm731, %v1846, %v1848
      %v1850 = vrot.slane %v1752, 1
      %v1851 = vrot.slane %v1753, 1
      %v1852 = vsel %vm731, %v1850, %v1851
      %v1853 = vrot.slane %v1754, 1
      %v1854 = vsel %vm731, %v1851, %v1853
      %v1855 = vrot.slane %v1755, 1
      %v1856 = vrot.slane %v1756, 1
      %v1857 = vsel %vm731, %v1855, %v1856
      %v1858 = vrot.slane %v1757, 1
      %v1859 = vsel %vm731, %v1856, %v1858
      %v1860 = vrot.slane %v1758, 1
      %v1861 = vrot.slane %v1759, 1
      %v1862 = vsel %vm731, %v1860, %v1861
      %v1863 = vrot.slane %v1760, 1
      %v1864 = vsel %vm731, %v1861, %v1863
      %v1865 = vrot.slane %v1761, 1
      %v1866 = vrot.slane %v1762, 1
      %v1867 = vsel %vm731, %v1865, %v1866
      %v1868 = vrot.slane %v1763, 1
      %v1869 = vsel %vm731, %v1866, %v1868
      %v1870 = vrot.slane %v1764, 1
      %v1871 = vrot.slane %v1765, 1
      %v1872 = vsel %vm731, %v1870, %v1871
      %v1873 = vrot.slane %v1766, 1
      %v1874 = vsel %vm731, %v1871, %v1873
      %v1875 = vrot.slane %v1767, 1
      %v1876 = vrot.slane %v1768, 1
      %v1877 = vsel %vm731, %v1875, %v1876
      %v1878 = vrot.slane %v1769, 1
      %v1879 = vsel %vm731, %v1876, %v1878
      %v1880 = vrot.slane %v1770, 1
      %v1881 = vrot.slane %v1771, 1
      %v1882 = vsel %vm731, %v1880, %v1881
      %v1883 = vrot.slane %v1772, 1
      %v1884 = vsel %vm731, %v1881, %v1883
      %v1885 = vrot.slane %v1773, 1
      %v1886 = vrot.slane %v1774, 1
      %v1887 = vsel %vm731, %v1885, %v1886
      %v1888 = vrot.slane %v1775, 1
      %v1889 = vsel %vm731, %v1886, %v1888
      %v1890 = vrot.slane %v1776, 1
      %v1891 = vrot.slane %v1777, 1
      %v1892 = vsel %vm731, %v1890, %v1891
      %v1893 = vrot.slane %v1778, 1
      %v1894 = vsel %vm731, %v1891, %v1893
      %v1895 = vrot.slane %v1779, 1
      %v1896 = vrot.slane %v1780, 1
      %v1897 = vsel %vm731, %v1895, %v1896
      %v1898 = vrot.slane %v1781, 1
      %v1899 = vsel %vm731, %v1896, %v1898
      %v1900 = vrot.slane %v1782, 1
      %v1901 = vrot.slane %v1783, 1
      %v1902 = vsel %vm731, %v1900, %v1901
      %v1903 = vrot.slane %v1784, 1
      %v1904 = vsel %vm731, %v1901, %v1903
      %v1905 = vrot.slane %v1785, 1
      %v1906 = vrot.slane %v1786, 1
      %v1907 = vsel %vm731, %v1905, %v1906
      %v1908 = vrot.slane %v1787, 1
      %v1909 = vsel %vm731, %v1906, %v1908
      %v1910 = vrot.slane %v1788, 1
      %v1911 = vrot.slane %v1789, 1
      %v1912 = vsel %vm731, %v1910, %v1911
      %v1913 = vrot.slane %v1790, 1
      %v1914 = vsel %vm731, %v1911, %v1913
      %v1915 = vrot.slane %v1791, 1
      %v1916 = vrot.slane %v1792, 1
      %v1917 = vsel %vm731, %v1915, %v1916
      %v1918 = vrot.slane %v1793, 1
      %v1919 = vsel %vm731, %v1916, %v1918
      %v1920 = vrot.slane %v1794, 1
      %v1921 = vrot.slane %v1795, 1
      %v1922 = vsel %vm731, %v1920, %v1921
      %v1923 = vrot.slane %v1796, 1
      %v1924 = vsel %vm731, %v1921, %v1923
      %v1957 = vadd.f32 %v1713, %v1847
      %v1958 = vadd.f32 %v1714, %v1849
      %v1959 = vadd.f32 %v1715, %v1852
      %v1960 = vadd.f32 %v1716, %v1854
      %v1961 = vadd.f32 %v1717, %v1857
      %v1962 = vadd.f32 %v1718, %v1859
      %v1963 = vadd.f32 %v1719, %v1862
      %v1964 = vadd.f32 %v1720, %v1864
      %v1965 = vadd.f32 %v1721, %v1867
      %v1966 = vadd.f32 %v1722, %v1869
      %v1967 = vadd.f32 %v1723, %v1872
      %v1968 = vadd.f32 %v1724, %v1874
      %v1969 = vadd.f32 %v1725, %v1877
      %v1970 = vadd.f32 %v1726, %v1879
      %v1971 = vadd.f32 %v1727, %v1882
      %v1972 = vadd.f32 %v1728, %v1884
      %v1973 = vadd.f32 %v1729, %v1887
      %v1974 = vadd.f32 %v1730, %v1889
      %v1975 = vadd.f32 %v1731, %v1892
      %v1976 = vadd.f32 %v1732, %v1894
      %v1977 = vadd.f32 %v1733, %v1897
      %v1978 = vadd.f32 %v1734, %v1899
      %v1979 = vadd.f32 %v1735, %v1902
      %v1980 = vadd.f32 %v1736, %v1904
      %v1981 = vadd.f32 %v1737, %v1907
      %v1982 = vadd.f32 %v1738, %v1909
      %v1983 = vadd.f32 %v1739, %v1912
      %v1984 = vadd.f32 %v1740, %v1914
      %v1985 = vadd.f32 %v1741, %v1917
      %v1986 = vadd.f32 %v1742, %v1919
      %v1987 = vadd.f32 %v1743, %v1922
      %v1988 = vadd.f32 %v1744, %v1924
      %v1989 = vlaneseq
      %v1990 = vshrl.u32 %v1989, 7
      %v1991 = vsub.s32 0, %v1990
      %v1992 = vrot.slane %v398, %v1991
      %v1993 = vmul.f32 %v407, %v1992
      %v1994 = vmul.f32 %v408, %v1992
      %v1995 = vmul.f32 %v409, %v1992
      %v1996 = vmul.f32 %v410, %v1992
      %v1997 = vmul.f32 %v411, %v1992
      %v1998 = vmul.f32 %v412, %v1992
      %v1999 = vmul.f32 %v413, %v1992
      %v2000 = vmul.f32 %v414, %v1992
      %v2001 = vmul.f32 %v415, %v1992
      %v2002 = vmul.f32 %v416, %v1992
      %v2003 = vmul.f32 %v417, %v1992
      %v2004 = vmul.f32 %v418, %v1992
      %v2005 = vmul.f32 %v419, %v1992
      %v2006 = vmul.f32 %v420, %v1992
      %v2007 = vmul.f32 %v421, %v1992
      %v2008 = vmul.f32 %v422, %v1992
      %v2009 = vmul.f32 %v423, %v1992
      %v2010 = vmul.f32 %v424, %v1992
      %v2011 = vmul.f32 %v425, %v1992
      %v2012 = vmul.f32 %v426, %v1992
      %v2013 = vmul.f32 %v427, %v1992
      %v2014 = vmul.f32 %v428, %v1992
      %v2015 = vmul.f32 %v429, %v1992
      %v2016 = vmul.f32 %v430, %v1992
      %v2017 = vmul.f32 %v431, %v1992
      %v2018 = vmul.f32 %v432, %v1992
      %v2019 = vmul.f32 %v433, %v1992
      %v2020 = vmul.f32 %v434, %v1992
      %v2021 = vmul.f32 %v435, %v1992
      %v2022 = vmul.f32 %v436, %v1992
      %v2023 = vmul.f32 %v437, %v1992
      %v2024 = vmul.f32 %v438, %v1992
      %v2025 = vmul.f32 %v439, %v1992
      %v2026 = vmul.f32 %v440, %v1992
      %v2027 = vmul.f32 %v441, %v1992
      %v2028 = vmul.f32 %v442, %v1992
      %v2029 = vmul.f32 %v443, %v1992
      %v2030 = vmul.f32 %v444, %v1992
      %v2031 = vmul.f32 %v445, %v1992
      %v2032 = vmul.f32 %v446, %v1992
      %v2033 = vmul.f32 %v447, %v1992
      %v2034 = vmul.f32 %v448, %v1992
      %v2035 = vmul.f32 %v449, %v1992
      %v2036 = vmul.f32 %v450, %v1992
      %v2037 = vmul.f32 %v451, %v1992
      %v2038 = vmul.f32 %v452, %v1992
      %v2039 = vmul.f32 %v453, %v1992
      %v2040 = vmul.f32 %v454, %v1992
      %v2089 = vrot.slane %v1993, 2
      %v2090 = vrot.slane %v1994, 2
      %v2091 = vsel %vm976, %v2089, %v2090
      %v2092 = vrot.slane %v1995, 2
      %v2093 = vsel %vm976, %v2090, %v2092
      %v2094 = vrot.slane %v1996, 2
      %v2095 = vrot.slane %v1997, 2
      %v2096 = vsel %vm976, %v2094, %v2095
      %v2097 = vrot.slane %v1998, 2
      %v2098 = vsel %vm976, %v2095, %v2097
      %v2099 = vrot.slane %v1999, 2
      %v2100 = vrot.slane %v2000, 2
      %v2101 = vsel %vm976, %v2099, %v2100
      %v2102 = vrot.slane %v2001, 2
      %v2103 = vsel %vm976, %v2100, %v2102
      %v2104 = vrot.slane %v2002, 2
      %v2105 = vrot.slane %v2003, 2
      %v2106 = vsel %vm976, %v2104, %v2105
      %v2107 = vrot.slane %v2004, 2
      %v2108 = vsel %vm976, %v2105, %v2107
      %v2109 = vrot.slane %v2005, 2
      %v2110 = vrot.slane %v2006, 2
      %v2111 = vsel %vm976, %v2109, %v2110
      %v2112 = vrot.slane %v2007, 2
      %v2113 = vsel %vm976, %v2110, %v2112
      %v2114 = vrot.slane %v2008, 2
      %v2115 = vrot.slane %v2009, 2
      %v2116 = vsel %vm976, %v2114, %v2115
      %v2117 = vrot.slane %v2010, 2
      %v2118 = vsel %vm976, %v2115, %v2117
      %v2119 = vrot.slane %v2011, 2
      %v2120 = vrot.slane %v2012, 2
      %v2121 = vsel %vm976, %v2119, %v2120
      %v2122 = vrot.slane %v2013, 2
      %v2123 = vsel %vm976, %v2120, %v2122
      %v2124 = vrot.slane %v2014, 2
      %v2125 = vrot.slane %v2015, 2
      %v2126 = vsel %vm976, %v2124, %v2125
      %v2127 = vrot.slane %v2016, 2
      %v2128 = vsel %vm976, %v2125, %v2127
      %v2129 = vrot.slane %v2017, 2
      %v2130 = vrot.slane %v2018, 2
      %v2131 = vsel %vm976, %v2129, %v2130
      %v2132 = vrot.slane %v2019, 2
      %v2133 = vsel %vm976, %v2130, %v2132
      %v2134 = vrot.slane %v2020, 2
      %v2135 = vrot.slane %v2021, 2
      %v2136 = vsel %vm976, %v2134, %v2135
      %v2137 = vrot.slane %v2022, 2
      %v2138 = vsel %vm976, %v2135, %v2137
      %v2139 = vrot.slane %v2023, 2
      %v2140 = vrot.slane %v2024, 2
      %v2141 = vsel %vm976, %v2139, %v2140
      %v2142 = vrot.slane %v2025, 2
      %v2143 = vsel %vm976, %v2140, %v2142
      %v2144 = vrot.slane %v2026, 2
      %v2145 = vrot.slane %v2027, 2
      %v2146 = vsel %vm976, %v2144, %v2145
      %v2147 = vrot.slane %v2028, 2
      %v2148 = vsel %vm976, %v2145, %v2147
      %v2149 = vrot.slane %v2029, 2
      %v2150 = vrot.slane %v2030, 2
      %v2151 = vsel %vm976, %v2149, %v2150
      %v2152 = vrot.slane %v2031, 2
      %v2153 = vsel %vm976, %v2150, %v2152
      %v2154 = vrot.slane %v2032, 2
      %v2155 = vrot.slane %v2033, 2
      %v2156 = vsel %vm976, %v2154, %v2155
      %v2157 = vrot.slane %v2034, 2
      %v2158 = vsel %vm976, %v2155, %v2157
      %v2159 = vrot.slane %v2035, 2
      %v2160 = vrot.slane %v2036, 2
      %v2161 = vsel %vm976, %v2159, %v2160
      %v2162 = vrot.slane %v2037, 2
      %v2163 = vsel %vm976, %v2160, %v2162
      %v2164 = vrot.slane %v2038, 2
      %v2165 = vrot.slane %v2039, 2
      %v2166 = vsel %vm976, %v2164, %v2165
      %v2167 = vrot.slane %v2040, 2
      %v2168 = vsel %vm976, %v2165, %v2167
      %v2201 = vadd.f32 %v1957, %v2091
      %v2202 = vadd.f32 %v1958, %v2093
      %v2203 = vadd.f32 %v1959, %v2096
      %v2204 = vadd.f32 %v1960, %v2098
      %v2205 = vadd.f32 %v1961, %v2101
      %v2206 = vadd.f32 %v1962, %v2103
      %v2207 = vadd.f32 %v1963, %v2106
      %v2208 = vadd.f32 %v1964, %v2108
      %v2209 = vadd.f32 %v1965, %v2111
      %v2210 = vadd.f32 %v1966, %v2113
      %v2211 = vadd.f32 %v1967, %v2116
      %v2212 = vadd.f32 %v1968, %v2118
      %v2213 = vadd.f32 %v1969, %v2121
      %v2214 = vadd.f32 %v1970, %v2123
      %v2215 = vadd.f32 %v1971, %v2126
      %v2216 = vadd.f32 %v1972, %v2128
      %v2217 = vadd.f32 %v1973, %v2131
      %v2218 = vadd.f32 %v1974, %v2133
      %v2219 = vadd.f32 %v1975, %v2136
      %v2220 = vadd.f32 %v1976, %v2138
      %v2221 = vadd.f32 %v1977, %v2141
      %v2222 = vadd.f32 %v1978, %v2143
      %v2223 = vadd.f32 %v1979, %v2146
      %v2224 = vadd.f32 %v1980, %v2148
      %v2225 = vadd.f32 %v1981, %v2151
      %v2226 = vadd.f32 %v1982, %v2153
      %v2227 = vadd.f32 %v1983, %v2156
      %v2228 = vadd.f32 %v1984, %v2158
      %v2229 = vadd.f32 %v1985, %v2161
      %v2230 = vadd.f32 %v1986, %v2163
      %v2231 = vadd.f32 %v1987, %v2166
      %v2232 = vadd.f32 %v1988, %v2168
      %v2233 = vlaneseq
      %v2234 = vshrl.u32 %v2233, 7
      %v2235 = vsub.s32 1, %v2234
      %v2236 = vrot.slane %v398, %v2235
      %v2237 = vmul.f32 %v455, %v2236
      %v2238 = vmul.f32 %v456, %v2236
      %v2239 = vmul.f32 %v458, %v2236
      %v2240 = vmul.f32 %v459, %v2236
      %v2241 = vmul.f32 %v461, %v2236
      %v2242 = vmul.f32 %v462, %v2236
      %v2243 = vmul.f32 %v464, %v2236
      %v2244 = vmul.f32 %v465, %v2236
      %v2245 = vmul.f32 %v467, %v2236
      %v2246 = vmul.f32 %v468, %v2236
      %v2247 = vmul.f32 %v470, %v2236
      %v2248 = vmul.f32 %v471, %v2236
      %v2249 = vmul.f32 %v473, %v2236
      %v2250 = vmul.f32 %v474, %v2236
      %v2251 = vmul.f32 %v476, %v2236
      %v2252 = vmul.f32 %v477, %v2236
      %v2253 = vmul.f32 %v479, %v2236
      %v2254 = vmul.f32 %v480, %v2236
      %v2255 = vmul.f32 %v482, %v2236
      %v2256 = vmul.f32 %v483, %v2236
      %v2257 = vmul.f32 %v485, %v2236
      %v2258 = vmul.f32 %v486, %v2236
      %v2259 = vmul.f32 %v488, %v2236
      %v2260 = vmul.f32 %v489, %v2236
      %v2261 = vmul.f32 %v491, %v2236
      %v2262 = vmul.f32 %v492, %v2236
      %v2263 = vmul.f32 %v494, %v2236
      %v2264 = vmul.f32 %v495, %v2236
      %v2265 = vmul.f32 %v497, %v2236
      %v2266 = vmul.f32 %v498, %v2236
      %v2267 = vmul.f32 %v500, %v2236
      %v2268 = vmul.f32 %v501, %v2236
      %v2269 = vadd.f32 %v2201, %v2237
      %v2270 = vadd.f32 %v2202, %v2238
      %v2271 = vadd.f32 %v2203, %v2239
      %v2272 = vadd.f32 %v2204, %v2240
      %v2273 = vadd.f32 %v2205, %v2241
      %v2274 = vadd.f32 %v2206, %v2242
      %v2275 = vadd.f32 %v2207, %v2243
      %v2276 = vadd.f32 %v2208, %v2244
      %v2277 = vadd.f32 %v2209, %v2245
      %v2278 = vadd.f32 %v2210, %v2246
      %v2279 = vadd.f32 %v2211, %v2247
      %v2280 = vadd.f32 %v2212, %v2248
      %v2281 = vadd.f32 %v2213, %v2249
      %v2282 = vadd.f32 %v2214, %v2250
      %v2283 = vadd.f32 %v2215, %v2251
      %v2284 = vadd.f32 %v2216, %v2252
      %v2285 = vadd.f32 %v2217, %v2253
      %v2286 = vadd.f32 %v2218, %v2254
      %v2287 = vadd.f32 %v2219, %v2255
      %v2288 = vadd.f32 %v2220, %v2256
      %v2289 = vadd.f32 %v2221, %v2257
      %v2290 = vadd.f32 %v2222, %v2258
      %v2291 = vadd.f32 %v2223, %v2259
      %v2292 = vadd.f32 %v2224, %v2260
      %v2293 = vadd.f32 %v2225, %v2261
      %v2294 = vadd.f32 %v2226, %v2262
      %v2295 = vadd.f32 %v2227, %v2263
      %v2296 = vadd.f32 %v2228, %v2264
      %v2297 = vadd.f32 %v2229, %v2265
      %v2298 = vadd.f32 %v2230, %v2266
      %v2299 = vadd.f32 %v2231, %v2267
      %v2300 = vadd.f32 %v2232, %v2268
      %v2301 = vlaneseq
      %v2302 = vshrl.u32 %v2301, 7
      %v2303 = vsub.s32 2, %v2302
      %v2304 = vrot.slane %v398, %v2303
      %v2305 = vmul.f32 %v455, %v2304
      %v2306 = vmul.f32 %v456, %v2304
      %v2307 = vmul.f32 %v457, %v2304
      %v2308 = vmul.f32 %v458, %v2304
      %v2309 = vmul.f32 %v459, %v2304
      %v2310 = vmul.f32 %v460, %v2304
      %v2311 = vmul.f32 %v461, %v2304
      %v2312 = vmul.f32 %v462, %v2304
      %v2313 = vmul.f32 %v463, %v2304
      %v2314 = vmul.f32 %v464, %v2304
      %v2315 = vmul.f32 %v465, %v2304
      %v2316 = vmul.f32 %v466, %v2304
      %v2317 = vmul.f32 %v467, %v2304
      %v2318 = vmul.f32 %v468, %v2304
      %v2319 = vmul.f32 %v469, %v2304
      %v2320 = vmul.f32 %v470, %v2304
      %v2321 = vmul.f32 %v471, %v2304
      %v2322 = vmul.f32 %v472, %v2304
      %v2323 = vmul.f32 %v473, %v2304
      %v2324 = vmul.f32 %v474, %v2304
      %v2325 = vmul.f32 %v475, %v2304
      %v2326 = vmul.f32 %v476, %v2304
      %v2327 = vmul.f32 %v477, %v2304
      %v2328 = vmul.f32 %v478, %v2304
      %v2329 = vmul.f32 %v479, %v2304
      %v2330 = vmul.f32 %v480, %v2304
      %v2331 = vmul.f32 %v481, %v2304
      %v2332 = vmul.f32 %v482, %v2304
      %v2333 = vmul.f32 %v483, %v2304
      %v2334 = vmul.f32 %v484, %v2304
      %v2335 = vmul.f32 %v485, %v2304
      %v2336 = vmul.f32 %v486, %v2304
      %v2337 = vmul.f32 %v487, %v2304
      %v2338 = vmul.f32 %v488, %v2304
      %v2339 = vmul.f32 %v489, %v2304
      %v2340 = vmul.f32 %v490, %v2304
      %v2341 = vmul.f32 %v491, %v2304
      %v2342 = vmul.f32 %v492, %v2304
      %v2343 = vmul.f32 %v493, %v2304
      %v2344 = vmul.f32 %v494, %v2304
      %v2345 = vmul.f32 %v495, %v2304
      %v2346 = vmul.f32 %v496, %v2304
      %v2347 = vmul.f32 %v497, %v2304
      %v2348 = vmul.f32 %v498, %v2304
      %v2349 = vmul.f32 %v499, %v2304
      %v2350 = vmul.f32 %v500, %v2304
      %v2351 = vmul.f32 %v501, %v2304
      %v2352 = vmul.f32 %v502, %v2304
      %v2401 = vrot.slane %v2305, 1
      %v2402 = vrot.slane %v2306, 1
      %v2403 = vsel %vm731, %v2401, %v2402
      %v2404 = vrot.slane %v2307, 1
      %v2405 = vsel %vm731, %v2402, %v2404
      %v2406 = vrot.slane %v2308, 1
      %v2407 = vrot.slane %v2309, 1
      %v2408 = vsel %vm731, %v2406, %v2407
      %v2409 = vrot.slane %v2310, 1
      %v2410 = vsel %vm731, %v2407, %v2409
      %v2411 = vrot.slane %v2311, 1
      %v2412 = vrot.slane %v2312, 1
      %v2413 = vsel %vm731, %v2411, %v2412
      %v2414 = vrot.slane %v2313, 1
      %v2415 = vsel %vm731, %v2412, %v2414
      %v2416 = vrot.slane %v2314, 1
      %v2417 = vrot.slane %v2315, 1
      %v2418 = vsel %vm731, %v2416, %v2417
      %v2419 = vrot.slane %v2316, 1
      %v2420 = vsel %vm731, %v2417, %v2419
      %v2421 = vrot.slane %v2317, 1
      %v2422 = vrot.slane %v2318, 1
      %v2423 = vsel %vm731, %v2421, %v2422
      %v2424 = vrot.slane %v2319, 1
      %v2425 = vsel %vm731, %v2422, %v2424
      %v2426 = vrot.slane %v2320, 1
      %v2427 = vrot.slane %v2321, 1
      %v2428 = vsel %vm731, %v2426, %v2427
      %v2429 = vrot.slane %v2322, 1
      %v2430 = vsel %vm731, %v2427, %v2429
      %v2431 = vrot.slane %v2323, 1
      %v2432 = vrot.slane %v2324, 1
      %v2433 = vsel %vm731, %v2431, %v2432
      %v2434 = vrot.slane %v2325, 1
      %v2435 = vsel %vm731, %v2432, %v2434
      %v2436 = vrot.slane %v2326, 1
      %v2437 = vrot.slane %v2327, 1
      %v2438 = vsel %vm731, %v2436, %v2437
      %v2439 = vrot.slane %v2328, 1
      %v2440 = vsel %vm731, %v2437, %v2439
      %v2441 = vrot.slane %v2329, 1
      %v2442 = vrot.slane %v2330, 1
      %v2443 = vsel %vm731, %v2441, %v2442
      %v2444 = vrot.slane %v2331, 1
      %v2445 = vsel %vm731, %v2442, %v2444
      %v2446 = vrot.slane %v2332, 1
      %v2447 = vrot.slane %v2333, 1
      %v2448 = vsel %vm731, %v2446, %v2447
      %v2449 = vrot.slane %v2334, 1
      %v2450 = vsel %vm731, %v2447, %v2449
      %v2451 = vrot.slane %v2335, 1
      %v2452 = vrot.slane %v2336, 1
      %v2453 = vsel %vm731, %v2451, %v2452
      %v2454 = vrot.slane %v2337, 1
      %v2455 = vsel %vm731, %v2452, %v2454
      %v2456 = vrot.slane %v2338, 1
      %v2457 = vrot.slane %v2339, 1
      %v2458 = vsel %vm731, %v2456, %v2457
      %v2459 = vrot.slane %v2340, 1
      %v2460 = vsel %vm731, %v2457, %v2459
      %v2461 = vrot.slane %v2341, 1
      %v2462 = vrot.slane %v2342, 1
      %v2463 = vsel %vm731, %v2461, %v2462
      %v2464 = vrot.slane %v2343, 1
      %v2465 = vsel %vm731, %v2462, %v2464
      %v2466 = vrot.slane %v2344, 1
      %v2467 = vrot.slane %v2345, 1
      %v2468 = vsel %vm731, %v2466, %v2467
      %v2469 = vrot.slane %v2346, 1
      %v2470 = vsel %vm731, %v2467, %v2469
      %v2471 = vrot.slane %v2347, 1
      %v2472 = vrot.slane %v2348, 1
      %v2473 = vsel %vm731, %v2471, %v2472
      %v2474 = vrot.slane %v2349, 1
      %v2475 = vsel %vm731, %v2472, %v2474
      %v2476 = vrot.slane %v2350, 1
      %v2477 = vrot.slane %v2351, 1
      %v2478 = vsel %vm731, %v2476, %v2477
      %v2479 = vrot.slane %v2352, 1
      %v2480 = vsel %vm731, %v2477, %v2479
      %v2513 = vadd.f32 %v2269, %v2403
      %v2514 = vadd.f32 %v2270, %v2405
      %v2515 = vadd.f32 %v2271, %v2408
      %v2516 = vadd.f32 %v2272, %v2410
      %v2517 = vadd.f32 %v2273, %v2413
      %v2518 = vadd.f32 %v2274, %v2415
      %v2519 = vadd.f32 %v2275, %v2418
      %v2520 = vadd.f32 %v2276, %v2420
      %v2521 = vadd.f32 %v2277, %v2423
      %v2522 = vadd.f32 %v2278, %v2425
      %v2523 = vadd.f32 %v2279, %v2428
      %v2524 = vadd.f32 %v2280, %v2430
      %v2525 = vadd.f32 %v2281, %v2433
      %v2526 = vadd.f32 %v2282, %v2435
      %v2527 = vadd.f32 %v2283, %v2438
      %v2528 = vadd.f32 %v2284, %v2440
      %v2529 = vadd.f32 %v2285, %v2443
      %v2530 = vadd.f32 %v2286, %v2445
      %v2531 = vadd.f32 %v2287, %v2448
      %v2532 = vadd.f32 %v2288, %v2450
      %v2533 = vadd.f32 %v2289, %v2453
      %v2534 = vadd.f32 %v2290, %v2455
      %v2535 = vadd.f32 %v2291, %v2458
      %v2536 = vadd.f32 %v2292, %v2460
      %v2537 = vadd.f32 %v2293, %v2463
      %v2538 = vadd.f32 %v2294, %v2465
      %v2539 = vadd.f32 %v2295, %v2468
      %v2540 = vadd.f32 %v2296, %v2470
      %v2541 = vadd.f32 %v2297, %v2473
      %v2542 = vadd.f32 %v2298, %v2475
      %v2543 = vadd.f32 %v2299, %v2478
      %v2544 = vadd.f32 %v2300, %v2480
      %v2545 = vlaneseq
      %v2546 = vshrl.u32 %v2545, 7
      %v2547 = vsub.s32 3, %v2546
      %v2548 = vrot.slane %v398, %v2547
      %v2549 = vmul.f32 %v455, %v2548
      %v2550 = vmul.f32 %v456, %v2548
      %v2551 = vmul.f32 %v457, %v2548
      %v2552 = vmul.f32 %v458, %v2548
      %v2553 = vmul.f32 %v459, %v2548
      %v2554 = vmul.f32 %v460, %v2548
      %v2555 = vmul.f32 %v461, %v2548
      %v2556 = vmul.f32 %v462, %v2548
      %v2557 = vmul.f32 %v463, %v2548
      %v2558 = vmul.f32 %v464, %v2548
      %v2559 = vmul.f32 %v465, %v2548
      %v2560 = vmul.f32 %v466, %v2548
      %v2561 = vmul.f32 %v467, %v2548
      %v2562 = vmul.f32 %v468, %v2548
      %v2563 = vmul.f32 %v469, %v2548
      %v2564 = vmul.f32 %v470, %v2548
      %v2565 = vmul.f32 %v471, %v2548
      %v2566 = vmul.f32 %v472, %v2548
      %v2567 = vmul.f32 %v473, %v2548
      %v2568 = vmul.f32 %v474, %v2548
      %v2569 = vmul.f32 %v475, %v2548
      %v2570 = vmul.f32 %v476, %v2548
      %v2571 = vmul.f32 %v477, %v2548
      %v2572 = vmul.f32 %v478, %v2548
      %v2573 = vmul.f32 %v479, %v2548
      %v2574 = vmul.f32 %v480, %v2548
      %v2575 = vmul.f32 %v481, %v2548
      %v2576 = vmul.f32 %v482, %v2548
      %v2577 = vmul.f32 %v483, %v2548
      %v2578 = vmul.f32 %v484, %v2548
      %v2579 = vmul.f32 %v485, %v2548
      %v2580 = vmul.f32 %v486, %v2548
      %v2581 = vmul.f32 %v487, %v2548
      %v2582 = vmul.f32 %v488, %v2548
      %v2583 = vmul.f32 %v489, %v2548
      %v2584 = vmul.f32 %v490, %v2548
      %v2585 = vmul.f32 %v491, %v2548
      %v2586 = vmul.f32 %v492, %v2548
      %v2587 = vmul.f32 %v493, %v2548
      %v2588 = vmul.f32 %v494, %v2548
      %v2589 = vmul.f32 %v495, %v2548
      %v2590 = vmul.f32 %v496, %v2548
      %v2591 = vmul.f32 %v497, %v2548
      %v2592 = vmul.f32 %v498, %v2548
      %v2593 = vmul.f32 %v499, %v2548
      %v2594 = vmul.f32 %v500, %v2548
      %v2595 = vmul.f32 %v501, %v2548
      %v2596 = vmul.f32 %v502, %v2548
      %v2645 = vrot.slane %v2549, 2
      %v2646 = vrot.slane %v2550, 2
      %v2647 = vsel %vm976, %v2645, %v2646
      %v2648 = vrot.slane %v2551, 2
      %v2649 = vsel %vm976, %v2646, %v2648
      %v2650 = vrot.slane %v2552, 2
      %v2651 = vrot.slane %v2553, 2
      %v2652 = vsel %vm976, %v2650, %v2651
      %v2653 = vrot.slane %v2554, 2
      %v2654 = vsel %vm976, %v2651, %v2653
      %v2655 = vrot.slane %v2555, 2
      %v2656 = vrot.slane %v2556, 2
      %v2657 = vsel %vm976, %v2655, %v2656
      %v2658 = vrot.slane %v2557, 2
      %v2659 = vsel %vm976, %v2656, %v2658
      %v2660 = vrot.slane %v2558, 2
      %v2661 = vrot.slane %v2559, 2
      %v2662 = vsel %vm976, %v2660, %v2661
      %v2663 = vrot.slane %v2560, 2
      %v2664 = vsel %vm976, %v2661, %v2663
      %v2665 = vrot.slane %v2561, 2
      %v2666 = vrot.slane %v2562, 2
      %v2667 = vsel %vm976, %v2665, %v2666
      %v2668 = vrot.slane %v2563, 2
      %v2669 = vsel %vm976, %v2666, %v2668
      %v2670 = vrot.slane %v2564, 2
      %v2671 = vrot.slane %v2565, 2
      %v2672 = vsel %vm976, %v2670, %v2671
      %v2673 = vrot.slane %v2566, 2
      %v2674 = vsel %vm976, %v2671, %v2673
      %v2675 = vrot.slane %v2567, 2
      %v2676 = vrot.slane %v2568, 2
      %v2677 = vsel %vm976, %v2675, %v2676
      %v2678 = vrot.slane %v2569, 2
      %v2679 = vsel %vm976, %v2676, %v2678
      %v2680 = vrot.slane %v2570, 2
      %v2681 = vrot.slane %v2571, 2
      %v2682 = vsel %vm976, %v2680, %v2681
      %v2683 = vrot.slane %v2572, 2
      %v2684 = vsel %vm976, %v2681, %v2683
      %v2685 = vrot.slane %v2573, 2
      %v2686 = vrot.slane %v2574, 2
      %v2687 = vsel %vm976, %v2685, %v2686
      %v2688 = vrot.slane %v2575, 2
      %v2689 = vsel %vm976, %v2686, %v2688
      %v2690 = vrot.slane %v2576, 2
      %v2691 = vrot.slane %v2577, 2
      %v2692 = vsel %vm976, %v2690, %v2691
      %v2693 = vrot.slane %v2578, 2
      %v2694 = vsel %vm976, %v2691, %v2693
      %v2695 = vrot.slane %v2579, 2
      %v2696 = vrot.slane %v2580, 2
      %v2697 = vsel %vm976, %v2695, %v2696
      %v2698 = vrot.slane %v2581, 2
      %v2699 = vsel %vm976, %v2696, %v2698
      %v2700 = vrot.slane %v2582, 2
      %v2701 = vrot.slane %v2583, 2
      %v2702 = vsel %vm976, %v2700, %v2701
      %v2703 = vrot.slane %v2584, 2
      %v2704 = vsel %vm976, %v2701, %v2703
      %v2705 = vrot.slane %v2585, 2
      %v2706 = vrot.slane %v2586, 2
      %v2707 = vsel %vm976, %v2705, %v2706
      %v2708 = vrot.slane %v2587, 2
      %v2709 = vsel %vm976, %v2706, %v2708
      %v2710 = vrot.slane %v2588, 2
      %v2711 = vrot.slane %v2589, 2
      %v2712 = vsel %vm976, %v2710, %v2711
      %v2713 = vrot.slane %v2590, 2
      %v2714 = vsel %vm976, %v2711, %v2713
      %v2715 = vrot.slane %v2591, 2
      %v2716 = vrot.slane %v2592, 2
      %v2717 = vsel %vm976, %v2715, %v2716
      %v2718 = vrot.slane %v2593, 2
      %v2719 = vsel %vm976, %v2716, %v2718
      %v2720 = vrot.slane %v2594, 2
      %v2721 = vrot.slane %v2595, 2
      %v2722 = vsel %vm976, %v2720, %v2721
      %v2723 = vrot.slane %v2596, 2
      %v2724 = vsel %vm976, %v2721, %v2723
      %v2757 = vadd.f32 %v2513, %v2647
      %v2758 = vadd.f32 %v2514, %v2649
      %v2759 = vadd.f32 %v2515, %v2652
      %v2760 = vadd.f32 %v2516, %v2654
      %v2761 = vadd.f32 %v2517, %v2657
      %v2762 = vadd.f32 %v2518, %v2659
      %v2763 = vadd.f32 %v2519, %v2662
      %v2764 = vadd.f32 %v2520, %v2664
      %v2765 = vadd.f32 %v2521, %v2667
      %v2766 = vadd.f32 %v2522, %v2669
      %v2767 = vadd.f32 %v2523, %v2672
      %v2768 = vadd.f32 %v2524, %v2674
      %v2769 = vadd.f32 %v2525, %v2677
      %v2770 = vadd.f32 %v2526, %v2679
      %v2771 = vadd.f32 %v2527, %v2682
      %v2772 = vadd.f32 %v2528, %v2684
      %v2773 = vadd.f32 %v2529, %v2687
      %v2774 = vadd.f32 %v2530, %v2689
      %v2775 = vadd.f32 %v2531, %v2692
      %v2776 = vadd.f32 %v2532, %v2694
      %v2777 = vadd.f32 %v2533, %v2697
      %v2778 = vadd.f32 %v2534, %v2699
      %v2779 = vadd.f32 %v2535, %v2702
      %v2780 = vadd.f32 %v2536, %v2704
      %v2781 = vadd.f32 %v2537, %v2707
      %v2782 = vadd.f32 %v2538, %v2709
      %v2783 = vadd.f32 %v2539, %v2712
      %v2784 = vadd.f32 %v2540, %v2714
      %v2785 = vadd.f32 %v2541, %v2717
      %v2786 = vadd.f32 %v2542, %v2719
      %v2787 = vadd.f32 %v2543, %v2722
      %v2788 = vadd.f32 %v2544, %v2724
      %v2789 = vlaneseq
      %v2790 = vshrl.u32 %v2789, 7
      %v2791 = vsub.s32 4, %v2790
      %v2792 = vrot.slane %v398, %v2791
      %v2793 = vmul.f32 %v458, %v2792
      %v2794 = vmul.f32 %v459, %v2792
      %v2795 = vmul.f32 %v461, %v2792
      %v2796 = vmul.f32 %v462, %v2792
      %v2797 = vmul.f32 %v464, %v2792
      %v2798 = vmul.f32 %v465, %v2792
      %v2799 = vmul.f32 %v467, %v2792
      %v2800 = vmul.f32 %v468, %v2792
      %v2801 = vmul.f32 %v470, %v2792
      %v2802 = vmul.f32 %v471, %v2792
      %v2803 = vmul.f32 %v473, %v2792
      %v2804 = vmul.f32 %v474, %v2792
      %v2805 = vmul.f32 %v476, %v2792
      %v2806 = vmul.f32 %v477, %v2792
      %v2807 = vmul.f32 %v479, %v2792
      %v2808 = vmul.f32 %v480, %v2792
      %v2809 = vmul.f32 %v482, %v2792
      %v2810 = vmul.f32 %v483, %v2792
      %v2811 = vmul.f32 %v485, %v2792
      %v2812 = vmul.f32 %v486, %v2792
      %v2813 = vmul.f32 %v488, %v2792
      %v2814 = vmul.f32 %v489, %v2792
      %v2815 = vmul.f32 %v491, %v2792
      %v2816 = vmul.f32 %v492, %v2792
      %v2817 = vmul.f32 %v494, %v2792
      %v2818 = vmul.f32 %v495, %v2792
      %v2819 = vmul.f32 %v497, %v2792
      %v2820 = vmul.f32 %v498, %v2792
      %v2821 = vmul.f32 %v500, %v2792
      %v2822 = vmul.f32 %v501, %v2792
      %v2823 = vmul.f32 %v503, %v2792
      %v2824 = vmul.f32 %v504, %v2792
      %v2825 = vadd.f32 %v2757, %v2793
      %v2826 = vadd.f32 %v2758, %v2794
      %v2827 = vadd.f32 %v2759, %v2795
      %v2828 = vadd.f32 %v2760, %v2796
      %v2829 = vadd.f32 %v2761, %v2797
      %v2830 = vadd.f32 %v2762, %v2798
      %v2831 = vadd.f32 %v2763, %v2799
      %v2832 = vadd.f32 %v2764, %v2800
      %v2833 = vadd.f32 %v2765, %v2801
      %v2834 = vadd.f32 %v2766, %v2802
      %v2835 = vadd.f32 %v2767, %v2803
      %v2836 = vadd.f32 %v2768, %v2804
      %v2837 = vadd.f32 %v2769, %v2805
      %v2838 = vadd.f32 %v2770, %v2806
      %v2839 = vadd.f32 %v2771, %v2807
      %v2840 = vadd.f32 %v2772, %v2808
      %v2841 = vadd.f32 %v2773, %v2809
      %v2842 = vadd.f32 %v2774, %v2810
      %v2843 = vadd.f32 %v2775, %v2811
      %v2844 = vadd.f32 %v2776, %v2812
      %v2845 = vadd.f32 %v2777, %v2813
      %v2846 = vadd.f32 %v2778, %v2814
      %v2847 = vadd.f32 %v2779, %v2815
      %v2848 = vadd.f32 %v2780, %v2816
      %v2849 = vadd.f32 %v2781, %v2817
      %v2850 = vadd.f32 %v2782, %v2818
      %v2851 = vadd.f32 %v2783, %v2819
      %v2852 = vadd.f32 %v2784, %v2820
      %v2853 = vadd.f32 %v2785, %v2821
      %v2854 = vadd.f32 %v2786, %v2822
      %v2855 = vadd.f32 %v2787, %v2823
      %v2856 = vadd.f32 %v2788, %v2824
      %v2857 = vlaneseq
      %v2858 = vshrl.u32 %v2857, 7
      %v2859 = vsub.s32 5, %v2858
      %v2860 = vrot.slane %v398, %v2859
      %v2861 = vmul.f32 %v458, %v2860
      %v2862 = vmul.f32 %v459, %v2860
      %v2863 = vmul.f32 %v460, %v2860
      %v2864 = vmul.f32 %v461, %v2860
      %v2865 = vmul.f32 %v462, %v2860
      %v2866 = vmul.f32 %v463, %v2860
      %v2867 = vmul.f32 %v464, %v2860
      %v2868 = vmul.f32 %v465, %v2860
      %v2869 = vmul.f32 %v466, %v2860
      %v2870 = vmul.f32 %v467, %v2860
      %v2871 = vmul.f32 %v468, %v2860
      %v2872 = vmul.f32 %v469, %v2860
      %v2873 = vmul.f32 %v470, %v2860
      %v2874 = vmul.f32 %v471, %v2860
      %v2875 = vmul.f32 %v472, %v2860
      %v2876 = vmul.f32 %v473, %v2860
      %v2877 = vmul.f32 %v474, %v2860
      %v2878 = vmul.f32 %v475, %v2860
      %v2879 = vmul.f32 %v476, %v2860
      %v2880 = vmul.f32 %v477, %v2860
      %v2881 = vmul.f32 %v478, %v2860
      %v2882 = vmul.f32 %v479, %v2860
      %v2883 = vmul.f32 %v480, %v2860
      %v2884 = vmul.f32 %v481, %v2860
      %v2885 = vmul.f32 %v482, %v2860
      %v2886 = vmul.f32 %v483, %v2860
      %v2887 = vmul.f32 %v484, %v2860
      %v2888 = vmul.f32 %v485, %v2860
      %v2889 = vmul.f32 %v486, %v2860
      %v2890 = vmul.f32 %v487, %v2860
      %v2891 = vmul.f32 %v488, %v2860
      %v2892 = vmul.f32 %v489, %v2860
      %v2893 = vmul.f32 %v490, %v2860
      %v2894 = vmul.f32 %v491, %v2860
      %v2895 = vmul.f32 %v492, %v2860
      %v2896 = vmul.f32 %v493, %v2860
      %v2897 = vmul.f32 %v494, %v2860
      %v2898 = vmul.f32 %v495, %v2860
      %v2899 = vmul.f32 %v496, %v2860
      %v2900 = vmul.f32 %v497, %v2860
      %v2901 = vmul.f32 %v498, %v2860
      %v2902 = vmul.f32 %v499, %v2860
      %v2903 = vmul.f32 %v500, %v2860
      %v2904 = vmul.f32 %v501, %v2860
      %v2905 = vmul.f32 %v502, %v2860
      %v2906 = vmul.f32 %v503, %v2860
      %v2907 = vmul.f32 %v504, %v2860
      %v2908 = vmul.f32 %v505, %v2860
      %v2957 = vrot.slane %v2861, 1
      %v2958 = vrot.slane %v2862, 1
      %v2959 = vsel %vm731, %v2957, %v2958
      %v2960 = vrot.slane %v2863, 1
      %v2961 = vsel %vm731, %v2958, %v2960
      %v2962 = vrot.slane %v2864, 1
      %v2963 = vrot.slane %v2865, 1
      %v2964 = vsel %vm731, %v2962, %v2963
      %v2965 = vrot.slane %v2866, 1
      %v2966 = vsel %vm731, %v2963, %v2965
      %v2967 = vrot.slane %v2867, 1
      %v2968 = vrot.slane %v2868, 1
      %v2969 = vsel %vm731, %v2967, %v2968
      %v2970 = vrot.slane %v2869, 1
      %v2971 = vsel %vm731, %v2968, %v2970
      %v2972 = vrot.slane %v2870, 1
      %v2973 = vrot.slane %v2871, 1
      %v2974 = vsel %vm731, %v2972, %v2973
      %v2975 = vrot.slane %v2872, 1
      %v2976 = vsel %vm731, %v2973, %v2975
      %v2977 = vrot.slane %v2873, 1
      %v2978 = vrot.slane %v2874, 1
      %v2979 = vsel %vm731, %v2977, %v2978
      %v2980 = vrot.slane %v2875, 1
      %v2981 = vsel %vm731, %v2978, %v2980
      %v2982 = vrot.slane %v2876, 1
      %v2983 = vrot.slane %v2877, 1
      %v2984 = vsel %vm731, %v2982, %v2983
      %v2985 = vrot.slane %v2878, 1
      %v2986 = vsel %vm731, %v2983, %v2985
      %v2987 = vrot.slane %v2879, 1
      %v2988 = vrot.slane %v2880, 1
      %v2989 = vsel %vm731, %v2987, %v2988
      %v2990 = vrot.slane %v2881, 1
      %v2991 = vsel %vm731, %v2988, %v2990
      %v2992 = vrot.slane %v2882, 1
      %v2993 = vrot.slane %v2883, 1
      %v2994 = vsel %vm731, %v2992, %v2993
      %v2995 = vrot.slane %v2884, 1
      %v2996 = vsel %vm731, %v2993, %v2995
      %v2997 = vrot.slane %v2885, 1
      %v2998 = vrot.slane %v2886, 1
      %v2999 = vsel %vm731, %v2997, %v2998
      %v3000 = vrot.slane %v2887, 1
      %v3001 = vsel %vm731, %v2998, %v3000
      %v3002 = vrot.slane %v2888, 1
      %v3003 = vrot.slane %v2889, 1
      %v3004 = vsel %vm731, %v3002, %v3003
      %v3005 = vrot.slane %v2890, 1
      %v3006 = vsel %vm731, %v3003, %v3005
      %v3007 = vrot.slane %v2891, 1
      %v3008 = vrot.slane %v2892, 1
      %v3009 = vsel %vm731, %v3007, %v3008
      %v3010 = vrot.slane %v2893, 1
      %v3011 = vsel %vm731, %v3008, %v3010
      %v3012 = vrot.slane %v2894, 1
      %v3013 = vrot.slane %v2895, 1
      %v3014 = vsel %vm731, %v3012, %v3013
      %v3015 = vrot.slane %v2896, 1
      %v3016 = vsel %vm731, %v3013, %v3015
      %v3017 = vrot.slane %v2897, 1
      %v3018 = vrot.slane %v2898, 1
      %v3019 = vsel %vm731, %v3017, %v3018
      %v3020 = vrot.slane %v2899, 1
      %v3021 = vsel %vm731, %v3018, %v3020
      %v3022 = vrot.slane %v2900, 1
      %v3023 = vrot.slane %v2901, 1
      %v3024 = vsel %vm731, %v3022, %v3023
      %v3025 = vrot.slane %v2902, 1
      %v3026 = vsel %vm731, %v3023, %v3025
      %v3027 = vrot.slane %v2903, 1
      %v3028 = vrot.slane %v2904, 1
      %v3029 = vsel %vm731, %v3027, %v3028
      %v3030 = vrot.slane %v2905, 1
      %v3031 = vsel %vm731, %v3028, %v3030
      %v3032 = vrot.slane %v2906, 1
      %v3033 = vrot.slane %v2907, 1
      %v3034 = vsel %vm731, %v3032, %v3033
      %v3035 = vrot.slane %v2908, 1
      %v3036 = vsel %vm731, %v3033, %v3035
      %v3069 = vadd.f32 %v2825, %v2959
      %v3070 = vadd.f32 %v2826, %v2961
      %v3071 = vadd.f32 %v2827, %v2964
      %v3072 = vadd.f32 %v2828, %v2966
      %v3073 = vadd.f32 %v2829, %v2969
      %v3074 = vadd.f32 %v2830, %v2971
      %v3075 = vadd.f32 %v2831, %v2974
      %v3076 = vadd.f32 %v2832, %v2976
      %v3077 = vadd.f32 %v2833, %v2979
      %v3078 = vadd.f32 %v2834, %v2981
      %v3079 = vadd.f32 %v2835, %v2984
      %v3080 = vadd.f32 %v2836, %v2986
      %v3081 = vadd.f32 %v2837, %v2989
      %v3082 = vadd.f32 %v2838, %v2991
      %v3083 = vadd.f32 %v2839, %v2994
      %v3084 = vadd.f32 %v2840, %v2996
      %v3085 = vadd.f32 %v2841, %v2999
      %v3086 = vadd.f32 %v2842, %v3001
      %v3087 = vadd.f32 %v2843, %v3004
      %v3088 = vadd.f32 %v2844, %v3006
      %v3089 = vadd.f32 %v2845, %v3009
      %v3090 = vadd.f32 %v2846, %v3011
      %v3091 = vadd.f32 %v2847, %v3014
      %v3092 = vadd.f32 %v2848, %v3016
      %v3093 = vadd.f32 %v2849, %v3019
      %v3094 = vadd.f32 %v2850, %v3021
      %v3095 = vadd.f32 %v2851, %v3024
      %v3096 = vadd.f32 %v2852, %v3026
      %v3097 = vadd.f32 %v2853, %v3029
      %v3098 = vadd.f32 %v2854, %v3031
      %v3099 = vadd.f32 %v2855, %v3034
      %v3100 = vadd.f32 %v2856, %v3036
      %v3101 = vlaneseq
      %v3102 = vshrl.u32 %v3101, 7
      %v3103 = vsub.s32 6, %v3102
      %v3104 = vrot.slane %v398, %v3103
      %v3105 = vmul.f32 %v458, %v3104
      %v3106 = vmul.f32 %v459, %v3104
      %v3107 = vmul.f32 %v460, %v3104
      %v3108 = vmul.f32 %v461, %v3104
      %v3109 = vmul.f32 %v462, %v3104
      %v3110 = vmul.f32 %v463, %v3104
      %v3111 = vmul.f32 %v464, %v3104
      %v3112 = vmul.f32 %v465, %v3104
      %v3113 = vmul.f32 %v466, %v3104
      %v3114 = vmul.f32 %v467, %v3104
      %v3115 = vmul.f32 %v468, %v3104
      %v3116 = vmul.f32 %v469, %v3104
      %v3117 = vmul.f32 %v470, %v3104
      %v3118 = vmul.f32 %v471, %v3104
      %v3119 = vmul.f32 %v472, %v3104
      %v3120 = vmul.f32 %v473, %v3104
      %v3121 = vmul.f32 %v474, %v3104
      %v3122 = vmul.f32 %v475, %v3104
      %v3123 = vmul.f32 %v476, %v3104
      %v3124 = vmul.f32 %v477, %v3104
      %v3125 = vmul.f32 %v478, %v3104
      %v3126 = vmul.f32 %v479, %v3104
      %v3127 = vmul.f32 %v480, %v3104
      %v3128 = vmul.f32 %v481, %v3104
      %v3129 = vmul.f32 %v482, %v3104
      %v3130 = vmul.f32 %v483, %v3104
      %v3131 = vmul.f32 %v484, %v3104
      %v3132 = vmul.f32 %v485, %v3104
      %v3133 = vmul.f32 %v486, %v3104
      %v3134 = vmul.f32 %v487, %v3104
      %v3135 = vmul.f32 %v488, %v3104
      %v3136 = vmul.f32 %v489, %v3104
      %v3137 = vmul.f32 %v490, %v3104
      %v3138 = vmul.f32 %v491, %v3104
      %v3139 = vmul.f32 %v492, %v3104
      %v3140 = vmul.f32 %v493, %v3104
      %v3141 = vmul.f32 %v494, %v3104
      %v3142 = vmul.f32 %v495, %v3104
      %v3143 = vmul.f32 %v496, %v3104
      %v3144 = vmul.f32 %v497, %v3104
      %v3145 = vmul.f32 %v498, %v3104
      %v3146 = vmul.f32 %v499, %v3104
      %v3147 = vmul.f32 %v500, %v3104
      %v3148 = vmul.f32 %v501, %v3104
      %v3149 = vmul.f32 %v502, %v3104
      %v3150 = vmul.f32 %v503, %v3104
      %v3151 = vmul.f32 %v504, %v3104
      %v3152 = vmul.f32 %v505, %v3104
      %v3201 = vrot.slane %v3105, 2
      %v3202 = vrot.slane %v3106, 2
      %v3203 = vsel %vm976, %v3201, %v3202
      %v3204 = vrot.slane %v3107, 2
      %v3205 = vsel %vm976, %v3202, %v3204
      %v3206 = vrot.slane %v3108, 2
      %v3207 = vrot.slane %v3109, 2
      %v3208 = vsel %vm976, %v3206, %v3207
      %v3209 = vrot.slane %v3110, 2
      %v3210 = vsel %vm976, %v3207, %v3209
      %v3211 = vrot.slane %v3111, 2
      %v3212 = vrot.slane %v3112, 2
      %v3213 = vsel %vm976, %v3211, %v3212
      %v3214 = vrot.slane %v3113, 2
      %v3215 = vsel %vm976, %v3212, %v3214
      %v3216 = vrot.slane %v3114, 2
      %v3217 = vrot.slane %v3115, 2
      %v3218 = vsel %vm976, %v3216, %v3217
      %v3219 = vrot.slane %v3116, 2
      %v3220 = vsel %vm976, %v3217, %v3219
      %v3221 = vrot.slane %v3117, 2
      %v3222 = vrot.slane %v3118, 2
      %v3223 = vsel %vm976, %v3221, %v3222
      %v3224 = vrot.slane %v3119, 2
      %v3225 = vsel %vm976, %v3222, %v3224
      %v3226 = vrot.slane %v3120, 2
      %v3227 = vrot.slane %v3121, 2
      %v3228 = vsel %vm976, %v3226, %v3227
      %v3229 = vrot.slane %v3122, 2
      %v3230 = vsel %vm976, %v3227, %v3229
      %v3231 = vrot.slane %v3123, 2
      %v3232 = vrot.slane %v3124, 2
      %v3233 = vsel %vm976, %v3231, %v3232
      %v3234 = vrot.slane %v3125, 2
      %v3235 = vsel %vm976, %v3232, %v3234
      %v3236 = vrot.slane %v3126, 2
      %v3237 = vrot.slane %v3127, 2
      %v3238 = vsel %vm976, %v3236, %v3237
      %v3239 = vrot.slane %v3128, 2
      %v3240 = vsel %vm976, %v3237, %v3239
      %v3241 = vrot.slane %v3129, 2
      %v3242 = vrot.slane %v3130, 2
      %v3243 = vsel %vm976, %v3241, %v3242
      %v3244 = vrot.slane %v3131, 2
      %v3245 = vsel %vm976, %v3242, %v3244
      %v3246 = vrot.slane %v3132, 2
      %v3247 = vrot.slane %v3133, 2
      %v3248 = vsel %vm976, %v3246, %v3247
      %v3249 = vrot.slane %v3134, 2
      %v3250 = vsel %vm976, %v3247, %v3249
      %v3251 = vrot.slane %v3135, 2
      %v3252 = vrot.slane %v3136, 2
      %v3253 = vsel %vm976, %v3251, %v3252
      %v3254 = vrot.slane %v3137, 2
      %v3255 = vsel %vm976, %v3252, %v3254
      %v3256 = vrot.slane %v3138, 2
      %v3257 = vrot.slane %v3139, 2
      %v3258 = vsel %vm976, %v3256, %v3257
      %v3259 = vrot.slane %v3140, 2
      %v3260 = vsel %vm976, %v3257, %v3259
      %v3261 = vrot.slane %v3141, 2
      %v3262 = vrot.slane %v3142, 2
      %v3263 = vsel %vm976, %v3261, %v3262
      %v3264 = vrot.slane %v3143, 2
      %v3265 = vsel %vm976, %v3262, %v3264
      %v3266 = vrot.slane %v3144, 2
      %v3267 = vrot.slane %v3145, 2
      %v3268 = vsel %vm976, %v3266, %v3267
      %v3269 = vrot.slane %v3146, 2
      %v3270 = vsel %vm976, %v3267, %v3269
      %v3271 = vrot.slane %v3147, 2
      %v3272 = vrot.slane %v3148, 2
      %v3273 = vsel %vm976, %v3271, %v3272
      %v3274 = vrot.slane %v3149, 2
      %v3275 = vsel %vm976, %v3272, %v3274
      %v3276 = vrot.slane %v3150, 2
      %v3277 = vrot.slane %v3151, 2
      %v3278 = vsel %vm976, %v3276, %v3277
      %v3279 = vrot.slane %v3152, 2
      %v3280 = vsel %vm976, %v3277, %v3279
      %v3313 = vadd.f32 %v3069, %v3203
      %v3314 = vadd.f32 %v3070, %v3205
      %v3315 = vadd.f32 %v3071, %v3208
      %v3316 = vadd.f32 %v3072, %v3210
      %v3317 = vadd.f32 %v3073, %v3213
      %v3318 = vadd.f32 %v3074, %v3215
      %v3319 = vadd.f32 %v3075, %v3218
      %v3320 = vadd.f32 %v3076, %v3220
      %v3321 = vadd.f32 %v3077, %v3223
      %v3322 = vadd.f32 %v3078, %v3225
      %v3323 = vadd.f32 %v3079, %v3228
      %v3324 = vadd.f32 %v3080, %v3230
      %v3325 = vadd.f32 %v3081, %v3233
      %v3326 = vadd.f32 %v3082, %v3235
      %v3327 = vadd.f32 %v3083, %v3238
      %v3328 = vadd.f32 %v3084, %v3240
      %v3329 = vadd.f32 %v3085, %v3243
      %v3330 = vadd.f32 %v3086, %v3245
      %v3331 = vadd.f32 %v3087, %v3248
      %v3332 = vadd.f32 %v3088, %v3250
      %v3333 = vadd.f32 %v3089, %v3253
      %v3334 = vadd.f32 %v3090, %v3255
      %v3335 = vadd.f32 %v3091, %v3258
      %v3336 = vadd.f32 %v3092, %v3260
      %v3337 = vadd.f32 %v3093, %v3263
      %v3338 = vadd.f32 %v3094, %v3265
      %v3339 = vadd.f32 %v3095, %v3268
      %v3340 = vadd.f32 %v3096, %v3270
      %v3341 = vadd.f32 %v3097, %v3273
      %v3342 = vadd.f32 %v3098, %v3275
      %v3343 = vadd.f32 %v3099, %v3278
      %v3344 = vadd.f32 %v3100, %v3280
      %v3345 = vlaneseq
      %v3346 = vshrl.u32 %v3345, 7
      %v3347 = vsub.s32 7, %v3346
      %v3348 = vrot.slane %v398, %v3347
      %v3349 = vmul.f32 %v461, %v3348
      %v3350 = vmul.f32 %v462, %v3348
      %v3351 = vmul.f32 %v464, %v3348
      %v3352 = vmul.f32 %v465, %v3348
      %v3353 = vmul.f32 %v467, %v3348
      %v3354 = vmul.f32 %v468, %v3348
      %v3355 = vmul.f32 %v470, %v3348
      %v3356 = vmul.f32 %v471, %v3348
      %v3357 = vmul.f32 %v473, %v3348
      %v3358 = vmul.f32 %v474, %v3348
      %v3359 = vmul.f32 %v476, %v3348
      %v3360 = vmul.f32 %v477, %v3348
      %v3361 = vmul.f32 %v479, %v3348
      %v3362 = vmul.f32 %v480, %v3348
      %v3363 = vmul.f32 %v482, %v3348
      %v3364 = vmul.f32 %v483, %v3348
      %v3365 = vmul.f32 %v485, %v3348
      %v3366 = vmul.f32 %v486, %v3348
      %v3367 = vmul.f32 %v488, %v3348
      %v3368 = vmul.f32 %v489, %v3348
      %v3369 = vmul.f32 %v491, %v3348
      %v3370 = vmul.f32 %v492, %v3348
      %v3371 = vmul.f32 %v494, %v3348
      %v3372 = vmul.f32 %v495, %v3348
      %v3373 = vmul.f32 %v497, %v3348
      %v3374 = vmul.f32 %v498, %v3348
      %v3375 = vmul.f32 %v500, %v3348
      %v3376 = vmul.f32 %v501, %v3348
      %v3377 = vmul.f32 %v503, %v3348
      %v3378 = vmul.f32 %v504, %v3348
      %v3379 = vmul.f32 %v506, %v3348
      %v3380 = vmul.f32 %v507, %v3348
      %v3381 = vadd.f32 %v3313, %v3349
      %v3382 = vadd.f32 %v3314, %v3350
      %v3383 = vadd.f32 %v3315, %v3351
      %v3384 = vadd.f32 %v3316, %v3352
      %v3385 = vadd.f32 %v3317, %v3353
      %v3386 = vadd.f32 %v3318, %v3354
      %v3387 = vadd.f32 %v3319, %v3355
      %v3388 = vadd.f32 %v3320, %v3356
      %v3389 = vadd.f32 %v3321, %v3357
      %v3390 = vadd.f32 %v3322, %v3358
      %v3391 = vadd.f32 %v3323, %v3359
      %v3392 = vadd.f32 %v3324, %v3360
      %v3393 = vadd.f32 %v3325, %v3361
      %v3394 = vadd.f32 %v3326, %v3362
      %v3395 = vadd.f32 %v3327, %v3363
      %v3396 = vadd.f32 %v3328, %v3364
      %v3397 = vadd.f32 %v3329, %v3365
      %v3398 = vadd.f32 %v3330, %v3366
      %v3399 = vadd.f32 %v3331, %v3367
      %v3400 = vadd.f32 %v3332, %v3368
      %v3401 = vadd.f32 %v3333, %v3369
      %v3402 = vadd.f32 %v3334, %v3370
      %v3403 = vadd.f32 %v3335, %v3371
      %v3404 = vadd.f32 %v3336, %v3372
      %v3405 = vadd.f32 %v3337, %v3373
      %v3406 = vadd.f32 %v3338, %v3374
      %v3407 = vadd.f32 %v3339, %v3375
      %v3408 = vadd.f32 %v3340, %v3376
      %v3409 = vadd.f32 %v3341, %v3377
      %v3410 = vadd.f32 %v3342, %v3378
      %v3411 = vadd.f32 %v3343, %v3379
      %v3412 = vadd.f32 %v3344, %v3380
      %v3413 = vlaneseq
      %v3414 = vshrl.u32 %v3413, 7
      %v3415 = vsub.s32 0, %v3414
      %v3416 = vrot.slane %v399, %v3415
      %v3417 = vmul.f32 %v461, %v3416
      %v3418 = vmul.f32 %v462, %v3416
      %v3419 = vmul.f32 %v463, %v3416
      %v3420 = vmul.f32 %v464, %v3416
      %v3421 = vmul.f32 %v465, %v3416
      %v3422 = vmul.f32 %v466, %v3416
      %v3423 = vmul.f32 %v467, %v3416
      %v3424 = vmul.f32 %v468, %v3416
      %v3425 = vmul.f32 %v469, %v3416
      %v3426 = vmul.f32 %v470, %v3416
      %v3427 = vmul.f32 %v471, %v3416
      %v3428 = vmul.f32 %v472, %v3416
      %v3429 = vmul.f32 %v473, %v3416
      %v3430 = vmul.f32 %v474, %v3416
      %v3431 = vmul.f32 %v475, %v3416
      %v3432 = vmul.f32 %v476, %v3416
      %v3433 = vmul.f32 %v477, %v3416
      %v3434 = vmul.f32 %v478, %v3416
      %v3435 = vmul.f32 %v479, %v3416
      %v3436 = vmul.f32 %v480, %v3416
      %v3437 = vmul.f32 %v481, %v3416
      %v3438 = vmul.f32 %v482, %v3416
      %v3439 = vmul.f32 %v483, %v3416
      %v3440 = vmul.f32 %v484, %v3416
      %v3441 = vmul.f32 %v485, %v3416
      %v3442 = vmul.f32 %v486, %v3416
      %v3443 = vmul.f32 %v487, %v3416
      %v3444 = vmul.f32 %v488, %v3416
      %v3445 = vmul.f32 %v489, %v3416
      %v3446 = vmul.f32 %v490, %v3416
      %v3447 = vmul.f32 %v491, %v3416
      %v3448 = vmul.f32 %v492, %v3416
      %v3449 = vmul.f32 %v493, %v3416
      %v3450 = vmul.f32 %v494, %v3416
      %v3451 = vmul.f32 %v495, %v3416
      %v3452 = vmul.f32 %v496, %v3416
      %v3453 = vmul.f32 %v497, %v3416
      %v3454 = vmul.f32 %v498, %v3416
      %v3455 = vmul.f32 %v499, %v3416
      %v3456 = vmul.f32 %v500, %v3416
      %v3457 = vmul.f32 %v501, %v3416
      %v3458 = vmul.f32 %v502, %v3416
      %v3459 = vmul.f32 %v503, %v3416
      %v3460 = vmul.f32 %v504, %v3416
      %v3461 = vmul.f32 %v505, %v3416
      %v3462 = vmul.f32 %v506, %v3416
      %v3463 = vmul.f32 %v507, %v3416
      %v3464 = vmul.f32 %v508, %v3416
      %v3513 = vrot.slane %v3417, 1
      %v3514 = vrot.slane %v3418, 1
      %v3515 = vsel %vm731, %v3513, %v3514
      %v3516 = vrot.slane %v3419, 1
      %v3517 = vsel %vm731, %v3514, %v3516
      %v3518 = vrot.slane %v3420, 1
      %v3519 = vrot.slane %v3421, 1
      %v3520 = vsel %vm731, %v3518, %v3519
      %v3521 = vrot.slane %v3422, 1
      %v3522 = vsel %vm731, %v3519, %v3521
      %v3523 = vrot.slane %v3423, 1
      %v3524 = vrot.slane %v3424, 1
      %v3525 = vsel %vm731, %v3523, %v3524
      %v3526 = vrot.slane %v3425, 1
      %v3527 = vsel %vm731, %v3524, %v3526
      %v3528 = vrot.slane %v3426, 1
      %v3529 = vrot.slane %v3427, 1
      %v3530 = vsel %vm731, %v3528, %v3529
      %v3531 = vrot.slane %v3428, 1
      %v3532 = vsel %vm731, %v3529, %v3531
      %v3533 = vrot.slane %v3429, 1
      %v3534 = vrot.slane %v3430, 1
      %v3535 = vsel %vm731, %v3533, %v3534
      %v3536 = vrot.slane %v3431, 1
      %v3537 = vsel %vm731, %v3534, %v3536
      %v3538 = vrot.slane %v3432, 1
      %v3539 = vrot.slane %v3433, 1
      %v3540 = vsel %vm731, %v3538, %v3539
      %v3541 = vrot.slane %v3434, 1
      %v3542 = vsel %vm731, %v3539, %v3541
      %v3543 = vrot.slane %v3435, 1
      %v3544 = vrot.slane %v3436, 1
      %v3545 = vsel %vm731, %v3543, %v3544
      %v3546 = vrot.slane %v3437, 1
      %v3547 = vsel %vm731, %v3544, %v3546
      %v3548 = vrot.slane %v3438, 1
      %v3549 = vrot.slane %v3439, 1
      %v3550 = vsel %vm731, %v3548, %v3549
      %v3551 = vrot.slane %v3440, 1
      %v3552 = vsel %vm731, %v3549, %v3551
      %v3553 = vrot.slane %v3441, 1
      %v3554 = vrot.slane %v3442, 1
      %v3555 = vsel %vm731, %v3553, %v3554
      %v3556 = vrot.slane %v3443, 1
      %v3557 = vsel %vm731, %v3554, %v3556
      %v3558 = vrot.slane %v3444, 1
      %v3559 = vrot.slane %v3445, 1
      %v3560 = vsel %vm731, %v3558, %v3559
      %v3561 = vrot.slane %v3446, 1
      %v3562 = vsel %vm731, %v3559, %v3561
      %v3563 = vrot.slane %v3447, 1
      %v3564 = vrot.slane %v3448, 1
      %v3565 = vsel %vm731, %v3563, %v3564
      %v3566 = vrot.slane %v3449, 1
      %v3567 = vsel %vm731, %v3564, %v3566
      %v3568 = vrot.slane %v3450, 1
      %v3569 = vrot.slane %v3451, 1
      %v3570 = vsel %vm731, %v3568, %v3569
      %v3571 = vrot.slane %v3452, 1
      %v3572 = vsel %vm731, %v3569, %v3571
      %v3573 = vrot.slane %v3453, 1
      %v3574 = vrot.slane %v3454, 1
      %v3575 = vsel %vm731, %v3573, %v3574
      %v3576 = vrot.slane %v3455, 1
      %v3577 = vsel %vm731, %v3574, %v3576
      %v3578 = vrot.slane %v3456, 1
      %v3579 = vrot.slane %v3457, 1
      %v3580 = vsel %vm731, %v3578, %v3579
      %v3581 = vrot.slane %v3458, 1
      %v3582 = vsel %vm731, %v3579, %v3581
      %v3583 = vrot.slane %v3459, 1
      %v3584 = vrot.slane %v3460, 1
      %v3585 = vsel %vm731, %v3583, %v3584
      %v3586 = vrot.slane %v3461, 1
      %v3587 = vsel %vm731, %v3584, %v3586
      %v3588 = vrot.slane %v3462, 1
      %v3589 = vrot.slane %v3463, 1
      %v3590 = vsel %vm731, %v3588, %v3589
      %v3591 = vrot.slane %v3464, 1
      %v3592 = vsel %vm731, %v3589, %v3591
      %v3625 = vadd.f32 %v3381, %v3515
      %v3626 = vadd.f32 %v3382, %v3517
      %v3627 = vadd.f32 %v3383, %v3520
      %v3628 = vadd.f32 %v3384, %v3522
      %v3629 = vadd.f32 %v3385, %v3525
      %v3630 = vadd.f32 %v3386, %v3527
      %v3631 = vadd.f32 %v3387, %v3530
      %v3632 = vadd.f32 %v3388, %v3532
      %v3633 = vadd.f32 %v3389, %v3535
      %v3634 = vadd.f32 %v3390, %v3537
      %v3635 = vadd.f32 %v3391, %v3540
      %v3636 = vadd.f32 %v3392, %v3542
      %v3637 = vadd.f32 %v3393, %v3545
      %v3638 = vadd.f32 %v3394, %v3547
      %v3639 = vadd.f32 %v3395, %v3550
      %v3640 = vadd.f32 %v3396, %v3552
      %v3641 = vadd.f32 %v3397, %v3555
      %v3642 = vadd.f32 %v3398, %v3557
      %v3643 = vadd.f32 %v3399, %v3560
      %v3644 = vadd.f32 %v3400, %v3562
      %v3645 = vadd.f32 %v3401, %v3565
      %v3646 = vadd.f32 %v3402, %v3567
      %v3647 = vadd.f32 %v3403, %v3570
      %v3648 = vadd.f32 %v3404, %v3572
      %v3649 = vadd.f32 %v3405, %v3575
      %v3650 = vadd.f32 %v3406, %v3577
      %v3651 = vadd.f32 %v3407, %v3580
      %v3652 = vadd.f32 %v3408, %v3582
      %v3653 = vadd.f32 %v3409, %v3585
      %v3654 = vadd.f32 %v3410, %v3587
      %v3655 = vadd.f32 %v3411, %v3590
      %v3656 = vadd.f32 %v3412, %v3592
      %v3657 = vlaneseq
      %v3658 = vshrl.u32 %v3657, 7
      %v3659 = vsub.s32 1, %v3658
      %v3660 = vrot.slane %v399, %v3659
      %v3661 = vmul.f32 %v461, %v3660
      %v3662 = vmul.f32 %v462, %v3660
      %v3663 = vmul.f32 %v463, %v3660
      %v3664 = vmul.f32 %v464, %v3660
      %v3665 = vmul.f32 %v465, %v3660
      %v3666 = vmul.f32 %v466, %v3660
      %v3667 = vmul.f32 %v467, %v3660
      %v3668 = vmul.f32 %v468, %v3660
      %v3669 = vmul.f32 %v469, %v3660
      %v3670 = vmul.f32 %v470, %v3660
      %v3671 = vmul.f32 %v471, %v3660
      %v3672 = vmul.f32 %v472, %v3660
      %v3673 = vmul.f32 %v473, %v3660
      %v3674 = vmul.f32 %v474, %v3660
      %v3675 = vmul.f32 %v475, %v3660
      %v3676 = vmul.f32 %v476, %v3660
      %v3677 = vmul.f32 %v477, %v3660
      %v3678 = vmul.f32 %v478, %v3660
      %v3679 = vmul.f32 %v479, %v3660
      %v3680 = vmul.f32 %v480, %v3660
      %v3681 = vmul.f32 %v481, %v3660
      %v3682 = vmul.f32 %v482, %v3660
      %v3683 = vmul.f32 %v483, %v3660
      %v3684 = vmul.f32 %v484, %v3660
      %v3685 = vmul.f32 %v485, %v3660
      %v3686 = vmul.f32 %v486, %v3660
      %v3687 = vmul.f32 %v487, %v3660
      %v3688 = vmul.f32 %v488, %v3660
      %v3689 = vmul.f32 %v489, %v3660
      %v3690 = vmul.f32 %v490, %v3660
      %v3691 = vmul.f32 %v491, %v3660
      %v3692 = vmul.f32 %v492, %v3660
      %v3693 = vmul.f32 %v493, %v3660
      %v3694 = vmul.f32 %v494, %v3660
      %v3695 = vmul.f32 %v495, %v3660
      %v3696 = vmul.f32 %v496, %v3660
      %v3697 = vmul.f32 %v497, %v3660
      %v3698 = vmul.f32 %v498, %v3660
      %v3699 = vmul.f32 %v499, %v3660
      %v3700 = vmul.f32 %v500, %v3660
      %v3701 = vmul.f32 %v501, %v3660
      %v3702 = vmul.f32 %v502, %v3660
      %v3703 = vmul.f32 %v503, %v3660
      %v3704 = vmul.f32 %v504, %v3660
      %v3705 = vmul.f32 %v505, %v3660
      %v3706 = vmul.f32 %v506, %v3660
      %v3707 = vmul.f32 %v507, %v3660
      %v3708 = vmul.f32 %v508, %v3660
      %v3757 = vrot.slane %v3661, 2
      %v3758 = vrot.slane %v3662, 2
      %v3759 = vsel %vm976, %v3757, %v3758
      %v3760 = vrot.slane %v3663, 2
      %v3761 = vsel %vm976, %v3758, %v3760
      %v3762 = vrot.slane %v3664, 2
      %v3763 = vrot.slane %v3665, 2
      %v3764 = vsel %vm976, %v3762, %v3763
      %v3765 = vrot.slane %v3666, 2
      %v3766 = vsel %vm976, %v3763, %v3765
      %v3767 = vrot.slane %v3667, 2
      %v3768 = vrot.slane %v3668, 2
      %v3769 = vsel %vm976, %v3767, %v3768
      %v3770 = vrot.slane %v3669, 2
      %v3771 = vsel %vm976, %v3768, %v3770
      %v3772 = vrot.slane %v3670, 2
      %v3773 = vrot.slane %v3671, 2
      %v3774 = vsel %vm976, %v3772, %v3773
      %v3775 = vrot.slane %v3672, 2
      %v3776 = vsel %vm976, %v3773, %v3775
      %v3777 = vrot.slane %v3673, 2
      %v3778 = vrot.slane %v3674, 2
      %v3779 = vsel %vm976, %v3777, %v3778
      %v3780 = vrot.slane %v3675, 2
      %v3781 = vsel %vm976, %v3778, %v3780
      %v3782 = vrot.slane %v3676, 2
      %v3783 = vrot.slane %v3677, 2
      %v3784 = vsel %vm976, %v3782, %v3783
      %v3785 = vrot.slane %v3678, 2
      %v3786 = vsel %vm976, %v3783, %v3785
      %v3787 = vrot.slane %v3679, 2
      %v3788 = vrot.slane %v3680, 2
      %v3789 = vsel %vm976, %v3787, %v3788
      %v3790 = vrot.slane %v3681, 2
      %v3791 = vsel %vm976, %v3788, %v3790
      %v3792 = vrot.slane %v3682, 2
      %v3793 = vrot.slane %v3683, 2
      %v3794 = vsel %vm976, %v3792, %v3793
      %v3795 = vrot.slane %v3684, 2
      %v3796 = vsel %vm976, %v3793, %v3795
      %v3797 = vrot.slane %v3685, 2
      %v3798 = vrot.slane %v3686, 2
      %v3799 = vsel %vm976, %v3797, %v3798
      %v3800 = vrot.slane %v3687, 2
      %v3801 = vsel %vm976, %v3798, %v3800
      %v3802 = vrot.slane %v3688, 2
      %v3803 = vrot.slane %v3689, 2
      %v3804 = vsel %vm976, %v3802, %v3803
      %v3805 = vrot.slane %v3690, 2
      %v3806 = vsel %vm976, %v3803, %v3805
      %v3807 = vrot.slane %v3691, 2
      %v3808 = vrot.slane %v3692, 2
      %v3809 = vsel %vm976, %v3807, %v3808
      %v3810 = vrot.slane %v3693, 2
      %v3811 = vsel %vm976, %v3808, %v3810
      %v3812 = vrot.slane %v3694, 2
      %v3813 = vrot.slane %v3695, 2
      %v3814 = vsel %vm976, %v3812, %v3813
      %v3815 = vrot.slane %v3696, 2
      %v3816 = vsel %vm976, %v3813, %v3815
      %v3817 = vrot.slane %v3697, 2
      %v3818 = vrot.slane %v3698, 2
      %v3819 = vsel %vm976, %v3817, %v3818
      %v3820 = vrot.slane %v3699, 2
      %v3821 = vsel %vm976, %v3818, %v3820
      %v3822 = vrot.slane %v3700, 2
      %v3823 = vrot.slane %v3701, 2
      %v3824 = vsel %vm976, %v3822, %v3823
      %v3825 = vrot.slane %v3702, 2
      %v3826 = vsel %vm976, %v3823, %v3825
      %v3827 = vrot.slane %v3703, 2
      %v3828 = vrot.slane %v3704, 2
      %v3829 = vsel %vm976, %v3827, %v3828
      %v3830 = vrot.slane %v3705, 2
      %v3831 = vsel %vm976, %v3828, %v3830
      %v3832 = vrot.slane %v3706, 2
      %v3833 = vrot.slane %v3707, 2
      %v3834 = vsel %vm976, %v3832, %v3833
      %v3835 = vrot.slane %v3708, 2
      %v3836 = vsel %vm976, %v3833, %v3835
      %v3869 = vadd.f32 %v3625, %v3759
      %v3870 = vadd.f32 %v3626, %v3761
      %v3871 = vadd.f32 %v3627, %v3764
      %v3872 = vadd.f32 %v3628, %v3766
      %v3873 = vadd.f32 %v3629, %v3769
      %v3874 = vadd.f32 %v3630, %v3771
      %v3875 = vadd.f32 %v3631, %v3774
      %v3876 = vadd.f32 %v3632, %v3776
      %v3877 = vadd.f32 %v3633, %v3779
      %v3878 = vadd.f32 %v3634, %v3781
      %v3879 = vadd.f32 %v3635, %v3784
      %v3880 = vadd.f32 %v3636, %v3786
      %v3881 = vadd.f32 %v3637, %v3789
      %v3882 = vadd.f32 %v3638, %v3791
      %v3883 = vadd.f32 %v3639, %v3794
      %v3884 = vadd.f32 %v3640, %v3796
      %v3885 = vadd.f32 %v3641, %v3799
      %v3886 = vadd.f32 %v3642, %v3801
      %v3887 = vadd.f32 %v3643, %v3804
      %v3888 = vadd.f32 %v3644, %v3806
      %v3889 = vadd.f32 %v3645, %v3809
      %v3890 = vadd.f32 %v3646, %v3811
      %v3891 = vadd.f32 %v3647, %v3814
      %v3892 = vadd.f32 %v3648, %v3816
      %v3893 = vadd.f32 %v3649, %v3819
      %v3894 = vadd.f32 %v3650, %v3821
      %v3895 = vadd.f32 %v3651, %v3824
      %v3896 = vadd.f32 %v3652, %v3826
      %v3897 = vadd.f32 %v3653, %v3829
      %v3898 = vadd.f32 %v3654, %v3831
      %v3899 = vadd.f32 %v3655, %v3834
      %v3900 = vadd.f32 %v3656, %v3836
      %v3901 = vlaneseq
      %v3902 = vshrl.u32 %v3901, 7
      %v3903 = vsub.s32 2, %v3902
      %v3904 = vrot.slane %v399, %v3903
      %v3905 = vmul.f32 %v509, %v3904
      %v3906 = vmul.f32 %v510, %v3904
      %v3907 = vmul.f32 %v512, %v3904
      %v3908 = vmul.f32 %v513, %v3904
      %v3909 = vmul.f32 %v515, %v3904
      %v3910 = vmul.f32 %v516, %v3904
      %v3911 = vmul.f32 %v518, %v3904
      %v3912 = vmul.f32 %v519, %v3904
      %v3913 = vmul.f32 %v521, %v3904
      %v3914 = vmul.f32 %v522, %v3904
      %v3915 = vmul.f32 %v524, %v3904
      %v3916 = vmul.f32 %v525, %v3904
      %v3917 = vmul.f32 %v527, %v3904
      %v3918 = vmul.f32 %v528, %v3904
      %v3919 = vmul.f32 %v530, %v3904
      %v3920 = vmul.f32 %v531, %v3904
      %v3921 = vmul.f32 %v533, %v3904
      %v3922 = vmul.f32 %v534, %v3904
      %v3923 = vmul.f32 %v536, %v3904
      %v3924 = vmul.f32 %v537, %v3904
      %v3925 = vmul.f32 %v539, %v3904
      %v3926 = vmul.f32 %v540, %v3904
      %v3927 = vmul.f32 %v542, %v3904
      %v3928 = vmul.f32 %v543, %v3904
      %v3929 = vmul.f32 %v545, %v3904
      %v3930 = vmul.f32 %v546, %v3904
      %v3931 = vmul.f32 %v548, %v3904
      %v3932 = vmul.f32 %v549, %v3904
      %v3933 = vmul.f32 %v551, %v3904
      %v3934 = vmul.f32 %v552, %v3904
      %v3935 = vmul.f32 %v554, %v3904
      %v3936 = vmul.f32 %v555, %v3904
      %v3937 = vadd.f32 %v3869, %v3905
      %v3938 = vadd.f32 %v3870, %v3906
      %v3939 = vadd.f32 %v3871, %v3907
      %v3940 = vadd.f32 %v3872, %v3908
      %v3941 = vadd.f32 %v3873, %v3909
      %v3942 = vadd.f32 %v3874, %v3910
      %v3943 = vadd.f32 %v3875, %v3911
      %v3944 = vadd.f32 %v3876, %v3912
      %v3945 = vadd.f32 %v3877, %v3913
      %v3946 = vadd.f32 %v3878, %v3914
      %v3947 = vadd.f32 %v3879, %v3915
      %v3948 = vadd.f32 %v3880, %v3916
      %v3949 = vadd.f32 %v3881, %v3917
      %v3950 = vadd.f32 %v3882, %v3918
      %v3951 = vadd.f32 %v3883, %v3919
      %v3952 = vadd.f32 %v3884, %v3920
      %v3953 = vadd.f32 %v3885, %v3921
      %v3954 = vadd.f32 %v3886, %v3922
      %v3955 = vadd.f32 %v3887, %v3923
      %v3956 = vadd.f32 %v3888, %v3924
      %v3957 = vadd.f32 %v3889, %v3925
      %v3958 = vadd.f32 %v3890, %v3926
      %v3959 = vadd.f32 %v3891, %v3927
      %v3960 = vadd.f32 %v3892, %v3928
      %v3961 = vadd.f32 %v3893, %v3929
      %v3962 = vadd.f32 %v3894, %v3930
      %v3963 = vadd.f32 %v3895, %v3931
      %v3964 = vadd.f32 %v3896, %v3932
      %v3965 = vadd.f32 %v3897, %v3933
      %v3966 = vadd.f32 %v3898, %v3934
      %v3967 = vadd.f32 %v3899, %v3935
      %v3968 = vadd.f32 %v3900, %v3936
      %v3969 = vlaneseq
      %v3970 = vshrl.u32 %v3969, 7
      %v3971 = vsub.s32 3, %v3970
      %v3972 = vrot.slane %v399, %v3971
      %v3973 = vmul.f32 %v509, %v3972
      %v3974 = vmul.f32 %v510, %v3972
      %v3975 = vmul.f32 %v511, %v3972
      %v3976 = vmul.f32 %v512, %v3972
      %v3977 = vmul.f32 %v513, %v3972
      %v3978 = vmul.f32 %v514, %v3972
      %v3979 = vmul.f32 %v515, %v3972
      %v3980 = vmul.f32 %v516, %v3972
      %v3981 = vmul.f32 %v517, %v3972
      %v3982 = vmul.f32 %v518, %v3972
      %v3983 = vmul.f32 %v519, %v3972
      %v3984 = vmul.f32 %v520, %v3972
      %v3985 = vmul.f32 %v521, %v3972
      %v3986 = vmul.f32 %v522, %v3972
      %v3987 = vmul.f32 %v523, %v3972
      %v3988 = vmul.f32 %v524, %v3972
      %v3989 = vmul.f32 %v525, %v3972
      %v3990 = vmul.f32 %v526, %v3972
      %v3991 = vmul.f32 %v527, %v3972
      %v3992 = vmul.f32 %v528, %v3972
      %v3993 = vmul.f32 %v529, %v3972
      %v3994 = vmul.f32 %v530, %v3972
      %v3995 = vmul.f32 %v531, %v3972
      %v3996 = vmul.f32 %v532, %v3972
      %v3997 = vmul.f32 %v533, %v3972
      %v3998 = vmul.f32 %v534, %v3972
      %v3999 = vmul.f32 %v535, %v3972
      %v4000 = vmul.f32 %v536, %v3972
      %v4001 = vmul.f32 %v537, %v3972
      %v4002 = vmul.f32 %v538, %v3972
      %v4003 = vmul.f32 %v539, %v3972
      %v4004 = vmul.f32 %v540, %v3972
      %v4005 = vmul.f32 %v541, %v3972
      %v4006 = vmul.f32 %v542, %v3972
      %v4007 = vmul.f32 %v543, %v3972
      %v4008 = vmul.f32 %v544, %v3972
      %v4009 = vmul.f32 %v545, %v3972
      %v4010 = vmul.f32 %v546, %v3972
      %v4011 = vmul.f32 %v547, %v3972
      %v4012 = vmul.f32 %v548, %v3972
      %v4013 = vmul.f32 %v549, %v3972
      %v4014 = vmul.f32 %v550, %v3972
      %v4015 = vmul.f32 %v551, %v3972
      %v4016 = vmul.f32 %v552, %v3972
      %v4017 = vmul.f32 %v553, %v3972
      %v4018 = vmul.f32 %v554, %v3972
      %v4019 = vmul.f32 %v555, %v3972
      %v4020 = vmul.f32 %v556, %v3972
      %v4069 = vrot.slane %v3973, 1
      %v4070 = vrot.slane %v3974, 1
      %v4071 = vsel %vm731, %v4069, %v4070
      %v4072 = vrot.slane %v3975, 1
      %v4073 = vsel %vm731, %v4070, %v4072
      %v4074 = vrot.slane %v3976, 1
      %v4075 = vrot.slane %v3977, 1
      %v4076 = vsel %vm731, %v4074, %v4075
      %v4077 = vrot.slane %v3978, 1
      %v4078 = vsel %vm731, %v4075, %v4077
      %v4079 = vrot.slane %v3979, 1
      %v4080 = vrot.slane %v3980, 1
      %v4081 = vsel %vm731, %v4079, %v4080
      %v4082 = vrot.slane %v3981, 1
      %v4083 = vsel %vm731, %v4080, %v4082
      %v4084 = vrot.slane %v3982, 1
      %v4085 = vrot.slane %v3983, 1
      %v4086 = vsel %vm731, %v4084, %v4085
      %v4087 = vrot.slane %v3984, 1
      %v4088 = vsel %vm731, %v4085, %v4087
      %v4089 = vrot.slane %v3985, 1
      %v4090 = vrot.slane %v3986, 1
      %v4091 = vsel %vm731, %v4089, %v4090
      %v4092 = vrot.slane %v3987, 1
      %v4093 = vsel %vm731, %v4090, %v4092
      %v4094 = vrot.slane %v3988, 1
      %v4095 = vrot.slane %v3989, 1
      %v4096 = vsel %vm731, %v4094, %v4095
      %v4097 = vrot.slane %v3990, 1
      %v4098 = vsel %vm731, %v4095, %v4097
      %v4099 = vrot.slane %v3991, 1
      %v4100 = vrot.slane %v3992, 1
      %v4101 = vsel %vm731, %v4099, %v4100
      %v4102 = vrot.slane %v3993, 1
      %v4103 = vsel %vm731, %v4100, %v4102
      %v4104 = vrot.slane %v3994, 1
      %v4105 = vrot.slane %v3995, 1
      %v4106 = vsel %vm731, %v4104, %v4105
      %v4107 = vrot.slane %v3996, 1
      %v4108 = vsel %vm731, %v4105, %v4107
      %v4109 = vrot.slane %v3997, 1
      %v4110 = vrot.slane %v3998, 1
      %v4111 = vsel %vm731, %v4109, %v4110
      %v4112 = vrot.slane %v3999, 1
      %v4113 = vsel %vm731, %v4110, %v4112
      %v4114 = vrot.slane %v4000, 1
      %v4115 = vrot.slane %v4001, 1
      %v4116 = vsel %vm731, %v4114, %v4115
      %v4117 = vrot.slane %v4002, 1
      %v4118 = vsel %vm731, %v4115, %v4117
      %v4119 = vrot.slane %v4003, 1
      %v4120 = vrot.slane %v4004, 1
      %v4121 = vsel %vm731, %v4119, %v4120
      %v4122 = vrot.slane %v4005, 1
      %v4123 = vsel %vm731, %v4120, %v4122
      %v4124 = vrot.slane %v4006, 1
      %v4125 = vrot.slane %v4007, 1
      %v4126 = vsel %vm731, %v4124, %v4125
      %v4127 = vrot.slane %v4008, 1
      %v4128 = vsel %vm731, %v4125, %v4127
      %v4129 = vrot.slane %v4009, 1
      %v4130 = vrot.slane %v4010, 1
      %v4131 = vsel %vm731, %v4129, %v4130
      %v4132 = vrot.slane %v4011, 1
      %v4133 = vsel %vm731, %v4130, %v4132
      %v4134 = vrot.slane %v4012, 1
      %v4135 = vrot.slane %v4013, 1
      %v4136 = vsel %vm731, %v4134, %v4135
      %v4137 = vrot.slane %v4014, 1
      %v4138 = vsel %vm731, %v4135, %v4137
      %v4139 = vrot.slane %v4015, 1
      %v4140 = vrot.slane %v4016, 1
      %v4141 = vsel %vm731, %v4139, %v4140
      %v4142 = vrot.slane %v4017, 1
      %v4143 = vsel %vm731, %v4140, %v4142
      %v4144 = vrot.slane %v4018, 1
      %v4145 = vrot.slane %v4019, 1
      %v4146 = vsel %vm731, %v4144, %v4145
      %v4147 = vrot.slane %v4020, 1
      %v4148 = vsel %vm731, %v4145, %v4147
      %v4181 = vadd.f32 %v3937, %v4071
      %v4182 = vadd.f32 %v3938, %v4073
      %v4183 = vadd.f32 %v3939, %v4076
      %v4184 = vadd.f32 %v3940, %v4078
      %v4185 = vadd.f32 %v3941, %v4081
      %v4186 = vadd.f32 %v3942, %v4083
      %v4187 = vadd.f32 %v3943, %v4086
      %v4188 = vadd.f32 %v3944, %v4088
      %v4189 = vadd.f32 %v3945, %v4091
      %v4190 = vadd.f32 %v3946, %v4093
      %v4191 = vadd.f32 %v3947, %v4096
      %v4192 = vadd.f32 %v3948, %v4098
      %v4193 = vadd.f32 %v3949, %v4101
      %v4194 = vadd.f32 %v3950, %v4103
      %v4195 = vadd.f32 %v3951, %v4106
      %v4196 = vadd.f32 %v3952, %v4108
      %v4197 = vadd.f32 %v3953, %v4111
      %v4198 = vadd.f32 %v3954, %v4113
      %v4199 = vadd.f32 %v3955, %v4116
      %v4200 = vadd.f32 %v3956, %v4118
      %v4201 = vadd.f32 %v3957, %v4121
      %v4202 = vadd.f32 %v3958, %v4123
      %v4203 = vadd.f32 %v3959, %v4126
      %v4204 = vadd.f32 %v3960, %v4128
      %v4205 = vadd.f32 %v3961, %v4131
      %v4206 = vadd.f32 %v3962, %v4133
      %v4207 = vadd.f32 %v3963, %v4136
      %v4208 = vadd.f32 %v3964, %v4138
      %v4209 = vadd.f32 %v3965, %v4141
      %v4210 = vadd.f32 %v3966, %v4143
      %v4211 = vadd.f32 %v3967, %v4146
      %v4212 = vadd.f32 %v3968, %v4148
      %v4213 = vlaneseq
      %v4214 = vshrl.u32 %v4213, 7
      %v4215 = vsub.s32 4, %v4214
      %v4216 = vrot.slane %v399, %v4215
      %v4217 = vmul.f32 %v509, %v4216
      %v4218 = vmul.f32 %v510, %v4216
      %v4219 = vmul.f32 %v511, %v4216
      %v4220 = vmul.f32 %v512, %v4216
      %v4221 = vmul.f32 %v513, %v4216
      %v4222 = vmul.f32 %v514, %v4216
      %v4223 = vmul.f32 %v515, %v4216
      %v4224 = vmul.f32 %v516, %v4216
      %v4225 = vmul.f32 %v517, %v4216
      %v4226 = vmul.f32 %v518, %v4216
      %v4227 = vmul.f32 %v519, %v4216
      %v4228 = vmul.f32 %v520, %v4216
      %v4229 = vmul.f32 %v521, %v4216
      %v4230 = vmul.f32 %v522, %v4216
      %v4231 = vmul.f32 %v523, %v4216
      %v4232 = vmul.f32 %v524, %v4216
      %v4233 = vmul.f32 %v525, %v4216
      %v4234 = vmul.f32 %v526, %v4216
      %v4235 = vmul.f32 %v527, %v4216
      %v4236 = vmul.f32 %v528, %v4216
      %v4237 = vmul.f32 %v529, %v4216
      %v4238 = vmul.f32 %v530, %v4216
      %v4239 = vmul.f32 %v531, %v4216
      %v4240 = vmul.f32 %v532, %v4216
      %v4241 = vmul.f32 %v533, %v4216
      %v4242 = vmul.f32 %v534, %v4216
      %v4243 = vmul.f32 %v535, %v4216
      %v4244 = vmul.f32 %v536, %v4216
      %v4245 = vmul.f32 %v537, %v4216
      %v4246 = vmul.f32 %v538, %v4216
      %v4247 = vmul.f32 %v539, %v4216
      %v4248 = vmul.f32 %v540, %v4216
      %v4249 = vmul.f32 %v541, %v4216
      %v4250 = vmul.f32 %v542, %v4216
      %v4251 = vmul.f32 %v543, %v4216
      %v4252 = vmul.f32 %v544, %v4216
      %v4253 = vmul.f32 %v545, %v4216
      %v4254 = vmul.f32 %v546, %v4216
      %v4255 = vmul.f32 %v547, %v4216
      %v4256 = vmul.f32 %v548, %v4216
      %v4257 = vmul.f32 %v549, %v4216
      %v4258 = vmul.f32 %v550, %v4216
      %v4259 = vmul.f32 %v551, %v4216
      %v4260 = vmul.f32 %v552, %v4216
      %v4261 = vmul.f32 %v553, %v4216
      %v4262 = vmul.f32 %v554, %v4216
      %v4263 = vmul.f32 %v555, %v4216
      %v4264 = vmul.f32 %v556, %v4216
      %v4313 = vrot.slane %v4217, 2
      %v4314 = vrot.slane %v4218, 2
      %v4315 = vsel %vm976, %v4313, %v4314
      %v4316 = vrot.slane %v4219, 2
      %v4317 = vsel %vm976, %v4314, %v4316
      %v4318 = vrot.slane %v4220, 2
      %v4319 = vrot.slane %v4221, 2
      %v4320 = vsel %vm976, %v4318, %v4319
      %v4321 = vrot.slane %v4222, 2
      %v4322 = vsel %vm976, %v4319, %v4321
      %v4323 = vrot.slane %v4223, 2
      %v4324 = vrot.slane %v4224, 2
      %v4325 = vsel %vm976, %v4323, %v4324
      %v4326 = vrot.slane %v4225, 2
      %v4327 = vsel %vm976, %v4324, %v4326
      %v4328 = vrot.slane %v4226, 2
      %v4329 = vrot.slane %v4227, 2
      %v4330 = vsel %vm976, %v4328, %v4329
      %v4331 = vrot.slane %v4228, 2
      %v4332 = vsel %vm976, %v4329, %v4331
      %v4333 = vrot.slane %v4229, 2
      %v4334 = vrot.slane %v4230, 2
      %v4335 = vsel %vm976, %v4333, %v4334
      %v4336 = vrot.slane %v4231, 2
      %v4337 = vsel %vm976, %v4334, %v4336
      %v4338 = vrot.slane %v4232, 2
      %v4339 = vrot.slane %v4233, 2
      %v4340 = vsel %vm976, %v4338, %v4339
      %v4341 = vrot.slane %v4234, 2
      %v4342 = vsel %vm976, %v4339, %v4341
      %v4343 = vrot.slane %v4235, 2
      %v4344 = vrot.slane %v4236, 2
      %v4345 = vsel %vm976, %v4343, %v4344
      %v4346 = vrot.slane %v4237, 2
      %v4347 = vsel %vm976, %v4344, %v4346
      %v4348 = vrot.slane %v4238, 2
      %v4349 = vrot.slane %v4239, 2
      %v4350 = vsel %vm976, %v4348, %v4349
      %v4351 = vrot.slane %v4240, 2
      %v4352 = vsel %vm976, %v4349, %v4351
      %v4353 = vrot.slane %v4241, 2
      %v4354 = vrot.slane %v4242, 2
      %v4355 = vsel %vm976, %v4353, %v4354
      %v4356 = vrot.slane %v4243, 2
      %v4357 = vsel %vm976, %v4354, %v4356
      %v4358 = vrot.slane %v4244, 2
      %v4359 = vrot.slane %v4245, 2
      %v4360 = vsel %vm976, %v4358, %v4359
      %v4361 = vrot.slane %v4246, 2
      %v4362 = vsel %vm976, %v4359, %v4361
      %v4363 = vrot.slane %v4247, 2
      %v4364 = vrot.slane %v4248, 2
      %v4365 = vsel %vm976, %v4363, %v4364
      %v4366 = vrot.slane %v4249, 2
      %v4367 = vsel %vm976, %v4364, %v4366
      %v4368 = vrot.slane %v4250, 2
      %v4369 = vrot.slane %v4251, 2
      %v4370 = vsel %vm976, %v4368, %v4369
      %v4371 = vrot.slane %v4252, 2
      %v4372 = vsel %vm976, %v4369, %v4371
      %v4373 = vrot.slane %v4253, 2
      %v4374 = vrot.slane %v4254, 2
      %v4375 = vsel %vm976, %v4373, %v4374
      %v4376 = vrot.slane %v4255, 2
      %v4377 = vsel %vm976, %v4374, %v4376
      %v4378 = vrot.slane %v4256, 2
      %v4379 = vrot.slane %v4257, 2
      %v4380 = vsel %vm976, %v4378, %v4379
      %v4381 = vrot.slane %v4258, 2
      %v4382 = vsel %vm976, %v4379, %v4381
      %v4383 = vrot.slane %v4259, 2
      %v4384 = vrot.slane %v4260, 2
      %v4385 = vsel %vm976, %v4383, %v4384
      %v4386 = vrot.slane %v4261, 2
      %v4387 = vsel %vm976, %v4384, %v4386
      %v4388 = vrot.slane %v4262, 2
      %v4389 = vrot.slane %v4263, 2
      %v4390 = vsel %vm976, %v4388, %v4389
      %v4391 = vrot.slane %v4264, 2
      %v4392 = vsel %vm976, %v4389, %v4391
      %v4425 = vadd.f32 %v4181, %v4315
      %v4426 = vadd.f32 %v4182, %v4317
      %v4427 = vadd.f32 %v4183, %v4320
      %v4428 = vadd.f32 %v4184, %v4322
      %v4429 = vadd.f32 %v4185, %v4325
      %v4430 = vadd.f32 %v4186, %v4327
      %v4431 = vadd.f32 %v4187, %v4330
      %v4432 = vadd.f32 %v4188, %v4332
      %v4433 = vadd.f32 %v4189, %v4335
      %v4434 = vadd.f32 %v4190, %v4337
      %v4435 = vadd.f32 %v4191, %v4340
      %v4436 = vadd.f32 %v4192, %v4342
      %v4437 = vadd.f32 %v4193, %v4345
      %v4438 = vadd.f32 %v4194, %v4347
      %v4439 = vadd.f32 %v4195, %v4350
      %v4440 = vadd.f32 %v4196, %v4352
      %v4441 = vadd.f32 %v4197, %v4355
      %v4442 = vadd.f32 %v4198, %v4357
      %v4443 = vadd.f32 %v4199, %v4360
      %v4444 = vadd.f32 %v4200, %v4362
      %v4445 = vadd.f32 %v4201, %v4365
      %v4446 = vadd.f32 %v4202, %v4367
      %v4447 = vadd.f32 %v4203, %v4370
      %v4448 = vadd.f32 %v4204, %v4372
      %v4449 = vadd.f32 %v4205, %v4375
      %v4450 = vadd.f32 %v4206, %v4377
      %v4451 = vadd.f32 %v4207, %v4380
      %v4452 = vadd.f32 %v4208, %v4382
      %v4453 = vadd.f32 %v4209, %v4385
      %v4454 = vadd.f32 %v4210, %v4387
      %v4455 = vadd.f32 %v4211, %v4390
      %v4456 = vadd.f32 %v4212, %v4392
      %v4457 = vlaneseq
      %v4458 = vshrl.u32 %v4457, 7
      %v4459 = vsub.s32 5, %v4458
      %v4460 = vrot.slane %v399, %v4459
      %v4461 = vmul.f32 %v512, %v4460
      %v4462 = vmul.f32 %v513, %v4460
      %v4463 = vmul.f32 %v515, %v4460
      %v4464 = vmul.f32 %v516, %v4460
      %v4465 = vmul.f32 %v518, %v4460
      %v4466 = vmul.f32 %v519, %v4460
      %v4467 = vmul.f32 %v521, %v4460
      %v4468 = vmul.f32 %v522, %v4460
      %v4469 = vmul.f32 %v524, %v4460
      %v4470 = vmul.f32 %v525, %v4460
      %v4471 = vmul.f32 %v527, %v4460
      %v4472 = vmul.f32 %v528, %v4460
      %v4473 = vmul.f32 %v530, %v4460
      %v4474 = vmul.f32 %v531, %v4460
      %v4475 = vmul.f32 %v533, %v4460
      %v4476 = vmul.f32 %v534, %v4460
      %v4477 = vmul.f32 %v536, %v4460
      %v4478 = vmul.f32 %v537, %v4460
      %v4479 = vmul.f32 %v539, %v4460
      %v4480 = vmul.f32 %v540, %v4460
      %v4481 = vmul.f32 %v542, %v4460
      %v4482 = vmul.f32 %v543, %v4460
      %v4483 = vmul.f32 %v545, %v4460
      %v4484 = vmul.f32 %v546, %v4460
      %v4485 = vmul.f32 %v548, %v4460
      %v4486 = vmul.f32 %v549, %v4460
      %v4487 = vmul.f32 %v551, %v4460
      %v4488 = vmul.f32 %v552, %v4460
      %v4489 = vmul.f32 %v554, %v4460
      %v4490 = vmul.f32 %v555, %v4460
      %v4491 = vmul.f32 %v557, %v4460
      %v4492 = vmul.f32 %v558, %v4460
      %v4493 = vadd.f32 %v4425, %v4461
      %v4494 = vadd.f32 %v4426, %v4462
      %v4495 = vadd.f32 %v4427, %v4463
      %v4496 = vadd.f32 %v4428, %v4464
      %v4497 = vadd.f32 %v4429, %v4465
      %v4498 = vadd.f32 %v4430, %v4466
      %v4499 = vadd.f32 %v4431, %v4467
      %v4500 = vadd.f32 %v4432, %v4468
      %v4501 = vadd.f32 %v4433, %v4469
      %v4502 = vadd.f32 %v4434, %v4470
      %v4503 = vadd.f32 %v4435, %v4471
      %v4504 = vadd.f32 %v4436, %v4472
      %v4505 = vadd.f32 %v4437, %v4473
      %v4506 = vadd.f32 %v4438, %v4474
      %v4507 = vadd.f32 %v4439, %v4475
      %v4508 = vadd.f32 %v4440, %v4476
      %v4509 = vadd.f32 %v4441, %v4477
      %v4510 = vadd.f32 %v4442, %v4478
      %v4511 = vadd.f32 %v4443, %v4479
      %v4512 = vadd.f32 %v4444, %v4480
      %v4513 = vadd.f32 %v4445, %v4481
      %v4514 = vadd.f32 %v4446, %v4482
      %v4515 = vadd.f32 %v4447, %v4483
      %v4516 = vadd.f32 %v4448, %v4484
      %v4517 = vadd.f32 %v4449, %v4485
      %v4518 = vadd.f32 %v4450, %v4486
      %v4519 = vadd.f32 %v4451, %v4487
      %v4520 = vadd.f32 %v4452, %v4488
      %v4521 = vadd.f32 %v4453, %v4489
      %v4522 = vadd.f32 %v4454, %v4490
      %v4523 = vadd.f32 %v4455, %v4491
      %v4524 = vadd.f32 %v4456, %v4492
      %v4525 = vlaneseq
      %v4526 = vshrl.u32 %v4525, 7
      %v4527 = vsub.s32 6, %v4526
      %v4528 = vrot.slane %v399, %v4527
      %v4529 = vmul.f32 %v512, %v4528
      %v4530 = vmul.f32 %v513, %v4528
      %v4531 = vmul.f32 %v514, %v4528
      %v4532 = vmul.f32 %v515, %v4528
      %v4533 = vmul.f32 %v516, %v4528
      %v4534 = vmul.f32 %v517, %v4528
      %v4535 = vmul.f32 %v518, %v4528
      %v4536 = vmul.f32 %v519, %v4528
      %v4537 = vmul.f32 %v520, %v4528
      %v4538 = vmul.f32 %v521, %v4528
      %v4539 = vmul.f32 %v522, %v4528
      %v4540 = vmul.f32 %v523, %v4528
      %v4541 = vmul.f32 %v524, %v4528
      %v4542 = vmul.f32 %v525, %v4528
      %v4543 = vmul.f32 %v526, %v4528
      %v4544 = vmul.f32 %v527, %v4528
      %v4545 = vmul.f32 %v528, %v4528
      %v4546 = vmul.f32 %v529, %v4528
      %v4547 = vmul.f32 %v530, %v4528
      %v4548 = vmul.f32 %v531, %v4528
      %v4549 = vmul.f32 %v532, %v4528
      %v4550 = vmul.f32 %v533, %v4528
      %v4551 = vmul.f32 %v534, %v4528
      %v4552 = vmul.f32 %v535, %v4528
      %v4553 = vmul.f32 %v536, %v4528
      %v4554 = vmul.f32 %v537, %v4528
      %v4555 = vmul.f32 %v538, %v4528
      %v4556 = vmul.f32 %v539, %v4528
      %v4557 = vmul.f32 %v540, %v4528
      %v4558 = vmul.f32 %v541, %v4528
      %v4559 = vmul.f32 %v542, %v4528
      %v4560 = vmul.f32 %v543, %v4528
      %v4561 = vmul.f32 %v544, %v4528
      %v4562 = vmul.f32 %v545, %v4528
      %v4563 = vmul.f32 %v546, %v4528
      %v4564 = vmul.f32 %v547, %v4528
      %v4565 = vmul.f32 %v548, %v4528
      %v4566 = vmul.f32 %v549, %v4528
      %v4567 = vmul.f32 %v550, %v4528
      %v4568 = vmul.f32 %v551, %v4528
      %v4569 = vmul.f32 %v552, %v4528
      %v4570 = vmul.f32 %v553, %v4528
      %v4571 = vmul.f32 %v554, %v4528
      %v4572 = vmul.f32 %v555, %v4528
      %v4573 = vmul.f32 %v556, %v4528
      %v4574 = vmul.f32 %v557, %v4528
      %v4575 = vmul.f32 %v558, %v4528
      %v4576 = vmul.f32 %v559, %v4528
      %v4625 = vrot.slane %v4529, 1
      %v4626 = vrot.slane %v4530, 1
      %v4627 = vsel %vm731, %v4625, %v4626
      %v4628 = vrot.slane %v4531, 1
      %v4629 = vsel %vm731, %v4626, %v4628
      %v4630 = vrot.slane %v4532, 1
      %v4631 = vrot.slane %v4533, 1
      %v4632 = vsel %vm731, %v4630, %v4631
      %v4633 = vrot.slane %v4534, 1
      %v4634 = vsel %vm731, %v4631, %v4633
      %v4635 = vrot.slane %v4535, 1
      %v4636 = vrot.slane %v4536, 1
      %v4637 = vsel %vm731, %v4635, %v4636
      %v4638 = vrot.slane %v4537, 1
      %v4639 = vsel %vm731, %v4636, %v4638
      %v4640 = vrot.slane %v4538, 1
      %v4641 = vrot.slane %v4539, 1
      %v4642 = vsel %vm731, %v4640, %v4641
      %v4643 = vrot.slane %v4540, 1
      %v4644 = vsel %vm731, %v4641, %v4643
      %v4645 = vrot.slane %v4541, 1
      %v4646 = vrot.slane %v4542, 1
      %v4647 = vsel %vm731, %v4645, %v4646
      %v4648 = vrot.slane %v4543, 1
      %v4649 = vsel %vm731, %v4646, %v4648
      %v4650 = vrot.slane %v4544, 1
      %v4651 = vrot.slane %v4545, 1
      %v4652 = vsel %vm731, %v4650, %v4651
      %v4653 = vrot.slane %v4546, 1
      %v4654 = vsel %vm731, %v4651, %v4653
      %v4655 = vrot.slane %v4547, 1
      %v4656 = vrot.slane %v4548, 1
      %v4657 = vsel %vm731, %v4655, %v4656
      %v4658 = vrot.slane %v4549, 1
      %v4659 = vsel %vm731, %v4656, %v4658
      %v4660 = vrot.slane %v4550, 1
      %v4661 = vrot.slane %v4551, 1
      %v4662 = vsel %vm731, %v4660, %v4661
      %v4663 = vrot.slane %v4552, 1
      %v4664 = vsel %vm731, %v4661, %v4663
      %v4665 = vrot.slane %v4553, 1
      %v4666 = vrot.slane %v4554, 1
      %v4667 = vsel %vm731, %v4665, %v4666
      %v4668 = vrot.slane %v4555, 1
      %v4669 = vsel %vm731, %v4666, %v4668
      %v4670 = vrot.slane %v4556, 1
      %v4671 = vrot.slane %v4557, 1
      %v4672 = vsel %vm731, %v4670, %v4671
      %v4673 = vrot.slane %v4558, 1
      %v4674 = vsel %vm731, %v4671, %v4673
      %v4675 = vrot.slane %v4559, 1
      %v4676 = vrot.slane %v4560, 1
      %v4677 = vsel %vm731, %v4675, %v4676
      %v4678 = vrot.slane %v4561, 1
      %v4679 = vsel %vm731, %v4676, %v4678
      %v4680 = vrot.slane %v4562, 1
      %v4681 = vrot.slane %v4563, 1
      %v4682 = vsel %vm731, %v4680, %v4681
      %v4683 = vrot.slane %v4564, 1
      %v4684 = vsel %vm731, %v4681, %v4683
      %v4685 = vrot.slane %v4565, 1
      %v4686 = vrot.slane %v4566, 1
      %v4687 = vsel %vm731, %v4685, %v4686
      %v4688 = vrot.slane %v4567, 1
      %v4689 = vsel %vm731, %v4686, %v4688
      %v4690 = vrot.slane %v4568, 1
      %v4691 = vrot.slane %v4569, 1
      %v4692 = vsel %vm731, %v4690, %v4691
      %v4693 = vrot.slane %v4570, 1
      %v4694 = vsel %vm731, %v4691, %v4693
      %v4695 = vrot.slane %v4571, 1
      %v4696 = vrot.slane %v4572, 1
      %v4697 = vsel %vm731, %v4695, %v4696
      %v4698 = vrot.slane %v4573, 1
      %v4699 = vsel %vm731, %v4696, %v4698
      %v4700 = vrot.slane %v4574, 1
      %v4701 = vrot.slane %v4575, 1
      %v4702 = vsel %vm731, %v4700, %v4701
      %v4703 = vrot.slane %v4576, 1
      %v4704 = vsel %vm731, %v4701, %v4703
      %v4737 = vadd.f32 %v4493, %v4627
      %v4738 = vadd.f32 %v4494, %v4629
      %v4739 = vadd.f32 %v4495, %v4632
      %v4740 = vadd.f32 %v4496, %v4634
      %v4741 = vadd.f32 %v4497, %v4637
      %v4742 = vadd.f32 %v4498, %v4639
      %v4743 = vadd.f32 %v4499, %v4642
      %v4744 = vadd.f32 %v4500, %v4644
      %v4745 = vadd.f32 %v4501, %v4647
      %v4746 = vadd.f32 %v4502, %v4649
      %v4747 = vadd.f32 %v4503, %v4652
      %v4748 = vadd.f32 %v4504, %v4654
      %v4749 = vadd.f32 %v4505, %v4657
      %v4750 = vadd.f32 %v4506, %v4659
      %v4751 = vadd.f32 %v4507, %v4662
      %v4752 = vadd.f32 %v4508, %v4664
      %v4753 = vadd.f32 %v4509, %v4667
      %v4754 = vadd.f32 %v4510, %v4669
      %v4755 = vadd.f32 %v4511, %v4672
      %v4756 = vadd.f32 %v4512, %v4674
      %v4757 = vadd.f32 %v4513, %v4677
      %v4758 = vadd.f32 %v4514, %v4679
      %v4759 = vadd.f32 %v4515, %v4682
      %v4760 = vadd.f32 %v4516, %v4684
      %v4761 = vadd.f32 %v4517, %v4687
      %v4762 = vadd.f32 %v4518, %v4689
      %v4763 = vadd.f32 %v4519, %v4692
      %v4764 = vadd.f32 %v4520, %v4694
      %v4765 = vadd.f32 %v4521, %v4697
      %v4766 = vadd.f32 %v4522, %v4699
      %v4767 = vadd.f32 %v4523, %v4702
      %v4768 = vadd.f32 %v4524, %v4704
      %v4769 = vlaneseq
      %v4770 = vshrl.u32 %v4769, 7
      %v4771 = vsub.s32 7, %v4770
      %v4772 = vrot.slane %v399, %v4771
      %v4773 = vmul.f32 %v512, %v4772
      %v4774 = vmul.f32 %v513, %v4772
      %v4775 = vmul.f32 %v514, %v4772
      %v4776 = vmul.f32 %v515, %v4772
      %v4777 = vmul.f32 %v516, %v4772
      %v4778 = vmul.f32 %v517, %v4772
      %v4779 = vmul.f32 %v518, %v4772
      %v4780 = vmul.f32 %v519, %v4772
      %v4781 = vmul.f32 %v520, %v4772
      %v4782 = vmul.f32 %v521, %v4772
      %v4783 = vmul.f32 %v522, %v4772
      %v4784 = vmul.f32 %v523, %v4772
      %v4785 = vmul.f32 %v524, %v4772
      %v4786 = vmul.f32 %v525, %v4772
      %v4787 = vmul.f32 %v526, %v4772
      %v4788 = vmul.f32 %v527, %v4772
      %v4789 = vmul.f32 %v528, %v4772
      %v4790 = vmul.f32 %v529, %v4772
      %v4791 = vmul.f32 %v530, %v4772
      %v4792 = vmul.f32 %v531, %v4772
      %v4793 = vmul.f32 %v532, %v4772
      %v4794 = vmul.f32 %v533, %v4772
      %v4795 = vmul.f32 %v534, %v4772
      %v4796 = vmul.f32 %v535, %v4772
      %v4797 = vmul.f32 %v536, %v4772
      %v4798 = vmul.f32 %v537, %v4772
      %v4799 = vmul.f32 %v538, %v4772
      %v4800 = vmul.f32 %v539, %v4772
      %v4801 = vmul.f32 %v540, %v4772
      %v4802 = vmul.f32 %v541, %v4772
      %v4803 = vmul.f32 %v542, %v4772
      %v4804 = vmul.f32 %v543, %v4772
      %v4805 = vmul.f32 %v544, %v4772
      %v4806 = vmul.f32 %v545, %v4772
      %v4807 = vmul.f32 %v546, %v4772
      %v4808 = vmul.f32 %v547, %v4772
      %v4809 = vmul.f32 %v548, %v4772
      %v4810 = vmul.f32 %v549, %v4772
      %v4811 = vmul.f32 %v550, %v4772
      %v4812 = vmul.f32 %v551, %v4772
      %v4813 = vmul.f32 %v552, %v4772
      %v4814 = vmul.f32 %v553, %v4772
      %v4815 = vmul.f32 %v554, %v4772
      %v4816 = vmul.f32 %v555, %v4772
      %v4817 = vmul.f32 %v556, %v4772
      %v4818 = vmul.f32 %v557, %v4772
      %v4819 = vmul.f32 %v558, %v4772
      %v4820 = vmul.f32 %v559, %v4772
      %v4869 = vrot.slane %v4773, 2
      %v4870 = vrot.slane %v4774, 2
      %v4871 = vsel %vm976, %v4869, %v4870
      %v4872 = vrot.slane %v4775, 2
      %v4873 = vsel %vm976, %v4870, %v4872
      %v4874 = vrot.slane %v4776, 2
      %v4875 = vrot.slane %v4777, 2
      %v4876 = vsel %vm976, %v4874, %v4875
      %v4877 = vrot.slane %v4778, 2
      %v4878 = vsel %vm976, %v4875, %v4877
      %v4879 = vrot.slane %v4779, 2
      %v4880 = vrot.slane %v4780, 2
      %v4881 = vsel %vm976, %v4879, %v4880
      %v4882 = vrot.slane %v4781, 2
      %v4883 = vsel %vm976, %v4880, %v4882
      %v4884 = vrot.slane %v4782, 2
      %v4885 = vrot.slane %v4783, 2
      %v4886 = vsel %vm976, %v4884, %v4885
      %v4887 = vrot.slane %v4784, 2
      %v4888 = vsel %vm976, %v4885, %v4887
      %v4889 = vrot.slane %v4785, 2
      %v4890 = vrot.slane %v4786, 2
      %v4891 = vsel %vm976, %v4889, %v4890
      %v4892 = vrot.slane %v4787, 2
      %v4893 = vsel %vm976, %v4890, %v4892
      %v4894 = vrot.slane %v4788, 2
      %v4895 = vrot.slane %v4789, 2
      %v4896 = vsel %vm976, %v4894, %v4895
      %v4897 = vrot.slane %v4790, 2
      %v4898 = vsel %vm976, %v4895, %v4897
      %v4899 = vrot.slane %v4791, 2
      %v4900 = vrot.slane %v4792, 2
      %v4901 = vsel %vm976, %v4899, %v4900
      %v4902 = vrot.slane %v4793, 2
      %v4903 = vsel %vm976, %v4900, %v4902
      %v4904 = vrot.slane %v4794, 2
      %v4905 = vrot.slane %v4795, 2
      %v4906 = vsel %vm976, %v4904, %v4905
      %v4907 = vrot.slane %v4796, 2
      %v4908 = vsel %vm976, %v4905, %v4907
      %v4909 = vrot.slane %v4797, 2
      %v4910 = vrot.slane %v4798, 2
      %v4911 = vsel %vm976, %v4909, %v4910
      %v4912 = vrot.slane %v4799, 2
      %v4913 = vsel %vm976, %v4910, %v4912
      %v4914 = vrot.slane %v4800, 2
      %v4915 = vrot.slane %v4801, 2
      %v4916 = vsel %vm976, %v4914, %v4915
      %v4917 = vrot.slane %v4802, 2
      %v4918 = vsel %vm976, %v4915, %v4917
      %v4919 = vrot.slane %v4803, 2
      %v4920 = vrot.slane %v4804, 2
      %v4921 = vsel %vm976, %v4919, %v4920
      %v4922 = vrot.slane %v4805, 2
      %v4923 = vsel %vm976, %v4920, %v4922
      %v4924 = vrot.slane %v4806, 2
      %v4925 = vrot.slane %v4807, 2
      %v4926 = vsel %vm976, %v4924, %v4925
      %v4927 = vrot.slane %v4808, 2
      %v4928 = vsel %vm976, %v4925, %v4927
      %v4929 = vrot.slane %v4809, 2
      %v4930 = vrot.slane %v4810, 2
      %v4931 = vsel %vm976, %v4929, %v4930
      %v4932 = vrot.slane %v4811, 2
      %v4933 = vsel %vm976, %v4930, %v4932
      %v4934 = vrot.slane %v4812, 2
      %v4935 = vrot.slane %v4813, 2
      %v4936 = vsel %vm976, %v4934, %v4935
      %v4937 = vrot.slane %v4814, 2
      %v4938 = vsel %vm976, %v4935, %v4937
      %v4939 = vrot.slane %v4815, 2
      %v4940 = vrot.slane %v4816, 2
      %v4941 = vsel %vm976, %v4939, %v4940
      %v4942 = vrot.slane %v4817, 2
      %v4943 = vsel %vm976, %v4940, %v4942
      %v4944 = vrot.slane %v4818, 2
      %v4945 = vrot.slane %v4819, 2
      %v4946 = vsel %vm976, %v4944, %v4945
      %v4947 = vrot.slane %v4820, 2
      %v4948 = vsel %vm976, %v4945, %v4947
      %v4981 = vadd.f32 %v4737, %v4871
      %v4982 = vadd.f32 %v4738, %v4873
      %v4983 = vadd.f32 %v4739, %v4876
      %v4984 = vadd.f32 %v4740, %v4878
      %v4985 = vadd.f32 %v4741, %v4881
      %v4986 = vadd.f32 %v4742, %v4883
      %v4987 = vadd.f32 %v4743, %v4886
      %v4988 = vadd.f32 %v4744, %v4888
      %v4989 = vadd.f32 %v4745, %v4891
      %v4990 = vadd.f32 %v4746, %v4893
      %v4991 = vadd.f32 %v4747, %v4896
      %v4992 = vadd.f32 %v4748, %v4898
      %v4993 = vadd.f32 %v4749, %v4901
      %v4994 = vadd.f32 %v4750, %v4903
      %v4995 = vadd.f32 %v4751, %v4906
      %v4996 = vadd.f32 %v4752, %v4908
      %v4997 = vadd.f32 %v4753, %v4911
      %v4998 = vadd.f32 %v4754, %v4913
      %v4999 = vadd.f32 %v4755, %v4916
      %v5000 = vadd.f32 %v4756, %v4918
      %v5001 = vadd.f32 %v4757, %v4921
      %v5002 = vadd.f32 %v4758, %v4923
      %v5003 = vadd.f32 %v4759, %v4926
      %v5004 = vadd.f32 %v4760, %v4928
      %v5005 = vadd.f32 %v4761, %v4931
      %v5006 = vadd.f32 %v4762, %v4933
      %v5007 = vadd.f32 %v4763, %v4936
      %v5008 = vadd.f32 %v4764, %v4938
      %v5009 = vadd.f32 %v4765, %v4941
      %v5010 = vadd.f32 %v4766, %v4943
      %v5011 = vadd.f32 %v4767, %v4946
      %v5012 = vadd.f32 %v4768, %v4948
      %v5013 = vlaneseq
      %v5014 = vshrl.u32 %v5013, 7
      %v5015 = vsub.s32 0, %v5014
      %v5016 = vrot.slane %v400, %v5015
      %v5017 = vmul.f32 %v515, %v5016
      %v5018 = vmul.f32 %v516, %v5016
      %v5019 = vmul.f32 %v518, %v5016
      %v5020 = vmul.f32 %v519, %v5016
      %v5021 = vmul.f32 %v521, %v5016
      %v5022 = vmul.f32 %v522, %v5016
      %v5023 = vmul.f32 %v524, %v5016
      %v5024 = vmul.f32 %v525, %v5016
      %v5025 = vmul.f32 %v527, %v5016
      %v5026 = vmul.f32 %v528, %v5016
      %v5027 = vmul.f32 %v530, %v5016
      %v5028 = vmul.f32 %v531, %v5016
      %v5029 = vmul.f32 %v533, %v5016
      %v5030 = vmul.f32 %v534, %v5016
      %v5031 = vmul.f32 %v536, %v5016
      %v5032 = vmul.f32 %v537, %v5016
      %v5033 = vmul.f32 %v539, %v5016
      %v5034 = vmul.f32 %v540, %v5016
      %v5035 = vmul.f32 %v542, %v5016
      %v5036 = vmul.f32 %v543, %v5016
      %v5037 = vmul.f32 %v545, %v5016
      %v5038 = vmul.f32 %v546, %v5016
      %v5039 = vmul.f32 %v548, %v5016
      %v5040 = vmul.f32 %v549, %v5016
      %v5041 = vmul.f32 %v551, %v5016
      %v5042 = vmul.f32 %v552, %v5016
      %v5043 = vmul.f32 %v554, %v5016
      %v5044 = vmul.f32 %v555, %v5016
      %v5045 = vmul.f32 %v557, %v5016
      %v5046 = vmul.f32 %v558, %v5016
      %v5047 = vmul.f32 %v560, %v5016
      %v5048 = vmul.f32 %v561, %v5016
      %v5049 = vadd.f32 %v4981, %v5017
      %v5050 = vadd.f32 %v4982, %v5018
      %v5051 = vadd.f32 %v4983, %v5019
      %v5052 = vadd.f32 %v4984, %v5020
      %v5053 = vadd.f32 %v4985, %v5021
      %v5054 = vadd.f32 %v4986, %v5022
      %v5055 = vadd.f32 %v4987, %v5023
      %v5056 = vadd.f32 %v4988, %v5024
      %v5057 = vadd.f32 %v4989, %v5025
      %v5058 = vadd.f32 %v4990, %v5026
      %v5059 = vadd.f32 %v4991, %v5027
      %v5060 = vadd.f32 %v4992, %v5028
      %v5061 = vadd.f32 %v4993, %v5029
      %v5062 = vadd.f32 %v4994, %v5030
      %v5063 = vadd.f32 %v4995, %v5031
      %v5064 = vadd.f32 %v4996, %v5032
      %v5065 = vadd.f32 %v4997, %v5033
      %v5066 = vadd.f32 %v4998, %v5034
      %v5067 = vadd.f32 %v4999, %v5035
      %v5068 = vadd.f32 %v5000, %v5036
      %v5069 = vadd.f32 %v5001, %v5037
      %v5070 = vadd.f32 %v5002, %v5038
      %v5071 = vadd.f32 %v5003, %v5039
      %v5072 = vadd.f32 %v5004, %v5040
      %v5073 = vadd.f32 %v5005, %v5041
      %v5074 = vadd.f32 %v5006, %v5042
      %v5075 = vadd.f32 %v5007, %v5043
      %v5076 = vadd.f32 %v5008, %v5044
      %v5077 = vadd.f32 %v5009, %v5045
      %v5078 = vadd.f32 %v5010, %v5046
      %v5079 = vadd.f32 %v5011, %v5047
      %v5080 = vadd.f32 %v5012, %v5048
      %v5081 = vlaneseq
      %v5082 = vshrl.u32 %v5081, 7
      %v5083 = vsub.s32 1, %v5082
      %v5084 = vrot.slane %v400, %v5083
      %v5085 = vmul.f32 %v515, %v5084
      %v5086 = vmul.f32 %v516, %v5084
      %v5087 = vmul.f32 %v517, %v5084
      %v5088 = vmul.f32 %v518, %v5084
      %v5089 = vmul.f32 %v519, %v5084
      %v5090 = vmul.f32 %v520, %v5084
      %v5091 = vmul.f32 %v521, %v5084
      %v5092 = vmul.f32 %v522, %v5084
      %v5093 = vmul.f32 %v523, %v5084
      %v5094 = vmul.f32 %v524, %v5084
      %v5095 = vmul.f32 %v525, %v5084
      %v5096 = vmul.f32 %v526, %v5084
      %v5097 = vmul.f32 %v527, %v5084
      %v5098 = vmul.f32 %v528, %v5084
      %v5099 = vmul.f32 %v529, %v5084
      %v5100 = vmul.f32 %v530, %v5084
      %v5101 = vmul.f32 %v531, %v5084
      %v5102 = vmul.f32 %v532, %v5084
      %v5103 = vmul.f32 %v533, %v5084
      %v5104 = vmul.f32 %v534, %v5084
      %v5105 = vmul.f32 %v535, %v5084
      %v5106 = vmul.f32 %v536, %v5084
      %v5107 = vmul.f32 %v537, %v5084
      %v5108 = vmul.f32 %v538, %v5084
      %v5109 = vmul.f32 %v539, %v5084
      %v5110 = vmul.f32 %v540, %v5084
      %v5111 = vmul.f32 %v541, %v5084
      %v5112 = vmul.f32 %v542, %v5084
      %v5113 = vmul.f32 %v543, %v5084
      %v5114 = vmul.f32 %v544, %v5084
      %v5115 = vmul.f32 %v545, %v5084
      %v5116 = vmul.f32 %v546, %v5084
      %v5117 = vmul.f32 %v547, %v5084
      %v5118 = vmul.f32 %v548, %v5084
      %v5119 = vmul.f32 %v549, %v5084
      %v5120 = vmul.f32 %v550, %v5084
      %v5121 = vmul.f32 %v551, %v5084
      %v5122 = vmul.f32 %v552, %v5084
      %v5123 = vmul.f32 %v553, %v5084
      %v5124 = vmul.f32 %v554, %v5084
      %v5125 = vmul.f32 %v555, %v5084
      %v5126 = vmul.f32 %v556, %v5084
      %v5127 = vmul.f32 %v557, %v5084
      %v5128 = vmul.f32 %v558, %v5084
      %v5129 = vmul.f32 %v559, %v5084
      %v5130 = vmul.f32 %v560, %v5084
      %v5131 = vmul.f32 %v561, %v5084
      %v5132 = vmul.f32 %v562, %v5084
      %v5181 = vrot.slane %v5085, 1
      %v5182 = vrot.slane %v5086, 1
      %v5183 = vsel %vm731, %v5181, %v5182
      %v5184 = vrot.slane %v5087, 1
      %v5185 = vsel %vm731, %v5182, %v5184
      %v5186 = vrot.slane %v5088, 1
      %v5187 = vrot.slane %v5089, 1
      %v5188 = vsel %vm731, %v5186, %v5187
      %v5189 = vrot.slane %v5090, 1
      %v5190 = vsel %vm731, %v5187, %v5189
      %v5191 = vrot.slane %v5091, 1
      %v5192 = vrot.slane %v5092, 1
      %v5193 = vsel %vm731, %v5191, %v5192
      %v5194 = vrot.slane %v5093, 1
      %v5195 = vsel %vm731, %v5192, %v5194
      %v5196 = vrot.slane %v5094, 1
      %v5197 = vrot.slane %v5095, 1
      %v5198 = vsel %vm731, %v5196, %v5197
      %v5199 = vrot.slane %v5096, 1
      %v5200 = vsel %vm731, %v5197, %v5199
      %v5201 = vrot.slane %v5097, 1
      %v5202 = vrot.slane %v5098, 1
      %v5203 = vsel %vm731, %v5201, %v5202
      %v5204 = vrot.slane %v5099, 1
      %v5205 = vsel %vm731, %v5202, %v5204
      %v5206 = vrot.slane %v5100, 1
      %v5207 = vrot.slane %v5101, 1
      %v5208 = vsel %vm731, %v5206, %v5207
      %v5209 = vrot.slane %v5102, 1
      %v5210 = vsel %vm731, %v5207, %v5209
      %v5211 = vrot.slane %v5103, 1
      %v5212 = vrot.slane %v5104, 1
      %v5213 = vsel %vm731, %v5211, %v5212
      %v5214 = vrot.slane %v5105, 1
      %v5215 = vsel %vm731, %v5212, %v5214
      %v5216 = vrot.slane %v5106, 1
      %v5217 = vrot.slane %v5107, 1
      %v5218 = vsel %vm731, %v5216, %v5217
      %v5219 = vrot.slane %v5108, 1
      %v5220 = vsel %vm731, %v5217, %v5219
      %v5221 = vrot.slane %v5109, 1
      %v5222 = vrot.slane %v5110, 1
      %v5223 = vsel %vm731, %v5221, %v5222
      %v5224 = vrot.slane %v5111, 1
      %v5225 = vsel %vm731, %v5222, %v5224
      %v5226 = vrot.slane %v5112, 1
      %v5227 = vrot.slane %v5113, 1
      %v5228 = vsel %vm731, %v5226, %v5227
      %v5229 = vrot.slane %v5114, 1
      %v5230 = vsel %vm731, %v5227, %v5229
      %v5231 = vrot.slane %v5115, 1
      %v5232 = vrot.slane %v5116, 1
      %v5233 = vsel %vm731, %v5231, %v5232
      %v5234 = vrot.slane %v5117, 1
      %v5235 = vsel %vm731, %v5232, %v5234
      %v5236 = vrot.slane %v5118, 1
      %v5237 = vrot.slane %v5119, 1
      %v5238 = vsel %vm731, %v5236, %v5237
      %v5239 = vrot.slane %v5120, 1
      %v5240 = vsel %vm731, %v5237, %v5239
      %v5241 = vrot.slane %v5121, 1
      %v5242 = vrot.slane %v5122, 1
      %v5243 = vsel %vm731, %v5241, %v5242
      %v5244 = vrot.slane %v5123, 1
      %v5245 = vsel %vm731, %v5242, %v5244
      %v5246 = vrot.slane %v5124, 1
      %v5247 = vrot.slane %v5125, 1
      %v5248 = vsel %vm731, %v5246, %v5247
      %v5249 = vrot.slane %v5126, 1
      %v5250 = vsel %vm731, %v5247, %v5249
      %v5251 = vrot.slane %v5127, 1
      %v5252 = vrot.slane %v5128, 1
      %v5253 = vsel %vm731, %v5251, %v5252
      %v5254 = vrot.slane %v5129, 1
      %v5255 = vsel %vm731, %v5252, %v5254
      %v5256 = vrot.slane %v5130, 1
      %v5257 = vrot.slane %v5131, 1
      %v5258 = vsel %vm731, %v5256, %v5257
      %v5259 = vrot.slane %v5132, 1
      %v5260 = vsel %vm731, %v5257, %v5259
      %v5293 = vadd.f32 %v5049, %v5183
      %v5294 = vadd.f32 %v5050, %v5185
      %v5295 = vadd.f32 %v5051, %v5188
      %v5296 = vadd.f32 %v5052, %v5190
      %v5297 = vadd.f32 %v5053, %v5193
      %v5298 = vadd.f32 %v5054, %v5195
      %v5299 = vadd.f32 %v5055, %v5198
      %v5300 = vadd.f32 %v5056, %v5200
      %v5301 = vadd.f32 %v5057, %v5203
      %v5302 = vadd.f32 %v5058, %v5205
      %v5303 = vadd.f32 %v5059, %v5208
      %v5304 = vadd.f32 %v5060, %v5210
      %v5305 = vadd.f32 %v5061, %v5213
      %v5306 = vadd.f32 %v5062, %v5215
      %v5307 = vadd.f32 %v5063, %v5218
      %v5308 = vadd.f32 %v5064, %v5220
      %v5309 = vadd.f32 %v5065, %v5223
      %v5310 = vadd.f32 %v5066, %v5225
      %v5311 = vadd.f32 %v5067, %v5228
      %v5312 = vadd.f32 %v5068, %v5230
      %v5313 = vadd.f32 %v5069, %v5233
      %v5314 = vadd.f32 %v5070, %v5235
      %v5315 = vadd.f32 %v5071, %v5238
      %v5316 = vadd.f32 %v5072, %v5240
      %v5317 = vadd.f32 %v5073, %v5243
      %v5318 = vadd.f32 %v5074, %v5245
      %v5319 = vadd.f32 %v5075, %v5248
      %v5320 = vadd.f32 %v5076, %v5250
      %v5321 = vadd.f32 %v5077, %v5253
      %v5322 = vadd.f32 %v5078, %v5255
      %v5323 = vadd.f32 %v5079, %v5258
      %v5324 = vadd.f32 %v5080, %v5260
      %v5325 = vlaneseq
      %v5326 = vshrl.u32 %v5325, 7
      %v5327 = vsub.s32 2, %v5326
      %v5328 = vrot.slane %v400, %v5327
      %v5329 = vmul.f32 %v515, %v5328
      %v5330 = vmul.f32 %v516, %v5328
      %v5331 = vmul.f32 %v517, %v5328
      %v5332 = vmul.f32 %v518, %v5328
      %v5333 = vmul.f32 %v519, %v5328
      %v5334 = vmul.f32 %v520, %v5328
      %v5335 = vmul.f32 %v521, %v5328
      %v5336 = vmul.f32 %v522, %v5328
      %v5337 = vmul.f32 %v523, %v5328
      %v5338 = vmul.f32 %v524, %v5328
      %v5339 = vmul.f32 %v525, %v5328
      %v5340 = vmul.f32 %v526, %v5328
      %v5341 = vmul.f32 %v527, %v5328
      %v5342 = vmul.f32 %v528, %v5328
      %v5343 = vmul.f32 %v529, %v5328
      %v5344 = vmul.f32 %v530, %v5328
      %v5345 = vmul.f32 %v531, %v5328
      %v5346 = vmul.f32 %v532, %v5328
      %v5347 = vmul.f32 %v533, %v5328
      %v5348 = vmul.f32 %v534, %v5328
      %v5349 = vmul.f32 %v535, %v5328
      %v5350 = vmul.f32 %v536, %v5328
      %v5351 = vmul.f32 %v537, %v5328
      %v5352 = vmul.f32 %v538, %v5328
      %v5353 = vmul.f32 %v539, %v5328
      %v5354 = vmul.f32 %v540, %v5328
      %v5355 = vmul.f32 %v541, %v5328
      %v5356 = vmul.f32 %v542, %v5328
      %v5357 = vmul.f32 %v543, %v5328
      %v5358 = vmul.f32 %v544, %v5328
      %v5359 = vmul.f32 %v545, %v5328
      %v5360 = vmul.f32 %v546, %v5328
      %v5361 = vmul.f32 %v547, %v5328
      %v5362 = vmul.f32 %v548, %v5328
      %v5363 = vmul.f32 %v549, %v5328
      %v5364 = vmul.f32 %v550, %v5328
      %v5365 = vmul.f32 %v551, %v5328
      %v5366 = vmul.f32 %v552, %v5328
      %v5367 = vmul.f32 %v553, %v5328
      %v5368 = vmul.f32 %v554, %v5328
      %v5369 = vmul.f32 %v555, %v5328
      %v5370 = vmul.f32 %v556, %v5328
      %v5371 = vmul.f32 %v557, %v5328
      %v5372 = vmul.f32 %v558, %v5328
      %v5373 = vmul.f32 %v559, %v5328
      %v5374 = vmul.f32 %v560, %v5328
      %v5375 = vmul.f32 %v561, %v5328
      %v5376 = vmul.f32 %v562, %v5328
      %v5425 = vrot.slane %v5329, 2
      %v5426 = vrot.slane %v5330, 2
      %v5427 = vsel %vm976, %v5425, %v5426
      %v5428 = vrot.slane %v5331, 2
      %v5429 = vsel %vm976, %v5426, %v5428
      %v5430 = vrot.slane %v5332, 2
      %v5431 = vrot.slane %v5333, 2
      %v5432 = vsel %vm976, %v5430, %v5431
      %v5433 = vrot.slane %v5334, 2
      %v5434 = vsel %vm976, %v5431, %v5433
      %v5435 = vrot.slane %v5335, 2
      %v5436 = vrot.slane %v5336, 2
      %v5437 = vsel %vm976, %v5435, %v5436
      %v5438 = vrot.slane %v5337, 2
      %v5439 = vsel %vm976, %v5436, %v5438
      %v5440 = vrot.slane %v5338, 2
      %v5441 = vrot.slane %v5339, 2
      %v5442 = vsel %vm976, %v5440, %v5441
      %v5443 = vrot.slane %v5340, 2
      %v5444 = vsel %vm976, %v5441, %v5443
      %v5445 = vrot.slane %v5341, 2
      %v5446 = vrot.slane %v5342, 2
      %v5447 = vsel %vm976, %v5445, %v5446
      %v5448 = vrot.slane %v5343, 2
      %v5449 = vsel %vm976, %v5446, %v5448
      %v5450 = vrot.slane %v5344, 2
      %v5451 = vrot.slane %v5345, 2
      %v5452 = vsel %vm976, %v5450, %v5451
      %v5453 = vrot.slane %v5346, 2
      %v5454 = vsel %vm976, %v5451, %v5453
      %v5455 = vrot.slane %v5347, 2
      %v5456 = vrot.slane %v5348, 2
      %v5457 = vsel %vm976, %v5455, %v5456
      %v5458 = vrot.slane %v5349, 2
      %v5459 = vsel %vm976, %v5456, %v5458
      %v5460 = vrot.slane %v5350, 2
      %v5461 = vrot.slane %v5351, 2
      %v5462 = vsel %vm976, %v5460, %v5461
      %v5463 = vrot.slane %v5352, 2
      %v5464 = vsel %vm976, %v5461, %v5463
      %v5465 = vrot.slane %v5353, 2
      %v5466 = vrot.slane %v5354, 2
      %v5467 = vsel %vm976, %v5465, %v5466
      %v5468 = vrot.slane %v5355, 2
      %v5469 = vsel %vm976, %v5466, %v5468
      %v5470 = vrot.slane %v5356, 2
      %v5471 = vrot.slane %v5357, 2
      %v5472 = vsel %vm976, %v5470, %v5471
      %v5473 = vrot.slane %v5358, 2
      %v5474 = vsel %vm976, %v5471, %v5473
      %v5475 = vrot.slane %v5359, 2
      %v5476 = vrot.slane %v5360, 2
      %v5477 = vsel %vm976, %v5475, %v5476
      %v5478 = vrot.slane %v5361, 2
      %v5479 = vsel %vm976, %v5476, %v5478
      %v5480 = vrot.slane %v5362, 2
      %v5481 = vrot.slane %v5363, 2
      %v5482 = vsel %vm976, %v5480, %v5481
      %v5483 = vrot.slane %v5364, 2
      %v5484 = vsel %vm976, %v5481, %v5483
      %v5485 = vrot.slane %v5365, 2
      %v5486 = vrot.slane %v5366, 2
      %v5487 = vsel %vm976, %v5485, %v5486
      %v5488 = vrot.slane %v5367, 2
      %v5489 = vsel %vm976, %v5486, %v5488
      %v5490 = vrot.slane %v5368, 2
      %v5491 = vrot.slane %v5369, 2
      %v5492 = vsel %vm976, %v5490, %v5491
      %v5493 = vrot.slane %v5370, 2
      %v5494 = vsel %vm976, %v5491, %v5493
      %v5495 = vrot.slane %v5371, 2
      %v5496 = vrot.slane %v5372, 2
      %v5497 = vsel %vm976, %v5495, %v5496
      %v5498 = vrot.slane %v5373, 2
      %v5499 = vsel %vm976, %v5496, %v5498
      %v5500 = vrot.slane %v5374, 2
      %v5501 = vrot.slane %v5375, 2
      %v5502 = vsel %vm976, %v5500, %v5501
      %v5503 = vrot.slane %v5376, 2
      %v5504 = vsel %vm976, %v5501, %v5503
      %v5537 = vadd.f32 %v5293, %v5427
      %v5538 = vadd.f32 %v5294, %v5429
      %v5539 = vadd.f32 %v5295, %v5432
      %v5540 = vadd.f32 %v5296, %v5434
      %v5541 = vadd.f32 %v5297, %v5437
      %v5542 = vadd.f32 %v5298, %v5439
      %v5543 = vadd.f32 %v5299, %v5442
      %v5544 = vadd.f32 %v5300, %v5444
      %v5545 = vadd.f32 %v5301, %v5447
      %v5546 = vadd.f32 %v5302, %v5449
      %v5547 = vadd.f32 %v5303, %v5452
      %v5548 = vadd.f32 %v5304, %v5454
      %v5549 = vadd.f32 %v5305, %v5457
      %v5550 = vadd.f32 %v5306, %v5459
      %v5551 = vadd.f32 %v5307, %v5462
      %v5552 = vadd.f32 %v5308, %v5464
      %v5553 = vadd.f32 %v5309, %v5467
      %v5554 = vadd.f32 %v5310, %v5469
      %v5555 = vadd.f32 %v5311, %v5472
      %v5556 = vadd.f32 %v5312, %v5474
      %v5557 = vadd.f32 %v5313, %v5477
      %v5558 = vadd.f32 %v5314, %v5479
      %v5559 = vadd.f32 %v5315, %v5482
      %v5560 = vadd.f32 %v5316, %v5484
      %v5561 = vadd.f32 %v5317, %v5487
      %v5562 = vadd.f32 %v5318, %v5489
      %v5563 = vadd.f32 %v5319, %v5492
      %v5564 = vadd.f32 %v5320, %v5494
      %v5565 = vadd.f32 %v5321, %v5497
      %v5566 = vadd.f32 %v5322, %v5499
      %v5567 = vadd.f32 %v5323, %v5502
      %v5568 = vadd.f32 %v5324, %v5504
      %v5569 = vld [vmem:[%s4] sm:$0x1]
      %v5571 = vlaneseq
      %v5572 = vshrl.u32 %v5571, 7
      %v5573 = vsub.s32 0, %v5572
      %v5574 = vrot.slane %v5569, %v5573
      %v5576 = vadd.f32 %v5537, %v5574
      %v5577 = vadd.f32 %v5538, %v5574
      %v5578 = vadd.f32 %v5539, %v5574
      %v5579 = vadd.f32 %v5540, %v5574
      %v5580 = vadd.f32 %v5541, %v5574
      %v5581 = vadd.f32 %v5542, %v5574
      %v5582 = vadd.f32 %v5543, %v5574
      %v5583 = vadd.f32 %v5544, %v5574
      %v5584 = vadd.f32 %v5545, %v5574
      %v5585 = vadd.f32 %v5546, %v5574
      %v5586 = vadd.f32 %v5547, %v5574
      %v5587 = vadd.f32 %v5548, %v5574
      %v5588 = vadd.f32 %v5549, %v5574
      %v5589 = vadd.f32 %v5550, %v5574
      %v5590 = vadd.f32 %v5551, %v5574
      %v5591 = vadd.f32 %v5552, %v5574
      %v5592 = vadd.f32 %v5553, %v5574
      %v5593 = vadd.f32 %v5554, %v5574
      %v5594 = vadd.f32 %v5555, %v5574
      %v5595 = vadd.f32 %v5556, %v5574
      %v5596 = vadd.f32 %v5557, %v5574
      %v5597 = vadd.f32 %v5558, %v5574
      %v5598 = vadd.f32 %v5559, %v5574
      %v5599 = vadd.f32 %v5560, %v5574
      %v5600 = vadd.f32 %v5561, %v5574
      %v5601 = vadd.f32 %v5562, %v5574
      %v5602 = vadd.f32 %v5563, %v5574
      %v5603 = vadd.f32 %v5564, %v5574
      %v5604 = vadd.f32 %v5565, %v5574
      %v5605 = vadd.f32 %v5566, %v5574
      %v5606 = vadd.f32 %v5567, %v5574
      %v5607 = vadd.f32 %v5568, %v5574
      %v5608 = vld [vmem:[%s5] sm:$0xf]
      %v5609 = vld [vmem:[%s6] sm:$0x1]
      %v5611 = vlaneseq
      %v5612 = vshrl.u32 %v5611, 7
      %v5613 = vsub.s32 0, %v5612
      %v5614 = vrot.slane %v5609, %v5613
      %vm5616 = vcmask 31744
      %v5618 = vsel %vm5616, %v5576, 0
      %v5621 = vsel %vm5616, %v5577, 0
      %v5624 = vsel %vm5616, %v5578, 0
      %v5627 = vsel %vm5616, %v5579, 0
      %v5630 = vsel %vm5616, %v5580, 0
      %v5633 = vsel %vm5616, %v5581, 0
      %v5636 = vsel %vm5616, %v5582, 0
      %v5639 = vsel %vm5616, %v5583, 0
      %v5642 = vsel %vm5616, %v5584, 0
      %v5645 = vsel %vm5616, %v5585, 0
      %v5648 = vsel %vm5616, %v5586, 0
      %v5651 = vsel %vm5616, %v5587, 0
      %v5654 = vsel %vm5616, %v5588, 0
      %v5657 = vsel %vm5616, %v5589, 0
      %v5660 = vsel %vm5616, %v5590, 0
      %v5663 = vsel %vm5616, %v5591, 0
      %v5666 = vsel %vm5616, %v5592, 0
      %v5669 = vsel %vm5616, %v5593, 0
      %v5672 = vsel %vm5616, %v5594, 0
      %v5675 = vsel %vm5616, %v5595, 0
      %v5678 = vsel %vm5616, %v5596, 0
      %v5681 = vsel %vm5616, %v5597, 0
      %v5684 = vsel %vm5616, %v5598, 0
      %v5687 = vsel %vm5616, %v5599, 0
      %v5690 = vsel %vm5616, %v5600, 0
      %v5693 = vsel %vm5616, %v5601, 0
      %v5696 = vsel %vm5616, %v5602, 0
      %v5699 = vsel %vm5616, %v5603, 0
      %v5702 = vsel %vm5616, %v5604, 0
      %v5705 = vsel %vm5616, %v5605, 0
      %v5708 = vsel %vm5616, %v5606, 0
      %v5711 = vsel %vm5616, %v5607, 0
      %vm5713 = vcmask 1043456
      %v5715 = vsel %vm5713, %v5608, 0
      %5717 = vmatprep.subr.mxu0 0.0
      %5718 = vmatpush1.msra.mxu0 %v5715
      %5719 = vmatprep.subr.mxu0 0.0
      %5720 = vmatpush1.msra.mxu0 0.0
      %5721 = vmatprep.subr.mxu0 0.0
      %5722 = vmatpush1.msra.mxu0 0.0
      %5723 = vmatprep.subr.mxu0 0.0
      %5724 = vmatpush1.msra.mxu0 0.0
      %5725 = vmatprep.subr.mxu0 0.0
      %5726 = vmatpush1.msra.mxu0 0.0
      %5727 = vmatprep.subr.mxu0 0.0
      %5728 = vmatpush1.msra.mxu0 0.0
      %5729 = vmatprep.subr.mxu0 0.0
      %5730 = vmatpush1.msra.mxu0 0.0
      %5731 = vmatprep.subr.mxu0 0.0
      %5732 = vmatpush1.msra.mxu0 0.0
      %5733 = vmatprep.subr.mxu0 0.0
      %5734 = vmatpush1.msra.mxu0 0.0
      %5735 = vmatprep.subr.mxu0 0.0
      %5736 = vmatpush1.msra.mxu0 0.0
      %5737 = vmatprep.subr.mxu0 0.0
      %5738 = vmatpush1.msra.mxu0 0.0
      %5739 = vmatprep.subr.mxu0 0.0
      %5740 = vmatpush1.msra.mxu0 0.0
      %5741 = vmatprep.subr.mxu0 0.0
      %5742 = vmatpush1.msra.mxu0 0.0
      %5743 = vmatprep.subr.mxu0 0.0
      %5744 = vmatpush1.msra.mxu0 0.0
      %5745 = vmatprep.subr.mxu0 0.0
      %5746 = vmatpush1.msra.mxu0 0.0
      %5747 = vmatprep.subr.mxu0 0.0
      %5748 = vmatpush1.msra.mxu0 0.0
      %5749 = vmatprep.subr.mxu0 0.0
      %5750 = vmatpush1.msra.mxu0 0.0
      %5751 = vmatprep.subr.mxu0 0.0
      %5752 = vmatpush1.msra.mxu0 0.0
      %5753 = vmatprep.subr.mxu0 0.0
      %5754 = vmatpush1.msra.mxu0 0.0
      %5755 = vmatprep.subr.mxu0 0.0
      %5756 = vmatpush1.msra.mxu0 0.0
      %5757 = vmatprep.subr.mxu0 0.0
      %5758 = vmatpush1.msra.mxu0 0.0
      %5759 = vmatprep.subr.mxu0 0.0
      %5760 = vmatpush1.msra.mxu0 0.0
      %5761 = vmatprep.subr.mxu0 0.0
      %5762 = vmatpush1.msra.mxu0 0.0
      %5763 = vmatprep.subr.mxu0 0.0
      %5764 = vmatpush1.msra.mxu0 0.0
      %5765 = vmatprep.subr.mxu0 0.0
      %5766 = vmatpush1.msra.mxu0 0.0
      %5767 = vmatprep.subr.mxu0 0.0
      %5768 = vmatpush1.msra.mxu0 0.0
      %5769 = vmatprep.subr.mxu0 0.0
      %5770 = vmatpush1.msra.mxu0 0.0
      %5771 = vmatprep.subr.mxu0 0.0
      %5772 = vmatpush1.msra.mxu0 0.0
      %5773 = vmatprep.subr.mxu0 0.0
      %5774 = vmatpush1.msra.mxu0 0.0
      %5775 = vmatprep.subr.mxu0 0.0
      %5776 = vmatpush1.msra.mxu0 0.0
      %5777 = vmatprep.subr.mxu0 0.0
      %5778 = vmatpush1.msra.mxu0 0.0
      %5779 = vmatprep.subr.mxu0 0.0
      %5780 = vmatpush1.msra.mxu0 0.0
      %5781 = vmatprep.mubr.f32.mxu0 0.0
      %5782 = vmatmul.mubr.f32.gmra.mrb[0].mxu0 %v5618
      %v5783 = vpop.f32.mrb[0].mxu0
      %v5784 = vadd.f32 %v5614, %v5783
      %v5785 = vpop.f32.mrb[0].mxu0
      %5786 = vmatprep.mubr.f32.mxu0 0.0
      %5787 = vmatmul.mubr.f32.gmra.mrb[0].mxu0 %v5621
      %v5788 = vpop.f32.mrb[0].mxu0
      %v5789 = vadd.f32 %v5614, %v5788
      %v5790 = vpop.f32.mrb[0].mxu0
      %5791 = vmatprep.mubr.f32.mxu0 0.0
      %5792 = vmatmul.mubr.f32.gmra.mrb[0].mxu0 %v5624
      %v5793 = vpop.f32.mrb[0].mxu0
      %v5794 = vadd.f32 %v5614, %v5793
      %v5795 = vpop.f32.mrb[0].mxu0
      %5796 = vmatprep.mubr.f32.mxu0 0.0
      %5797 = vmatmul.mubr.f32.gmra.mrb[0].mxu0 %v5627
      %v5798 = vpop.f32.mrb[0].mxu0
      %v5799 = vadd.f32 %v5614, %v5798
      %v5800 = vpop.f32.mrb[0].mxu0
      %5801 = vmatprep.mubr.f32.mxu0 0.0
      %5802 = vmatmul.mubr.f32.gmra.mrb[0].mxu0 %v5630
      %v5803 = vpop.f32.mrb[0].mxu0
      %v5804 = vadd.f32 %v5614, %v5803
      %v5805 = vpop.f32.mrb[0].mxu0
      %5806 = vmatprep.mubr.f32.mxu0 0.0
      %5807 = vmatmul.mubr.f32.gmra.mrb[0].mxu0 %v5633
      %v5808 = vpop.f32.mrb[0].mxu0
      %v5809 = vadd.f32 %v5614, %v5808
      %v5810 = vpop.f32.mrb[0].mxu0
      %5811 = vmatprep.mubr.f32.mxu0 0.0
      %5812 = vmatmul.mubr.f32.gmra.mrb[0].mxu0 %v5636
      %v5813 = vpop.f32.mrb[0].mxu0
      %v5814 = vadd.f32 %v5614, %v5813
      %v5815 = vpop.f32.mrb[0].mxu0
      %5816 = vmatprep.mubr.f32.mxu0 0.0
      %5817 = vmatmul.mubr.f32.gmra.mrb[0].mxu0 %v5639
      %v5818 = vpop.f32.mrb[0].mxu0
      %v5819 = vadd.f32 %v5614, %v5818
      %v5820 = vpop.f32.mrb[0].mxu0
      %5821 = vmatprep.mubr.f32.mxu0 0.0
      %5822 = vmatmul.mubr.f32.gmra.mrb[0].mxu0 %v5642
      %v5823 = vpop.f32.mrb[0].mxu0
      %v5824 = vadd.f32 %v5614, %v5823
      %v5825 = vpop.f32.mrb[0].mxu0
      %5826 = vmatprep.mubr.f32.mxu0 0.0
      %5827 = vmatmul.mubr.f32.gmra.mrb[0].mxu0 %v5645
      %v5828 = vpop.f32.mrb[0].mxu0
      %v5829 = vadd.f32 %v5614, %v5828
      %v5830 = vpop.f32.mrb[0].mxu0
      %5831 = vmatprep.mubr.f32.mxu0 0.0
      %5832 = vmatmul.mubr.f32.gmra.mrb[0].mxu0 %v5648
      %v5833 = vpop.f32.mrb[0].mxu0
      %v5834 = vadd.f32 %v5614, %v5833
      %v5835 = vpop.f32.mrb[0].mxu0
      %5836 = vmatprep.mubr.f32.mxu0 0.0
      %5837 = vmatmul.mubr.f32.gmra.mrb[0].mxu0 %v5651
      %v5838 = vpop.f32.mrb[0].mxu0
      %v5839 = vadd.f32 %v5614, %v5838
      %v5840 = vpop.f32.mrb[0].mxu0
      %5841 = vmatprep.mubr.f32.mxu0 0.0
      %5842 = vmatmul.mubr.f32.gmra.mrb[0].mxu0 %v5654
      %v5843 = vpop.f32.mrb[0].mxu0
      %v5844 = vadd.f32 %v5614, %v5843
      %v5845 = vpop.f32.mrb[0].mxu0
      %5846 = vmatprep.mubr.f32.mxu0 0.0
      %5847 = vmatmul.mubr.f32.gmra.mrb[0].mxu0 %v5657
      %v5848 = vpop.f32.mrb[0].mxu0
      %v5849 = vadd.f32 %v5614, %v5848
      %v5850 = vpop.f32.mrb[0].mxu0
      %5851 = vmatprep.mubr.f32.mxu0 0.0
      %5852 = vmatmul.mubr.f32.gmra.mrb[0].mxu0 %v5660
      %v5853 = vpop.f32.mrb[0].mxu0
      %v5854 = vadd.f32 %v5614, %v5853
      %v5855 = vpop.f32.mrb[0].mxu0
      %5856 = vmatprep.mubr.f32.mxu0 0.0
      %5857 = vmatmul.mubr.f32.gmra.mrb[0].mxu0 %v5663
      %v5858 = vpop.f32.mrb[0].mxu0
      %v5859 = vadd.f32 %v5614, %v5858
      %v5860 = vpop.f32.mrb[0].mxu0
      %5861 = vmatprep.mubr.f32.mxu0 0.0
      %5862 = vmatmul.mubr.f32.gmra.mrb[0].mxu0 %v5666
      %v5863 = vpop.f32.mrb[0].mxu0
      %v5864 = vadd.f32 %v5614, %v5863
      %v5865 = vpop.f32.mrb[0].mxu0
      %5866 = vmatprep.mubr.f32.mxu0 0.0
      %5867 = vmatmul.mubr.f32.gmra.mrb[0].mxu0 %v5669
      %v5868 = vpop.f32.mrb[0].mxu0
      %v5869 = vadd.f32 %v5614, %v5868
      %v5870 = vpop.f32.mrb[0].mxu0
      %5871 = vmatprep.mubr.f32.mxu0 0.0
      %5872 = vmatmul.mubr.f32.gmra.mrb[0].mxu0 %v5672
      %v5873 = vpop.f32.mrb[0].mxu0
      %v5874 = vadd.f32 %v5614, %v5873
      %v5875 = vpop.f32.mrb[0].mxu0
      %5876 = vmatprep.mubr.f32.mxu0 0.0
      %5877 = vmatmul.mubr.f32.gmra.mrb[0].mxu0 %v5675
      %v5878 = vpop.f32.mrb[0].mxu0
      %v5879 = vadd.f32 %v5614, %v5878
      %v5880 = vpop.f32.mrb[0].mxu0
      %5881 = vmatprep.mubr.f32.mxu0 0.0
      %5882 = vmatmul.mubr.f32.gmra.mrb[0].mxu0 %v5678
      %v5883 = vpop.f32.mrb[0].mxu0
      %v5884 = vadd.f32 %v5614, %v5883
      %v5885 = vpop.f32.mrb[0].mxu0
      %5886 = vmatprep.mubr.f32.mxu0 0.0
      %5887 = vmatmul.mubr.f32.gmra.mrb[0].mxu0 %v5681
      %v5888 = vpop.f32.mrb[0].mxu0
      %v5889 = vadd.f32 %v5614, %v5888
      %v5890 = vpop.f32.mrb[0].mxu0
      %5891 = vmatprep.mubr.f32.mxu0 0.0
      %5892 = vmatmul.mubr.f32.gmra.mrb[0].mxu0 %v5684
      %v5893 = vpop.f32.mrb[0].mxu0
      %v5894 = vadd.f32 %v5614, %v5893
      %v5895 = vpop.f32.mrb[0].mxu0
      %5896 = vmatprep.mubr.f32.mxu0 0.0
      %5897 = vmatmul.mubr.f32.gmra.mrb[0].mxu0 %v5687
      %v5898 = vpop.f32.mrb[0].mxu0
      %v5899 = vadd.f32 %v5614, %v5898
      %v5900 = vpop.f32.mrb[0].mxu0
      %5901 = vmatprep.mubr.f32.mxu0 0.0
      %5902 = vmatmul.mubr.f32.gmra.mrb[0].mxu0 %v5690
      %v5903 = vpop.f32.mrb[0].mxu0
      %v5904 = vadd.f32 %v5614, %v5903
      %v5905 = vpop.f32.mrb[0].mxu0
      %5906 = vmatprep.mubr.f32.mxu0 0.0
      %5907 = vmatmul.mubr.f32.gmra.mrb[0].mxu0 %v5693
      %v5908 = vpop.f32.mrb[0].mxu0
      %v5909 = vadd.f32 %v5614, %v5908
      %v5910 = vpop.f32.mrb[0].mxu0
      %5911 = vmatprep.mubr.f32.mxu0 0.0
      %5912 = vmatmul.mubr.f32.gmra.mrb[0].mxu0 %v5696
      %v5913 = vpop.f32.mrb[0].mxu0
      %v5914 = vadd.f32 %v5614, %v5913
      %v5915 = vpop.f32.mrb[0].mxu0
      %5916 = vmatprep.mubr.f32.mxu0 0.0
      %5917 = vmatmul.mubr.f32.gmra.mrb[0].mxu0 %v5699
      %v5918 = vpop.f32.mrb[0].mxu0
      %v5919 = vadd.f32 %v5614, %v5918
      %v5920 = vpop.f32.mrb[0].mxu0
      %5921 = vmatprep.mubr.f32.mxu0 0.0
      %5922 = vmatmul.mubr.f32.gmra.mrb[0].mxu0 %v5702
      %v5923 = vpop.f32.mrb[0].mxu0
      %v5924 = vadd.f32 %v5614, %v5923
      %v5925 = vpop.f32.mrb[0].mxu0
      %5926 = vmatprep.mubr.f32.mxu0 0.0
      %5927 = vmatmul.mubr.f32.gmra.mrb[0].mxu0 %v5705
      %v5928 = vpop.f32.mrb[0].mxu0
      %v5929 = vadd.f32 %v5614, %v5928
      %v5930 = vpop.f32.mrb[0].mxu0
      %5931 = vmatprep.mubr.f32.mxu0 0.0
      %5932 = vmatmul.mubr.f32.gmra.mrb[0].mxu0 %v5708
      %v5933 = vpop.f32.mrb[0].mxu0
      %v5934 = vadd.f32 %v5614, %v5933
      %v5935 = vpop.f32.mrb[0].mxu0
      %5936 = vmatprep.mubr.f32.mxu0 0.0
      %5937 = vmatmul.mubr.f32.gmra.mrb[0].mxu0 %v5711
      %v5938 = vpop.f32.mrb[0].mxu0
      %v5939 = vadd.f32 %v5614, %v5938
      %v5940 = vpop.f32.mrb[0].mxu0
      %5941 = vdwg.mxu0
      %vm5942 = vcmask 64512
      %5943 = vst.msk [vmem:[%s396] sm:$0xff] %vm5942, %v5784
      %5944 = vst.msk [vmem:[%s396 + $0x8] sm:$0xff] %vm5942, %v5789
      %5945 = vst.msk [vmem:[%s396 + $0x10] sm:$0xff] %vm5942, %v5794
      %5946 = vst.msk [vmem:[%s396 + $0x18] sm:$0xff] %vm5942, %v5799
      %5947 = vst.msk [vmem:[%s396 + $0x20] sm:$0xff] %vm5942, %v5804
      %5948 = vst.msk [vmem:[%s396 + $0x28] sm:$0xff] %vm5942, %v5809
      %5949 = vst.msk [vmem:[%s396 + $0x30] sm:$0xff] %vm5942, %v5814
      %5950 = vst.msk [vmem:[%s396 + $0x38] sm:$0xff] %vm5942, %v5819
      %5951 = vst.msk [vmem:[%s396 + $0x40] sm:$0xff] %vm5942, %v5824
      %5952 = vst.msk [vmem:[%s396 + $0x48] sm:$0xff] %vm5942, %v5829
      %5953 = vst.msk [vmem:[%s396 + $0x50] sm:$0xff] %vm5942, %v5834
      %5954 = vst.msk [vmem:[%s396 + $0x58] sm:$0xff] %vm5942, %v5839
      %5955 = vst.msk [vmem:[%s396 + $0x60] sm:$0xff] %vm5942, %v5844
      %5956 = vst.msk [vmem:[%s396 + $0x68] sm:$0xff] %vm5942, %v5849
      %5957 = vst.msk [vmem:[%s396 + $0x70] sm:$0xff] %vm5942, %v5854
      %5958 = vst.msk [vmem:[%s396 + $0x78] sm:$0xff] %vm5942, %v5859
      %5959 = vst.msk [vmem:[%s396 + $0x80] sm:$0xff] %vm5942, %v5864
      %5960 = vst.msk [vmem:[%s396 + $0x88] sm:$0xff] %vm5942, %v5869
      %5961 = vst.msk [vmem:[%s396 + $0x90] sm:$0xff] %vm5942, %v5874
      %5962 = vst.msk [vmem:[%s396 + $0x98] sm:$0xff] %vm5942, %v5879
      %5963 = vst.msk [vmem:[%s396 + $0xa0] sm:$0xff] %vm5942, %v5884
      %5964 = vst.msk [vmem:[%s396 + $0xa8] sm:$0xff] %vm5942, %v5889
      %5965 = vst.msk [vmem:[%s396 + $0xb0] sm:$0xff] %vm5942, %v5894
      %5966 = vst.msk [vmem:[%s396 + $0xb8] sm:$0xff] %vm5942, %v5899
      %5967 = vst.msk [vmem:[%s396 + $0xc0] sm:$0xff] %vm5942, %v5904
      %5968 = vst.msk [vmem:[%s396 + $0xc8] sm:$0xff] %vm5942, %v5909
      %5969 = vst.msk [vmem:[%s396 + $0xd0] sm:$0xff] %vm5942, %v5914
      %5970 = vst.msk [vmem:[%s396 + $0xd8] sm:$0xff] %vm5942, %v5919
      %5971 = vst.msk [vmem:[%s396 + $0xe0] sm:$0xff] %vm5942, %v5924
      %5972 = vst.msk [vmem:[%s396 + $0xe8] sm:$0xff] %vm5942, %v5929
      %5973 = vst.msk [vmem:[%s396 + $0xf0] sm:$0xff] %vm5942, %v5934
      %5974 = vst.msk [vmem:[%s396 + $0xf8] sm:$0xff] %vm5942, %v5939
      %p5975 = scmp.lt.s32.totalorder %s22, 1
      %s5976 = scalar_select %p5975, %s22, 1
      %p5977 = scmp.lt.s32.totalorder %s23, 15
      %s5978 = scalar_select %p5977, %s23, 15
      %s5979 = smul.addr %s5978, 32
      %s5980 = smul.addr %s5976, 512
      %s5981 = sadd.s32 %s5979, %s5980
      %s5982 = smul.addr %s5981, 8
      %s5983 = scalar_lea.vmem %s7, %s5982
      // Predicated region
      $region49: #{ds_conv3d_forward.1} parent=47 // pred_check
        %p5984 = pneg %p222
      $region50: #{ds_conv3d_forward.1} parent=47 // pred_check_branch
        %5986 = sbr.rel (%p5984) target = $region52
      $region51: #{ds_conv3d_forward.1} parent=47 // pred_region
        _
      $region52: #{ds_conv3d_forward.1} parent=47 // pred_fallthru
        _
    $region48: #{ds_conv3d_forward.1} parent=5 // pred_fallthru
      _
    %p5987 = scmp.le.s32.totalorder 2, %s13
    // Predicated region
    $region53: #{ds_conv3d_forward.1} parent=5 // pred_check
      %p5988 = pneg %p5987
    $region54: #{ds_conv3d_forward.1} parent=5 // pred_check_branch
      %5990 = sbr.rel (%p5988) target = $region56
    $region55: #{ds_conv3d_forward.1} parent=5 // pred_region
      %s5991 = ssub.s32 %s13, 2
      // Predicated region
      $region57: #{ds_conv3d_forward.1} parent=55 // pred_check
        %p5992 = pneg %p228
      $region58: #{ds_conv3d_forward.1} parent=55 // pred_check_branch
        %5994 = sbr.rel (%p5992) target = $region60
      $region59: #{ds_conv3d_forward.1} parent=55 // pred_region
        %p5995 = scmp.lt.s32.totalorder %s24, 1
        %s5996 = scalar_select %p5995, %s24, 1
        %p5997 = scmp.lt.s32.totalorder %s25, 15
        %s5998 = scalar_select %p5997, %s25, 15
        %s5999 = smul.addr %s5998, 32
        %s6000 = smul.addr %s5996, 512
        %s6001 = sadd.s32 %s5999, %s6000
        %s6002 = smul.addr %s6001, 8
        %s6003 = scalar_lea.vmem %s7, %s6002
      $region60: #{ds_conv3d_forward.1} parent=55 // pred_fallthru
        _
    $region56: #{ds_conv3d_forward.1} parent=5 // pred_fallthru
      _
  $region6: #{ds_conv3d_forward.1} parent=0 // loop_footer
    %s17 = sadd.s32 1, %s13
  $region7: #{ds_conv3d_forward.1} parent=0 // loop_footer_branch
    %12 = sbr.rel target = $region3
  $region8: #{ds_conv3d_forward.1} parent=0 // loop_exit
    _

</llo_original>
